<compile_context>
chip_gen: v7x
topology: tpu7x:2x2x1
jax: 0.10.0
libtpu: 0.0.40
codegen_flags: <defaults>
</compile_context>

<pallas_src>
import jax
import jax.numpy as jnp
from jax.experimental import pallas as pl
from jax.experimental.pallas import tpu as pltpu


def _round_up(v, m):
    return (v + m - 1) // m * m


def tnet_fused_kernel(x_ref, w1_ref, b1_ref, w2_ref, b2_ref, w3_ref, b3_ref,
                      wf1_ref, bf1_ref, wf2_ref, bf2_ref, wf3_ref, bf3_ref,
                      out_ref, gmax_ref):
    """One (batch-group, point-tile) grid step.

    x_ref   : (bt, tile_n, 8)  bf16  points-major input tile (channels 3 -> 8)
    out_ref : (bt, 128)        f32   fc3 output (lanes 9 -> 128), written on last tile
    gmax_ref: (bt, 1024)       f32   VMEM scratch running max, persists across tiles
    """
    k = pl.program_id(1)
    nk = pl.num_programs(1)
    bt, tn, cpad = x_ref.shape

    # ---- mlp1: three per-point matmuls, M = bt * tile_n rows ---------------
    x = x_ref[...].reshape(bt * tn, cpad)                              # (M, 8) bf16
    h = jnp.dot(x, w1_ref[...], preferred_element_type=jnp.float32)
    h = jnp.maximum(h + b1_ref[...], 0.0)                              # (M, 64)
    h = jnp.dot(h.astype(w2_ref.dtype), w2_ref[...],
                preferred_element_type=jnp.float32)
    h = jnp.maximum(h + b2_ref[...], 0.0)                              # (M, 128)
    h = jnp.dot(h.astype(w3_ref.dtype), w3_ref[...],
                preferred_element_type=jnp.float32)
    h = jnp.maximum(h + b3_ref[...], 0.0)                              # (M, 1024)

    # Per-batch max over this point tile (leading-dim reshape is free).
    tile_max = h.reshape(bt, tn, 1024).max(axis=1)                     # (bt, 1024)

    @pl.when(k == 0)
    def _init():
        gmax_ref[...] = tile_max

    @pl.when(k > 0)
    def _update():
        gmax_ref[...] = jnp.maximum(gmax_ref[...], tile_max)

    # ---- fused fc head, only on the final point tile -----------------------
    @pl.when(k == nk - 1)
    def _head():
        g = gmax_ref[...]                                              # (bt, 1024)
        f = jnp.dot(g.astype(wf1_ref.dtype), wf1_ref[...],
                    preferred_element_type=jnp.float32)
        f = jnp.maximum(f + bf1_ref[...], 0.0)                         # (bt, 512)
        f = jnp.dot(f.astype(wf2_ref.dtype), wf2_ref[...],
                    preferred_element_type=jnp.float32)
        f = jnp.maximum(f + bf2_ref[...], 0.0)                         # (bt, 256)
        t = jnp.dot(f, wf3_ref[...], preferred_element_type=jnp.float32)
        out_ref[...] = t + bf3_ref[...]                                # (bt, 128)


def init_tnet_params(key):
    """Deterministic synthetic parameters matching TNet's shapes.

    Heavy matmul weights are bf16 (2x MXU throughput, half the VMEM);
    biases and the tiny first/last layers stay f32.
    """
    ks = jax.random.split(key, 12)
    scale = 0.05

    def w(k, shape, dtype=jnp.float32):
        return (scale * jax.random.normal(k, shape)).astype(dtype)

    w1, b1 = w(ks[0], (3, 64)),                     w(ks[1], (1, 64))
    w2, b2 = w(ks[2], (64, 128), jnp.bfloat16),     w(ks[3], (1, 128))
    w3, b3 = w(ks[4], (128, 1024), jnp.bfloat16),   w(ks[5], (1, 1024))
    wf1, bf1 = w(ks[6], (1024, 512), jnp.bfloat16), w(ks[7], (1, 512))
    wf2, bf2 = w(ks[8], (512, 256), jnp.bfloat16),  w(ks[9], (1, 256))
    wf3, bf3 = w(ks[10], (256, 9)),                 w(ks[11], (1, 9))
    return (w1, b1, w2, b2, w3, b3, wf1, bf1, wf2, bf2, wf3, bf3)


def _vmem_limit_bytes():
    """Raise the scoped VMEM limit with headroom (v5e default is only 16 MiB)."""
    try:
        cap = pltpu.get_tpu_info().vmem_capacity_bytes
        return int(min(48 << 20, (cap * 3) // 4))
    except Exception:
        return None


def tnet_forward(x_ncw, params, *, target_m=2048):
    """x_ncw: (B, 3, num_points) float32, same layout as the PyTorch module."""
    B, C, N = x_ncw.shape
    assert C == 3
    (w1, b1, w2, b2, w3, b3, wf1, bf1, wf2, bf2, wf3, bf3) = params

    # Points-major layout; zero-pad channels 3 -> 8 (zero weight rows keep the
    # math identical).
    x = jnp.transpose(x_ncw, (0, 2, 1)).astype(jnp.float32)           # (B, N, 3)
    x = jnp.pad(x, ((0, 0), (0, 0), (0, 8 - C)))                      # (B, N, 8)

    # Sublane-aligned batch group: 8 when possible, else the full batch dim
    # (a block equal to the full dim also satisfies the (8,128) rule).
    bt = 8 if B >= 8 else B
    b_pad = _round_up(B, bt)
    if b_pad != B:
        x = jnp.pad(x, ((0, b_pad - B), (0, 0), (0, 0)), mode="edge")

    # Point tile so the dominant matmul sees M = bt * tile_n ~ target_m rows.
    # Duplicated (edge-padded) points cannot change the max-pool result.
    tile_n = max(16, min(_round_up(max(N, 16), 16),
                         _round_up(max(target_m // bt, 16), 16)))
    n_pad = _round_up(max(N, 16), tile_n)
    if n_pad != N:
        x = jnp.pad(x, ((0, 0), (0, n_pad - N), (0, 0)), mode="edge")

    # bf16 streamed input halves the per-step HBM->VMEM DMA; f32 accumulation.
    x = x.astype(jnp.bfloat16)
    w1p = jnp.pad(w1, ((0, 8 - C), (0, 0))).astype(jnp.bfloat16)      # (8, 64)
    # fc3 zero-padded to 128 output lanes -> lane-dense output store.
    wf3p = jnp.pad(wf3, ((0, 0), (0, 128 - wf3.shape[1])))            # (256, 128)
    bf3p = jnp.pad(bf3, ((0, 0), (0, 128 - bf3.shape[1])))            # (1, 128)

    weights = (w1p, b1, w2, b2, w3, b3, wf1, bf1, wf2, bf2, wf3p, bf3p)

    def const_spec(p):  # full-array weight block, constant index -> DMA'd once
        return pl.BlockSpec(p.shape, lambda b, k: (0,) * p.ndim)

    cp_kwargs = dict(dimension_semantics=("parallel", "arbitrary"))
    limit = _vmem_limit_bytes()
    if limit is not None:
        cp_kwargs["vmem_limit_bytes"] = limit

    # TODO(synk): for tiny B on v7x the single batch group leaves one TensorCore
    # idle; a per-core partial max over the point axis would recover it.
    out = pl.pallas_call(
        tnet_fused_kernel,
        out_shape=jax.ShapeDtypeStruct((b_pad, 128), jnp.float32),
        grid=(b_pad // bt, n_pad // tile_n),
        in_specs=[pl.BlockSpec((bt, tile_n, 8), lambda b, k: (b, k, 0))]
                 + [const_spec(p) for p in weights],
        out_specs=pl.BlockSpec((bt, 128), lambda b, k: (b, 0)),
        scratch_shapes=[pltpu.VMEM((bt, 1024), jnp.float32)],
        compiler_params=pltpu.CompilerParams(**cp_kwargs),
    )(x, *weights)

    # transform.view(-1, 3, 3)
    return out[:B, :9].reshape(B, 3, 3)


def tnet_reference(x_ncw, params):
    """Pure-JAX reference with the same bf16/f32 mixed precision."""
    (w1, b1, w2, b2, w3, b3, wf1, bf1, wf2, bf2, wf3, bf3) = params
    x = jnp.transpose(x_ncw, (0, 2, 1)).astype(jnp.bfloat16)          # (B, N, 3)
    h = jnp.maximum(jnp.dot(x, w1.astype(jnp.bfloat16),
                            preferred_element_type=jnp.float32) + b1, 0.0)
    h = jnp.maximum(jnp.dot(h.astype(w2.dtype), w2,
                            preferred_element_type=jnp.float32) + b2, 0.0)
    h = jnp.maximum(jnp.dot(h.astype(w3.dtype), w3,
                            preferred_element_type=jnp.float32) + b3, 0.0)
    g = jnp.max(h, axis=1)                                            # (B, 1024)
    f = jnp.maximum(jnp.dot(g.astype(wf1.dtype), wf1,
                            preferred_element_type=jnp.float32) + bf1[0], 0.0)
    f = jnp.maximum(jnp.dot(f.astype(wf2.dtype), wf2,
                            preferred_element_type=jnp.float32) + bf2[0], 0.0)
    t = jnp.dot(f, wf3, preferred_element_type=jnp.float32) + bf3[0]
    return t.reshape(-1, 3, 3)


if __name__ == "__main__":
    key = jax.random.PRNGKey(0)
    k_params, k_x1, k_x2 = jax.random.split(key, 3)
    params = init_tnet_params(k_params)

    # Small demo shape (same layout as the PyTorch module: (B, 3, num_points)).
    B, NUM_POINTS = 2, 64
    x_small = jax.random.normal(k_x1, (B, 3, NUM_POINTS), dtype=jnp.float32)
    out = jax.block_until_ready(tnet_forward(x_small, params))
    ref = jax.block_until_ready(tnet_reference(x_small, params))
    assert out.shape == (B, 3, 3)
    assert jnp.allclose(out, ref, atol=2e-3, rtol=2e-2), (
        float(jnp.max(jnp.abs(out - ref))))

    # Second shape exercising batch groups (bt=8), batch/point edge padding and
    # the running-max accumulator across multiple point tiles.
    x_big = jax.random.normal(k_x2, (10, 3, 600), dtype=jnp.float32)
    out2 = jax.block_until_ready(tnet_forward(x_big, params))
    ref2 = jax.block_until_ready(tnet_reference(x_big, params))
    assert out2.shape == (10, 3, 3)
    assert jnp.allclose(out2, ref2, atol=2e-3, rtol=2e-2), (
        float(jnp.max(jnp.abs(out2 - ref2))))

    print("KERNEL_OK")
</pallas_src>

<mosaic_0001>
module attributes {stable_mosaic.version = 11 : i64} {
  func.func @tnet_fused_kernel(%arg0: i32, %arg1: i32, %arg2: memref<2x64x8xbf16, #tpu.memory_space<vmem>>, %arg3: memref<8x64xbf16, #tpu.memory_space<vmem>>, %arg4: memref<1x64xf32, #tpu.memory_space<vmem>>, %arg5: memref<64x128xbf16, #tpu.memory_space<vmem>>, %arg6: memref<1x128xf32, #tpu.memory_space<vmem>>, %arg7: memref<128x1024xbf16, #tpu.memory_space<vmem>>, %arg8: memref<1x1024xf32, #tpu.memory_space<vmem>>, %arg9: memref<1024x512xbf16, #tpu.memory_space<vmem>>, %arg10: memref<1x512xf32, #tpu.memory_space<vmem>>, %arg11: memref<512x256xbf16, #tpu.memory_space<vmem>>, %arg12: memref<1x256xf32, #tpu.memory_space<vmem>>, %arg13: memref<256x128xf32, #tpu.memory_space<vmem>>, %arg14: memref<1x128xf32, #tpu.memory_space<vmem>>, %arg15: memref<2x128xf32, #tpu.memory_space<vmem>>, %arg16: memref<2x1024xf32, #tpu.memory_space<vmem>>) attributes {dimension_semantics = [#tpu.dimension_semantics<parallel>, #tpu.dimension_semantics<arbitrary>], iteration_bounds = array<i64: 1, 1>, scalar_prefetch = 0 : i64, scratch_operands = 1 : i64, tpu.core_type = #tpu.core_type<tc>, window_params = [{transform_indices = @transform_0, window_bounds = array<i64: 2, 64, 8>}, {pipeline_mode = #tpu.pipeline_mode<synchronous>, transform_indices = @transform_1, window_bounds = array<i64: 8, 64>}, {pipeline_mode = #tpu.pipeline_mode<synchronous>, transform_indices = @transform_2, window_bounds = array<i64: 1, 64>}, {pipeline_mode = #tpu.pipeline_mode<synchronous>, transform_indices = @transform_3, window_bounds = array<i64: 64, 128>}, {pipeline_mode = #tpu.pipeline_mode<synchronous>, transform_indices = @transform_4, window_bounds = array<i64: 1, 128>}, {pipeline_mode = #tpu.pipeline_mode<synchronous>, transform_indices = @transform_5, window_bounds = array<i64: 128, 1024>}, {pipeline_mode = #tpu.pipeline_mode<synchronous>, transform_indices = @transform_6, window_bounds = array<i64: 1, 1024>}, {pipeline_mode = #tpu.pipeline_mode<synchronous>, transform_indices = @transform_7, window_bounds = array<i64: 1024, 512>}, {pipeline_mode = #tpu.pipeline_mode<synchronous>, transform_indices = @transform_8, window_bounds = array<i64: 1, 512>}, {pipeline_mode = #tpu.pipeline_mode<synchronous>, transform_indices = @transform_9, window_bounds = array<i64: 512, 256>}, {pipeline_mode = #tpu.pipeline_mode<synchronous>, transform_indices = @transform_10, window_bounds = array<i64: 1, 256>}, {pipeline_mode = #tpu.pipeline_mode<synchronous>, transform_indices = @transform_11, window_bounds = array<i64: 256, 128>}, {pipeline_mode = #tpu.pipeline_mode<synchronous>, transform_indices = @transform_12, window_bounds = array<i64: 1, 128>}, {transform_indices = @transform_13, window_bounds = array<i64: 2, 128>}]} {
    %c0 = arith.constant 0 : index
    %c0_0 = arith.constant 0 : index
    %c0_1 = arith.constant 0 : index
    %0 = vector.load %arg2[%c0, %c0_0, %c0_1] : memref<2x64x8xbf16, #tpu.memory_space<vmem>>, vector<2x64x8xbf16>
    %1 = vector.shape_cast %0 : vector<2x64x8xbf16> to vector<128x8xbf16>
    %c0_2 = arith.constant 0 : index
    %c0_3 = arith.constant 0 : index
    %2 = vector.load %arg3[%c0_2, %c0_3] : memref<8x64xbf16, #tpu.memory_space<vmem>>, vector<8x64xbf16>
    %cst = arith.constant dense<0.000000e+00> : vector<128x64xf32>
    %3 = tpu.matmul %1, %2, %cst {dimension_numbers = #tpu.dot_dimension_numbers<[1], [0], [0], [1], [0, 0, 1, 1], [], []>} : vector<128x8xbf16>, vector<8x64xbf16>, vector<128x64xf32> -> vector<128x64xf32>
    %c0_4 = arith.constant 0 : index
    %c0_5 = arith.constant 0 : index
    %4 = vector.load %arg4[%c0_4, %c0_5] : memref<1x64xf32, #tpu.memory_space<vmem>>, vector<1x64xf32>
    %5 = vector.broadcast %4 : vector<1x64xf32> to vector<128x64xf32>
    %6 = arith.addf %3, %5 : vector<128x64xf32>
    %cst_6 = arith.constant 0.000000e+00 : f32
    %7 = vector.broadcast %cst_6 : f32 to vector<128x64xf32>
    %8 = arith.maximumf %6, %7 : vector<128x64xf32>
    %9 = arith.truncf %8 : vector<128x64xf32> to vector<128x64xbf16>
    %c0_7 = arith.constant 0 : index
    %c0_8 = arith.constant 0 : index
    %10 = vector.load %arg5[%c0_7, %c0_8] : memref<64x128xbf16, #tpu.memory_space<vmem>>, vector<64x128xbf16>
    %cst_9 = arith.constant dense<0.000000e+00> : vector<128x128xf32>
    %11 = tpu.matmul %9, %10, %cst_9 {dimension_numbers = #tpu.dot_dimension_numbers<[1], [0], [0], [1], [0, 0, 1, 1], [], []>} : vector<128x64xbf16>, vector<64x128xbf16>, vector<128x128xf32> -> vector<128x128xf32>
    %c0_10 = arith.constant 0 : index
    %c0_11 = arith.constant 0 : index
    %12 = vector.load %arg6[%c0_10, %c0_11] : memref<1x128xf32, #tpu.memory_space<vmem>>, vector<1x128xf32>
    %13 = vector.broadcast %12 : vector<1x128xf32> to vector<128x128xf32>
    %14 = arith.addf %11, %13 : vector<128x128xf32>
    %cst_12 = arith.constant 0.000000e+00 : f32
    %15 = vector.broadcast %cst_12 : f32 to vector<128x128xf32>
    %16 = arith.maximumf %14, %15 : vector<128x128xf32>
    %17 = arith.truncf %16 : vector<128x128xf32> to vector<128x128xbf16>
    %c0_13 = arith.constant 0 : index
    %c0_14 = arith.constant 0 : index
    %18 = vector.load %arg7[%c0_13, %c0_14] : memref<128x1024xbf16, #tpu.memory_space<vmem>>, vector<128x1024xbf16>
    %cst_15 = arith.constant dense<0.000000e+00> : vector<128x1024xf32>
    %19 = tpu.matmul %17, %18, %cst_15 {dimension_numbers = #tpu.dot_dimension_numbers<[1], [0], [0], [1], [0, 0, 1, 1], [], []>} : vector<128x128xbf16>, vector<128x1024xbf16>, vector<128x1024xf32> -> vector<128x1024xf32>
    %c0_16 = arith.constant 0 : index
    %c0_17 = arith.constant 0 : index
    %20 = vector.load %arg8[%c0_16, %c0_17] : memref<1x1024xf32, #tpu.memory_space<vmem>>, vector<1x1024xf32>
    %21 = vector.broadcast %20 : vector<1x1024xf32> to vector<128x1024xf32>
    %22 = arith.addf %19, %21 : vector<128x1024xf32>
    %cst_18 = arith.constant 0.000000e+00 : f32
    %23 = vector.broadcast %cst_18 : f32 to vector<128x1024xf32>
    %24 = arith.maximumf %22, %23 : vector<128x1024xf32>
    %25 = vector.shape_cast %24 : vector<128x1024xf32> to vector<2x64x1024xf32>
    %cst_19 = arith.constant dense<0xFF800000> : vector<2x1024xf32>
    %26 = vector.multi_reduction <maximumf>, %25, %cst_19 [1] : vector<2x64x1024xf32> to vector<2x1024xf32>
    %c0_i32 = arith.constant 0 : i32
    %27 = arith.cmpi eq, %arg1, %c0_i32 : i32
    %28 = arith.extui %27 : i1 to i32
    %c0_i32_20 = arith.constant 0 : i32
    %29 = arith.cmpi ne, %28, %c0_i32_20 : i32
    scf.if %29 {
      %c0_25 = arith.constant 0 : index
      %c0_26 = arith.constant 0 : index
      %36 = vector.load %arg16[%c0_25, %c0_26] : memref<2x1024xf32, #tpu.memory_space<vmem>>, vector<2x1024xf32>
      tpu.vector_store %arg16[%c0_25, %c0_26], %26 {strides = array<i32>} : memref<2x1024xf32, #tpu.memory_space<vmem>>, vector<2x1024xf32>,
    } else {
    }
    %c0_i32_21 = arith.constant 0 : i32
    %30 = arith.cmpi sgt, %arg1, %c0_i32_21 : i32
    %31 = arith.extui %30 : i1 to i32
    %c0_i32_22 = arith.constant 0 : i32
    %32 = arith.cmpi ne, %31, %c0_i32_22 : i32
    scf.if %32 {
      %c0_25 = arith.constant 0 : index
      %c0_26 = arith.constant 0 : index
      %36 = vector.load %arg16[%c0_25, %c0_26] : memref<2x1024xf32, #tpu.memory_space<vmem>>, vector<2x1024xf32>
      %37 = arith.maximumf %36, %26 : vector<2x1024xf32>
      %c0_27 = arith.constant 0 : index
      %c0_28 = arith.constant 0 : index
      %38 = vector.load %arg16[%c0_27, %c0_28] : memref<2x1024xf32, #tpu.memory_space<vmem>>, vector<2x1024xf32>
      tpu.vector_store %arg16[%c0_27, %c0_28], %37 {strides = array<i32>} : memref<2x1024xf32, #tpu.memory_space<vmem>>, vector<2x1024xf32>,
    } else {
    }
    %c0_i32_23 = arith.constant 0 : i32
    %33 = arith.cmpi eq, %arg1, %c0_i32_23 : i32
    %34 = arith.extui %33 : i1 to i32
    %c0_i32_24 = arith.constant 0 : i32
    %35 = arith.cmpi ne, %34, %c0_i32_24 : i32
    scf.if %35 {
      %c0_25 = arith.constant 0 : index
      %c0_26 = arith.constant 0 : index
      %36 = vector.load %arg16[%c0_25, %c0_26] : memref<2x1024xf32, #tpu.memory_space<vmem>>, vector<2x1024xf32>
      %37 = arith.truncf %36 : vector<2x1024xf32> to vector<2x1024xbf16>
      %c0_27 = arith.constant 0 : index
      %c0_28 = arith.constant 0 : index
      %38 = vector.load %arg9[%c0_27, %c0_28] : memref<1024x512xbf16, #tpu.memory_space<vmem>>, vector<1024x512xbf16>
      %cst_29 = arith.constant dense<0.000000e+00> : vector<2x512xf32>
      %39 = tpu.matmul %37, %38, %cst_29 {dimension_numbers = #tpu.dot_dimension_numbers<[1], [0], [0], [1], [0, 0, 1, 1], [], []>} : vector<2x1024xbf16>, vector<1024x512xbf16>, vector<2x512xf32> -> vector<2x512xf32>
      %c0_30 = arith.constant 0 : index
      %c0_31 = arith.constant 0 : index
      %40 = vector.load %arg10[%c0_30, %c0_31] : memref<1x512xf32, #tpu.memory_space<vmem>>, vector<1x512xf32>
      %41 = vector.broadcast %40 : vector<1x512xf32> to vector<2x512xf32>
      %42 = arith.addf %39, %41 : vector<2x512xf32>
      %cst_32 = arith.constant 0.000000e+00 : f32
      %43 = vector.broadcast %cst_32 : f32 to vector<2x512xf32>
      %44 = arith.maximumf %42, %43 : vector<2x512xf32>
      %45 = arith.truncf %44 : vector<2x512xf32> to vector<2x512xbf16>
      %c0_33 = arith.constant 0 : index
      %c0_34 = arith.constant 0 : index
      %46 = vector.load %arg11[%c0_33, %c0_34] : memref<512x256xbf16, #tpu.memory_space<vmem>>, vector<512x256xbf16>
      %cst_35 = arith.constant dense<0.000000e+00> : vector<2x256xf32>
      %47 = tpu.matmul %45, %46, %cst_35 {dimension_numbers = #tpu.dot_dimension_numbers<[1], [0], [0], [1], [0, 0, 1, 1], [], []>} : vector<2x512xbf16>, vector<512x256xbf16>, vector<2x256xf32> -> vector<2x256xf32>
      %c0_36 = arith.constant 0 : index
      %c0_37 = arith.constant 0 : index
      %48 = vector.load %arg12[%c0_36, %c0_37] : memref<1x256xf32, #tpu.memory_space<vmem>>, vector<1x256xf32>
      %49 = vector.broadcast %48 : vector<1x256xf32> to vector<2x256xf32>
      %50 = arith.addf %47, %49 : vector<2x256xf32>
      %cst_38 = arith.constant 0.000000e+00 : f32
      %51 = vector.broadcast %cst_38 : f32 to vector<2x256xf32>
      %52 = arith.maximumf %50, %51 : vector<2x256xf32>
      %c0_39 = arith.constant 0 : index
      %c0_40 = arith.constant 0 : index
      %53 = vector.load %arg13[%c0_39, %c0_40] : memref<256x128xf32, #tpu.memory_space<vmem>>, vector<256x128xf32>
      %cst_41 = arith.constant dense<0.000000e+00> : vector<2x128xf32>
      %54 = tpu.matmul %52, %53, %cst_41 {dimension_numbers = #tpu.dot_dimension_numbers<[1], [0], [0], [1], [0, 0, 1, 1], [], []>} : vector<2x256xf32>, vector<256x128xf32>, vector<2x128xf32> -> vector<2x128xf32>
      %c0_42 = arith.constant 0 : index
      %c0_43 = arith.constant 0 : index
      %55 = vector.load %arg14[%c0_42, %c0_43] : memref<1x128xf32, #tpu.memory_space<vmem>>, vector<1x128xf32>
      %56 = vector.broadcast %55 : vector<1x128xf32> to vector<2x128xf32>
      %57 = arith.addf %54, %56 : vector<2x128xf32>
      %c0_44 = arith.constant 0 : index
      %c0_45 = arith.constant 0 : index
      %58 = vector.load %arg15[%c0_44, %c0_45] : memref<2x128xf32, #tpu.memory_space<vmem>>, vector<2x128xf32>
      tpu.vector_store %arg15[%c0_44, %c0_45], %57 {strides = array<i32>} : memref<2x128xf32, #tpu.memory_space<vmem>>, vector<2x128xf32>,
    } else {
    }
    return
  }
  func.func @transform_0(%arg0: i32, %arg1: i32) -> (i32, i32, i32) {
    %c0_i32 = arith.constant 0 : i32
    %c0_i32_0 = arith.constant 0 : i32
    return %arg0, %arg1, %c0_i32 : i32, i32, i32
  }
  func.func @transform_1(%arg0: i32, %arg1: i32) -> (i32, i32) {
    %c0_i32 = arith.constant 0 : i32
    %c0_i32_0 = arith.constant 0 : i32
    %c0_i32_1 = arith.constant 0 : i32
    return %c0_i32, %c0_i32_0 : i32, i32
  }
  func.func @transform_2(%arg0: i32, %arg1: i32) -> (i32, i32) {
    %c0_i32 = arith.constant 0 : i32
    %c0_i32_0 = arith.constant 0 : i32
    %c0_i32_1 = arith.constant 0 : i32
    return %c0_i32, %c0_i32_0 : i32, i32
  }
  func.func @transform_3(%arg0: i32, %arg1: i32) -> (i32, i32) {
    %c0_i32 = arith.constant 0 : i32
    %c0_i32_0 = arith.constant 0 : i32
    %c0_i32_1 = arith.constant 0 : i32
    return %c0_i32, %c0_i32_0 : i32, i32
  }
  func.func @transform_4(%arg0: i32, %arg1: i32) -> (i32, i32) {
    %c0_i32 = arith.constant 0 : i32
    %c0_i32_0 = arith.constant 0 : i32
    %c0_i32_1 = arith.constant 0 : i32
    return %c0_i32, %c0_i32_0 : i32, i32
  }
  func.func @transform_5(%arg0: i32, %arg1: i32) -> (i32, i32) {
    %c0_i32 = arith.constant 0 : i32
    %c0_i32_0 = arith.constant 0 : i32
    %c0_i32_1 = arith.constant 0 : i32
    return %c0_i32, %c0_i32_0 : i32, i32
  }
  func.func @transform_6(%arg0: i32, %arg1: i32) -> (i32, i32) {
    %c0_i32 = arith.constant 0 : i32
    %c0_i32_0 = arith.constant 0 : i32
    %c0_i32_1 = arith.constant 0 : i32
    return %c0_i32, %c0_i32_0 : i32, i32
  }
  func.func @transform_7(%arg0: i32, %arg1: i32) -> (i32, i32) {
    %c0_i32 = arith.constant 0 : i32
    %c0_i32_0 = arith.constant 0 : i32
    %c0_i32_1 = arith.constant 0 : i32
    return %c0_i32, %c0_i32_0 : i32, i32
  }
  func.func @transform_8(%arg0: i32, %arg1: i32) -> (i32, i32) {
    %c0_i32 = arith.constant 0 : i32
    %c0_i32_0 = arith.constant 0 : i32
    %c0_i32_1 = arith.constant 0 : i32
    return %c0_i32, %c0_i32_0 : i32, i32
  }
  func.func @transform_9(%arg0: i32, %arg1: i32) -> (i32, i32) {
    %c0_i32 = arith.constant 0 : i32
    %c0_i32_0 = arith.constant 0 : i32
    %c0_i32_1 = arith.constant 0 : i32
    return %c0_i32, %c0_i32_0 : i32, i32
  }
  func.func @transform_10(%arg0: i32, %arg1: i32) -> (i32, i32) {
    %c0_i32 = arith.constant 0 : i32
    %c0_i32_0 = arith.constant 0 : i32
    %c0_i32_1 = arith.constant 0 : i32
    return %c0_i32, %c0_i32_0 : i32, i32
  }
  func.func @transform_11(%arg0: i32, %arg1: i32) -> (i32, i32) {
    %c0_i32 = arith.constant 0 : i32
    %c0_i32_0 = arith.constant 0 : i32
    %c0_i32_1 = arith.constant 0 : i32
    return %c0_i32, %c0_i32_0 : i32, i32
  }
  func.func @transform_12(%arg0: i32, %arg1: i32) -> (i32, i32) {
    %c0_i32 = arith.constant 0 : i32
    %c0_i32_0 = arith.constant 0 : i32
    %c0_i32_1 = arith.constant 0 : i32
    return %c0_i32, %c0_i32_0 : i32, i32
  }
  func.func @transform_13(%arg0: i32, %arg1: i32) -> (i32, i32) {
    %c0_i32 = arith.constant 0 : i32
    %c0_i32_0 = arith.constant 0 : i32
    return %arg0, %c0_i32 : i32, i32
  }
}

</mosaic_0001>

<llo_original>
// kernel: tpu_custom_call.1
$region0: #{tpu_custom_call.1}
  #allocation0 [shape = 'u32[]', space=smem, size = 0x4, offset = 0x4, fixed_abs, tag = 'smem constant byte address 0x4 - core index']
  #allocation1 [shape = 'u32[144,128]{1,0:T(1,128)}', space=vmem, size = 0x12000, scoped, tag = 'internal scratch']
  #allocation2 [shape = 'f32[2,1024]{1,0:T(2,128)}', space=vmem, size = 0x2000, scoped, tag = 'scratch operand']
  %s0 = inlined_call_operand.vmem [shape: bf16[2,64,8], index: 0, kind: input, shape index: {}]
  %s1 = inlined_call_operand.vmem [shape: bf16[8,64], index: 1, kind: input, shape index: {}]
  %s2 = inlined_call_operand.vmem [shape: f32[1,64], index: 2, kind: input, shape index: {}]
  %s3 = inlined_call_operand.vmem [shape: bf16[64,128], index: 3, kind: input, shape index: {}]
  %s4 = inlined_call_operand.vmem [shape: f32[1,128], index: 4, kind: input, shape index: {}]
  %s5 = inlined_call_operand.hbm [shape: bf16[128,1024], index: 5, kind: input, shape index: {}]
  %s6 = inlined_call_operand.vmem [shape: f32[1,1024], index: 6, kind: input, shape index: {}]
  %s7 = inlined_call_operand.hbm [shape: bf16[1024,512], index: 7, kind: input, shape index: {}]
  %s8 = inlined_call_operand.vmem [shape: f32[1,512], index: 8, kind: input, shape index: {}]
  %s9 = inlined_call_operand.hbm [shape: bf16[512,256], index: 9, kind: input, shape index: {}]
  %s10 = inlined_call_operand.vmem [shape: f32[1,256], index: 10, kind: input, shape index: {}]
  %s11 = inlined_call_operand.hbm [shape: f32[256,128], index: 11, kind: input, shape index: {}]
  %s12 = inlined_call_operand.vmem [shape: f32[1,128], index: 12, kind: input, shape index: {}]
  %s13 = inlined_call_operand.hbm [shape: f32[2,128], index: 13, kind: output, shape index: {}]
  %s14 = sld [smem:[#allocation0]]
  $region90: #{tpu_custom_call.1} parent=0
    _
  %s16 = ssub.s32 1, %s14
  %s17 = scalar_select 0, %s16, %s14
  $region1: #{tpu_custom_call.1} parent=0
    #allocation3 [shape = 'u8[262144]{0}', space=vmem, size = 0x40000, scoped, tag = 'input window, operand 5, single buffered']
    #allocation4 [shape = 's32[1]{0}', space=sflag, size = 0x4, scoped, tag = 'scoped memory for tpu_custom_call.1']
    #allocation5 [shape = 's32[1]{0}', space=sflag, size = 0x4, scoped, tag = 'scoped memory for tpu_custom_call.1']
    #allocation6 [shape = 'u8[1048576]{0}', space=vmem, size = 0x100000, scoped, tag = 'input window, operand 7, single buffered']
    #allocation7 [shape = 's32[1]{0}', space=sflag, size = 0x4, scoped, tag = 'scoped memory for tpu_custom_call.1']
    #allocation8 [shape = 'u8[262144]{0}', space=vmem, size = 0x40000, scoped, tag = 'input window, operand 9, single buffered']
    #allocation9 [shape = 'u8[131072]{0}', space=vmem, size = 0x20000, scoped, tag = 'input window, operand 11, single buffered']
    #allocation10 [shape = 's32[1]{0}', space=sflag, size = 0x4, scoped, tag = 'scoped memory for tpu_custom_call.1']
    #allocation11 [shape = 'u8[1024]{0}', space=vmem, size = 0x400, scoped, tag = 'output window, operand 0, single buffered']
    %18 = vsyncpa [#allocation4], 0
    %19 = vsyncpa [#allocation7], 0
    %20 = vsyncpa [#allocation10], 0
    %21 = vsyncpa [#allocation5], 0
    // Predicated region
    $region2: #{tpu_custom_call.1} parent=1 // pred_check
      _
    $region3: #{tpu_custom_call.1} parent=1 // pred_check_branch
      %23 = sbr.rel (0) target = $region5
    $region4: #{tpu_custom_call.1} parent=1 // pred_region
      _
    $region5: #{tpu_custom_call.1} parent=1 // pred_fallthru
      _
    // Predicated region
    $region6: #{tpu_custom_call.1} parent=1 // pred_check
      _
    $region7: #{tpu_custom_call.1} parent=1 // pred_check_branch
      %25 = sbr.rel (0) target = $region9
    $region8: #{tpu_custom_call.1} parent=1 // pred_region
      _
    $region9: #{tpu_custom_call.1} parent=1 // pred_fallthru
      _
    // Predicated region
    $region10: #{tpu_custom_call.1} parent=1 // pred_check
      _
    $region11: #{tpu_custom_call.1} parent=1 // pred_check_branch
      %27 = sbr.rel (0) target = $region13
    $region12: #{tpu_custom_call.1} parent=1 // pred_region
      _
    $region13: #{tpu_custom_call.1} parent=1 // pred_fallthru
      _
    // Predicated region
    $region14: #{tpu_custom_call.1} parent=1 // pred_check
      _
    $region15: #{tpu_custom_call.1} parent=1 // pred_check_branch
      %29 = sbr.rel (0) target = $region17
    $region16: #{tpu_custom_call.1} parent=1 // pred_region
      _
    $region17: #{tpu_custom_call.1} parent=1 // pred_fallthru
      _
    // Predicated region
    $region18: #{tpu_custom_call.1} parent=1 // pred_check
      _
    $region19: #{tpu_custom_call.1} parent=1 // pred_check_branch
      %31 = sbr.rel (0) target = $region21
    $region20: #{tpu_custom_call.1} parent=1 // pred_region
      _
    $region21: #{tpu_custom_call.1} parent=1 // pred_fallthru
      _
    // Predicated region
    $region22: #{tpu_custom_call.1} parent=1 // pred_check
      _
    $region23: #{tpu_custom_call.1} parent=1 // pred_check_branch
      %33 = sbr.rel (0) target = $region25
    $region24: #{tpu_custom_call.1} parent=1 // pred_region
      %s35 = ssub.s32 8192, 8192
      %36 = vsyncadd [#allocation4], %s35
      %s37 = sshll.u32 [#allocation3], 4
      %s38 = int_to_ptr.vmem [resolvable:$true] %s37
      %43 = dma.hbm_to_vmem [thread:$0]  %s5, 8192, %s38, [#allocation4], 512, 512, 32
    $region25: #{tpu_custom_call.1} parent=1 // pred_fallthru
      _
    // Predicated region
    $region26: #{tpu_custom_call.1} parent=1 // pred_check
      _
    $region27: #{tpu_custom_call.1} parent=1 // pred_check_branch
      %45 = sbr.rel (0) target = $region29
    $region28: #{tpu_custom_call.1} parent=1 // pred_region
      _
    $region29: #{tpu_custom_call.1} parent=1 // pred_fallthru
      _
    // Predicated region
    $region30: #{tpu_custom_call.1} parent=1 // pred_check
      _
    $region31: #{tpu_custom_call.1} parent=1 // pred_check_branch
      %47 = sbr.rel (0) target = $region33
    $region32: #{tpu_custom_call.1} parent=1 // pred_region
      %s49 = ssub.s32 32768, 32768
      %50 = vsyncadd [#allocation7], %s49
      %s51 = sshll.u32 [#allocation6], 4
      %s52 = int_to_ptr.vmem [resolvable:$true] %s51
      %57 = dma.hbm_to_vmem [thread:$0]  %s7, 32768, %s52, [#allocation7], 256, 256, 16
    $region33: #{tpu_custom_call.1} parent=1 // pred_fallthru
      _
    // Predicated region
    $region34: #{tpu_custom_call.1} parent=1 // pred_check
      _
    $region35: #{tpu_custom_call.1} parent=1 // pred_check_branch
      %59 = sbr.rel (0) target = $region37
    $region36: #{tpu_custom_call.1} parent=1 // pred_region
      _
    $region37: #{tpu_custom_call.1} parent=1 // pred_fallthru
      _
    // Predicated region
    $region38: #{tpu_custom_call.1} parent=1 // pred_check
      _
    $region39: #{tpu_custom_call.1} parent=1 // pred_check_branch
      %61 = sbr.rel (0) target = $region41
    $region40: #{tpu_custom_call.1} parent=1 // pred_region
      %s63 = ssub.s32 8192, 8192
      %64 = vsyncadd [#allocation7], %s63
      %s65 = sshll.u32 [#allocation8], 4
      %s66 = int_to_ptr.vmem [resolvable:$true] %s65
      %71 = dma.hbm_to_vmem [thread:$0]  %s9, 8192, %s66, [#allocation7], 128, 128, 8
    $region41: #{tpu_custom_call.1} parent=1 // pred_fallthru
      _
    // Predicated region
    $region42: #{tpu_custom_call.1} parent=1 // pred_check
      _
    $region43: #{tpu_custom_call.1} parent=1 // pred_check_branch
      %73 = sbr.rel (0) target = $region45
    $region44: #{tpu_custom_call.1} parent=1 // pred_region
      _
    $region45: #{tpu_custom_call.1} parent=1 // pred_fallthru
      _
    // Predicated region
    $region46: #{tpu_custom_call.1} parent=1 // pred_check
      _
    $region47: #{tpu_custom_call.1} parent=1 // pred_check_branch
      %75 = sbr.rel (0) target = $region49
    $region48: #{tpu_custom_call.1} parent=1 // pred_region
      %s77 = ssub.s32 4096, 4096
      %78 = vsyncadd [#allocation10], %s77
      %s79 = sshll.u32 [#allocation9], 4
      %s80 = int_to_ptr.vmem [resolvable:$true] %s79
      %85 = dma.hbm_to_vmem [thread:$0]  %s11, 4096, %s80, [#allocation10], 128, 128, 8
    $region49: #{tpu_custom_call.1} parent=1 // pred_fallthru
      _
    // Predicated region
    $region50: #{tpu_custom_call.1} parent=1 // pred_check
      _
    $region51: #{tpu_custom_call.1} parent=1 // pred_check_branch
      %87 = sbr.rel (0) target = $region53
    $region52: #{tpu_custom_call.1} parent=1 // pred_region
      _
    $region53: #{tpu_custom_call.1} parent=1 // pred_fallthru
      _
    // Predicated region
    $region54: #{tpu_custom_call.1} parent=1 // pred_check
      _
    $region55: #{tpu_custom_call.1} parent=1 // pred_check_branch
      %89 = sbr.rel (0) target = $region57
    $region56: #{tpu_custom_call.1} parent=1 // pred_region
      %90 = dma.done [#allocation4], 8192
    $region57: #{tpu_custom_call.1} parent=1 // pred_fallthru
      _
    // Predicated region
    $region58: #{tpu_custom_call.1} parent=1 // pred_check
      _
    $region59: #{tpu_custom_call.1} parent=1 // pred_check_branch
      %92 = sbr.rel (0) target = $region61
    $region60: #{tpu_custom_call.1} parent=1 // pred_region
      %93 = dma.done [#allocation7], 32768
    $region61: #{tpu_custom_call.1} parent=1 // pred_fallthru
      _
    // Predicated region
    $region62: #{tpu_custom_call.1} parent=1 // pred_check
      _
    $region63: #{tpu_custom_call.1} parent=1 // pred_check_branch
      %95 = sbr.rel (0) target = $region65
    $region64: #{tpu_custom_call.1} parent=1 // pred_region
      %96 = dma.done [#allocation7], 8192
    $region65: #{tpu_custom_call.1} parent=1 // pred_fallthru
      _
    // Predicated region
    $region66: #{tpu_custom_call.1} parent=1 // pred_check
      _
    $region67: #{tpu_custom_call.1} parent=1 // pred_check_branch
      %98 = sbr.rel (0) target = $region69
    $region68: #{tpu_custom_call.1} parent=1 // pred_region
      %99 = dma.done [#allocation10], 4096
    $region69: #{tpu_custom_call.1} parent=1 // pred_fallthru
      _
    %v101 = vld [vmem:[%s0] sm:$0xf]
    %v102 = vld [vmem:[%s0 + $0x4] sm:$0xf]
    %v103 = vld [vmem:[%s0 + $0x8] sm:$0xf]
    %v104 = vld [vmem:[%s0 + $0xc] sm:$0xf]
    %v105 = vld [vmem:[%s0 + $0x10] sm:$0xf]
    %v106 = vld [vmem:[%s0 + $0x14] sm:$0xf]
    %v107 = vld [vmem:[%s0 + $0x18] sm:$0xf]
    %v108 = vld [vmem:[%s0 + $0x1c] sm:$0xf]
    %v109 = vld [vmem:[%s0 + $0x20] sm:$0xf]
    %v110 = vld [vmem:[%s0 + $0x24] sm:$0xf]
    %v111 = vld [vmem:[%s0 + $0x28] sm:$0xf]
    %v112 = vld [vmem:[%s0 + $0x2c] sm:$0xf]
    %v113 = vld [vmem:[%s0 + $0x30] sm:$0xf]
    %v114 = vld [vmem:[%s0 + $0x34] sm:$0xf]
    %v115 = vld [vmem:[%s0 + $0x38] sm:$0xf]
    %v116 = vld [vmem:[%s0 + $0x3c] sm:$0xf]
    %v117 = vld [vmem:[%s1] sm:$0xf]
    %v118 = vld [vmem:[%s2] sm:$0x1]
    %v120 = vlaneseq
    %v121 = vshrl.u32 %v120, 7
    %v122 = vsub.s32 0, %v121
    %v123 = vrot.slane %v118, %v122
    %v141 = vunpack.c.l.b16 %v101
    %v142 = vunpack.c.l.b16 %v102
    %v143 = vunpack.c.l.b16 %v103
    %v144 = vunpack.c.l.b16 %v104
    %v145 = vunpack.c.l.b16 %v105
    %v146 = vunpack.c.l.b16 %v106
    %v147 = vunpack.c.l.b16 %v107
    %v148 = vunpack.c.l.b16 %v108
    %v149 = vunpack.c.l.b16 %v109
    %v150 = vunpack.c.l.b16 %v110
    %v151 = vunpack.c.l.b16 %v111
    %v152 = vunpack.c.l.b16 %v112
    %v153 = vunpack.c.l.b16 %v113
    %v154 = vunpack.c.l.b16 %v114
    %v155 = vunpack.c.l.b16 %v115
    %v156 = vunpack.c.l.b16 %v116
    %v157 = vpack.c.b16 %v142, %v141
    %v158 = vpack.c.b16 %v144, %v143
    %v159 = vpack.c.b16 %v146, %v145
    %v160 = vpack.c.b16 %v148, %v147
    %v161 = vpack.c.b16 %v150, %v149
    %v162 = vpack.c.b16 %v152, %v151
    %v163 = vpack.c.b16 %v154, %v153
    %v164 = vpack.c.b16 %v156, %v155
    %vm165 = vcmask 64512
    %v167 = vsel %vm165, %v157, 0
    %v170 = vsel %vm165, %v158, 0
    %v173 = vsel %vm165, %v159, 0
    %v176 = vsel %vm165, %v160, 0
    %v179 = vsel %vm165, %v161, 0
    %v182 = vsel %vm165, %v162, 0
    %v185 = vsel %vm165, %v163, 0
    %v188 = vsel %vm165, %v164, 0
    %vm190 = vcmask 1043456
    %v192 = vsel %vm190, %v117, 0
    %194 = vmatprep.subr.bf16.mxu0 0
    %195 = vmatpush1.bf16.msra.mxu0 %v192
    %196 = vmatprep.subr.bf16.mxu0 0
    %197 = vmatpush1.bf16.msra.mxu0 0
    %198 = vmatprep.subr.bf16.mxu0 0
    %199 = vmatpush1.bf16.msra.mxu0 0
    %200 = vmatprep.subr.bf16.mxu0 0
    %201 = vmatpush1.bf16.msra.mxu0 0
    %202 = vmatprep.subr.bf16.mxu0 0
    %203 = vmatpush1.bf16.msra.mxu0 0
    %204 = vmatprep.subr.bf16.mxu0 0
    %205 = vmatpush1.bf16.msra.mxu0 0
    %206 = vmatprep.subr.bf16.mxu0 0
    %207 = vmatpush1.bf16.msra.mxu0 0
    %208 = vmatprep.subr.bf16.mxu0 0
    %209 = vmatpush1.bf16.msra.mxu0 0
    %210 = vmatprep.subr.bf16.mxu0 0
    %211 = vmatpush1.bf16.msra.mxu0 0
    %212 = vmatprep.subr.bf16.mxu0 0
    %213 = vmatpush1.bf16.msra.mxu0 0
    %214 = vmatprep.subr.bf16.mxu0 0
    %215 = vmatpush1.bf16.msra.mxu0 0
    %216 = vmatprep.subr.bf16.mxu0 0
    %217 = vmatpush1.bf16.msra.mxu0 0
    %218 = vmatprep.subr.bf16.mxu0 0
    %219 = vmatpush1.bf16.msra.mxu0 0
    %220 = vmatprep.subr.bf16.mxu0 0
    %221 = vmatpush1.bf16.msra.mxu0 0
    %222 = vmatprep.subr.bf16.mxu0 0
    %223 = vmatpush1.bf16.msra.mxu0 0
    %224 = vmatprep.subr.bf16.mxu0 0
    %225 = vmatpush1.bf16.msra.mxu0 0
    %226 = vmatprep.mubr.bf16.mxu0 0
    %227 = vmatmul.mubr.bf16.gmra.mrb[0].mxu0 %v167
    %v228 = vpop.f32.mrb[0].mxu0
    %v229 = vadd.f32 %v123, %v228
    %v230 = vpop.f32.mrb[0].mxu0
    %v231 = vpop.f32.mrb[0].mxu0
    %v232 = vadd.f32 %v123, %v231
    %v233 = vpop.f32.mrb[0].mxu0
    %234 = vmatprep.mubr.bf16.mxu0 0
    %235 = vmatmul.mubr.bf16.gmra.mrb[0].mxu0 %v170
    %v236 = vpop.f32.mrb[0].mxu0
    %v237 = vadd.f32 %v123, %v236
    %v238 = vpop.f32.mrb[0].mxu0
    %v239 = vpop.f32.mrb[0].mxu0
    %v240 = vadd.f32 %v123, %v239
    %v241 = vpop.f32.mrb[0].mxu0
    %242 = vmatprep.mubr.bf16.mxu0 0
    %243 = vmatmul.mubr.bf16.gmra.mrb[0].mxu0 %v173
    %v244 = vpop.f32.mrb[0].mxu0
    %v245 = vadd.f32 %v123, %v244
    %v246 = vpop.f32.mrb[0].mxu0
    %v247 = vpop.f32.mrb[0].mxu0
    %v248 = vadd.f32 %v123, %v247
    %v249 = vpop.f32.mrb[0].mxu0
    %250 = vmatprep.mubr.bf16.mxu0 0
    %251 = vmatmul.mubr.bf16.gmra.mrb[0].mxu0 %v176
    %v252 = vpop.f32.mrb[0].mxu0
    %v253 = vadd.f32 %v123, %v252
    %v254 = vpop.f32.mrb[0].mxu0
    %v255 = vpop.f32.mrb[0].mxu0
    %v256 = vadd.f32 %v123, %v255
    %v257 = vpop.f32.mrb[0].mxu0
    %258 = vmatprep.mubr.bf16.mxu0 0
    %259 = vmatmul.mubr.bf16.gmra.mrb[0].mxu0 %v179
    %v260 = vpop.f32.mrb[0].mxu0
    %v261 = vadd.f32 %v123, %v260
    %v262 = vpop.f32.mrb[0].mxu0
    %v263 = vpop.f32.mrb[0].mxu0
    %v264 = vadd.f32 %v123, %v263
    %v265 = vpop.f32.mrb[0].mxu0
    %266 = vmatprep.mubr.bf16.mxu0 0
    %267 = vmatmul.mubr.bf16.gmra.mrb[0].mxu0 %v182
    %v268 = vpop.f32.mrb[0].mxu0
    %v269 = vadd.f32 %v123, %v268
    %v270 = vpop.f32.mrb[0].mxu0
    %v271 = vpop.f32.mrb[0].mxu0
    %v272 = vadd.f32 %v123, %v271
    %v273 = vpop.f32.mrb[0].mxu0
    %274 = vmatprep.mubr.bf16.mxu0 0
    %275 = vmatmul.mubr.bf16.gmra.mrb[0].mxu0 %v185
    %v276 = vpop.f32.mrb[0].mxu0
    %v277 = vadd.f32 %v123, %v276
    %v278 = vpop.f32.mrb[0].mxu0
    %v279 = vpop.f32.mrb[0].mxu0
    %v280 = vadd.f32 %v123, %v279
    %v281 = vpop.f32.mrb[0].mxu0
    %282 = vmatprep.mubr.bf16.mxu0 0
    %283 = vmatmul.mubr.bf16.gmra.mrb[0].mxu0 %v188
    %v284 = vpop.f32.mrb[0].mxu0
    %v285 = vadd.f32 %v123, %v284
    %v286 = vpop.f32.mrb[0].mxu0
    %v287 = vpop.f32.mrb[0].mxu0
    %v288 = vadd.f32 %v123, %v287
    %v289 = vpop.f32.mrb[0].mxu0
    %290 = vdwg.mxu0
    %v291 = vmax.f32 %v229, 0.0
    %v292 = vmax.f32 %v232, 0.0
    %v293 = vmax.f32 %v237, 0.0
    %v294 = vmax.f32 %v240, 0.0
    %v295 = vmax.f32 %v245, 0.0
    %v296 = vmax.f32 %v248, 0.0
    %v297 = vmax.f32 %v253, 0.0
    %v298 = vmax.f32 %v256, 0.0
    %v299 = vmax.f32 %v261, 0.0
    %v300 = vmax.f32 %v264, 0.0
    %v301 = vmax.f32 %v269, 0.0
    %v302 = vmax.f32 %v272, 0.0
    %v303 = vmax.f32 %v277, 0.0
    %v304 = vmax.f32 %v280, 0.0
    %v305 = vmax.f32 %v285, 0.0
    %v306 = vmax.f32 %v288, 0.0
    %v307 = vpack.c.bf16 %v292, %v291
    %v308 = vpack.c.bf16 %v294, %v293
    %v309 = vpack.c.bf16 %v296, %v295
    %v310 = vpack.c.bf16 %v298, %v297
    %v311 = vpack.c.bf16 %v300, %v299
    %v312 = vpack.c.bf16 %v302, %v301
    %v313 = vpack.c.bf16 %v304, %v303
    %v314 = vpack.c.bf16 %v306, %v305
    %v315 = vld [vmem:[%s3] sm:$0xf]
    %v316 = vld [vmem:[%s3 + $0x4] sm:$0xf]
    %v317 = vld [vmem:[%s3 + $0x8] sm:$0xf]
    %v318 = vld [vmem:[%s3 + $0xc] sm:$0xf]
    %v319 = vld [vmem:[%s3 + $0x10] sm:$0xf]
    %v320 = vld [vmem:[%s3 + $0x14] sm:$0xf]
    %v321 = vld [vmem:[%s3 + $0x18] sm:$0xf]
    %v322 = vld [vmem:[%s3 + $0x1c] sm:$0xf]
    %v323 = vld [vmem:[%s4] sm:$0x1]
    %v325 = vlaneseq
    %v326 = vshrl.u32 %v325, 7
    %v327 = vsub.s32 0, %v326
    %v328 = vrot.slane %v323, %v327
    %v338 = vunpack.c.l.b16 %v315
    %v339 = vunpack.c.l.b16 %v316
    %v340 = vunpack.c.l.b16 %v317
    %v341 = vunpack.c.l.b16 %v318
    %v342 = vunpack.c.l.b16 %v319
    %v343 = vunpack.c.l.b16 %v320
    %v344 = vunpack.c.l.b16 %v321
    %v345 = vunpack.c.l.b16 %v322
    %v346 = vpack.c.b16 %v339, %v338
    %v347 = vpack.c.b16 %v341, %v340
    %v348 = vpack.c.b16 %v343, %v342
    %v349 = vpack.c.b16 %v345, %v344
    %vm354 = vcmask 523264
    %v356 = vsel %vm354, %v307, 0
    %v359 = vsel %vm354, %v308, 0
    %v362 = vsel %vm354, %v309, 0
    %v365 = vsel %vm354, %v310, 0
    %v368 = vsel %vm354, %v311, 0
    %v371 = vsel %vm354, %v312, 0
    %v374 = vsel %vm354, %v313, 0
    %v377 = vsel %vm354, %v314, 0
    %379 = vmatprep.subr.bf16.mxu0 0
    %380 = vmatpush1.bf16.msra.mxu0 %v346
    %381 = vmatprep.subr.bf16.mxu0 0
    %382 = vmatpush1.bf16.msra.mxu0 %v347
    %383 = vmatprep.subr.bf16.mxu0 0
    %384 = vmatpush1.bf16.msra.mxu0 %v348
    %385 = vmatprep.subr.bf16.mxu0 0
    %386 = vmatpush1.bf16.msra.mxu0 %v349
    %387 = vmatprep.subr.bf16.mxu0 0
    %388 = vmatpush1.bf16.msra.mxu0 0
    %389 = vmatprep.subr.bf16.mxu0 0
    %390 = vmatpush1.bf16.msra.mxu0 0
    %391 = vmatprep.subr.bf16.mxu0 0
    %392 = vmatpush1.bf16.msra.mxu0 0
    %393 = vmatprep.subr.bf16.mxu0 0
    %394 = vmatpush1.bf16.msra.mxu0 0
    %395 = vmatprep.subr.bf16.mxu0 0
    %396 = vmatpush1.bf16.msra.mxu0 0
    %397 = vmatprep.subr.bf16.mxu0 0
    %398 = vmatpush1.bf16.msra.mxu0 0
    %399 = vmatprep.subr.bf16.mxu0 0
    %400 = vmatpush1.bf16.msra.mxu0 0
    %401 = vmatprep.subr.bf16.mxu0 0
    %402 = vmatpush1.bf16.msra.mxu0 0
    %403 = vmatprep.subr.bf16.mxu0 0
    %404 = vmatpush1.bf16.msra.mxu0 0
    %405 = vmatprep.subr.bf16.mxu0 0
    %406 = vmatpush1.bf16.msra.mxu0 0
    %407 = vmatprep.subr.bf16.mxu0 0
    %408 = vmatpush1.bf16.msra.mxu0 0
    %409 = vmatprep.subr.bf16.mxu0 0
    %410 = vmatpush1.bf16.msra.mxu0 0
    %411 = vmatprep.mubr.bf16.mxu0 0
    %412 = vmatmul.mubr.bf16.gmra.mrb[0].mxu0 %v356
    %v413 = vpop.f32.mrb[0].mxu0
    %v414 = vadd.f32 %v328, %v413
    %v415 = vpop.f32.mrb[0].mxu0
    %v416 = vpop.f32.mrb[0].mxu0
    %v417 = vadd.f32 %v328, %v416
    %v418 = vpop.f32.mrb[0].mxu0
    %419 = vmatprep.mubr.bf16.mxu0 0
    %420 = vmatmul.mubr.bf16.gmra.mrb[0].mxu0 %v359
    %v421 = vpop.f32.mrb[0].mxu0
    %v422 = vadd.f32 %v328, %v421
    %v423 = vpop.f32.mrb[0].mxu0
    %v424 = vpop.f32.mrb[0].mxu0
    %v425 = vadd.f32 %v328, %v424
    %v426 = vpop.f32.mrb[0].mxu0
    %427 = vmatprep.mubr.bf16.mxu0 0
    %428 = vmatmul.mubr.bf16.gmra.mrb[0].mxu0 %v362
    %v429 = vpop.f32.mrb[0].mxu0
    %v430 = vadd.f32 %v328, %v429
    %v431 = vpop.f32.mrb[0].mxu0
    %v432 = vpop.f32.mrb[0].mxu0
    %v433 = vadd.f32 %v328, %v432
    %v434 = vpop.f32.mrb[0].mxu0
    %435 = vmatprep.mubr.bf16.mxu0 0
    %436 = vmatmul.mubr.bf16.gmra.mrb[0].mxu0 %v365
    %v437 = vpop.f32.mrb[0].mxu0
    %v438 = vadd.f32 %v328, %v437
    %v439 = vpop.f32.mrb[0].mxu0
    %v440 = vpop.f32.mrb[0].mxu0
    %v441 = vadd.f32 %v328, %v440
    %v442 = vpop.f32.mrb[0].mxu0
    %443 = vmatprep.mubr.bf16.mxu0 0
    %444 = vmatmul.mubr.bf16.gmra.mrb[0].mxu0 %v368
    %v445 = vpop.f32.mrb[0].mxu0
    %v446 = vadd.f32 %v328, %v445
    %v447 = vpop.f32.mrb[0].mxu0
    %v448 = vpop.f32.mrb[0].mxu0
    %v449 = vadd.f32 %v328, %v448
    %v450 = vpop.f32.mrb[0].mxu0
    %451 = vmatprep.mubr.bf16.mxu0 0
    %452 = vmatmul.mubr.bf16.gmra.mrb[0].mxu0 %v371
    %v453 = vpop.f32.mrb[0].mxu0
    %v454 = vadd.f32 %v328, %v453
    %v455 = vpop.f32.mrb[0].mxu0
    %v456 = vpop.f32.mrb[0].mxu0
    %v457 = vadd.f32 %v328, %v456
    %v458 = vpop.f32.mrb[0].mxu0
    %459 = vmatprep.mubr.bf16.mxu0 0
    %460 = vmatmul.mubr.bf16.gmra.mrb[0].mxu0 %v374
    %v461 = vpop.f32.mrb[0].mxu0
    %v462 = vadd.f32 %v328, %v461
    %v463 = vpop.f32.mrb[0].mxu0
    %v464 = vpop.f32.mrb[0].mxu0
    %v465 = vadd.f32 %v328, %v464
    %v466 = vpop.f32.mrb[0].mxu0
    %467 = vmatprep.mubr.bf16.mxu0 0
    %468 = vmatmul.mubr.bf16.gmra.mrb[0].mxu0 %v377
    %v469 = vpop.f32.mrb[0].mxu0
    %v470 = vadd.f32 %v328, %v469
    %v471 = vpop.f32.mrb[0].mxu0
    %v472 = vpop.f32.mrb[0].mxu0
    %v473 = vadd.f32 %v328, %v472
    %v474 = vpop.f32.mrb[0].mxu0
    %475 = vdwg.mxu0
    %v476 = vmax.f32 %v414, 0.0
    %v477 = vmax.f32 %v417, 0.0
    %v478 = vmax.f32 %v422, 0.0
    %v479 = vmax.f32 %v425, 0.0
    %v480 = vmax.f32 %v430, 0.0
    %v481 = vmax.f32 %v433, 0.0
    %v482 = vmax.f32 %v438, 0.0
    %v483 = vmax.f32 %v441, 0.0
    %v484 = vmax.f32 %v446, 0.0
    %v485 = vmax.f32 %v449, 0.0
    %v486 = vmax.f32 %v454, 0.0
    %v487 = vmax.f32 %v457, 0.0
    %v488 = vmax.f32 %v462, 0.0
    %v489 = vmax.f32 %v465, 0.0
    %v490 = vmax.f32 %v470, 0.0
    %v491 = vmax.f32 %v473, 0.0
    %v492 = vpack.c.bf16 %v477, %v476
    %v493 = vpack.c.bf16 %v479, %v478
    %v494 = vpack.c.bf16 %v481, %v480
    %v495 = vpack.c.bf16 %v483, %v482
    %v496 = vpack.c.bf16 %v485, %v484
    %v497 = vpack.c.bf16 %v487, %v486
    %v498 = vpack.c.bf16 %v489, %v488
    %v499 = vpack.c.bf16 %v491, %v490
    %v500 = vld [vmem:[#allocation3] sm:$0xff]
    %v501 = vld [vmem:[#allocation3 + $0x8] sm:$0xff]
    %v502 = vld [vmem:[#allocation3 + $0x10] sm:$0xff]
    %v503 = vld [vmem:[#allocation3 + $0x18] sm:$0xff]
    %v504 = vld [vmem:[#allocation3 + $0x20] sm:$0xff]
    %v505 = vld [vmem:[#allocation3 + $0x28] sm:$0xff]
    %v506 = vld [vmem:[#allocation3 + $0x30] sm:$0xff]
    %v507 = vld [vmem:[#allocation3 + $0x38] sm:$0xff]
    %v508 = vld [vmem:[#allocation3 + $0x40] sm:$0xff]
    %v509 = vld [vmem:[#allocation3 + $0x48] sm:$0xff]
    %v510 = vld [vmem:[#allocation3 + $0x50] sm:$0xff]
    %v511 = vld [vmem:[#allocation3 + $0x58] sm:$0xff]
    %v512 = vld [vmem:[#allocation3 + $0x60] sm:$0xff]
    %v513 = vld [vmem:[#allocation3 + $0x68] sm:$0xff]
    %v514 = vld [vmem:[#allocation3 + $0x70] sm:$0xff]
    %v515 = vld [vmem:[#allocation3 + $0x78] sm:$0xff]
    %v516 = vld [vmem:[#allocation3 + $0x80] sm:$0xff]
    %v517 = vld [vmem:[#allocation3 + $0x88] sm:$0xff]
    %v518 = vld [vmem:[#allocation3 + $0x90] sm:$0xff]
    %v519 = vld [vmem:[#allocation3 + $0x98] sm:$0xff]
    %v520 = vld [vmem:[#allocation3 + $0xa0] sm:$0xff]
    %v521 = vld [vmem:[#allocation3 + $0xa8] sm:$0xff]
    %v522 = vld [vmem:[#allocation3 + $0xb0] sm:$0xff]
    %v523 = vld [vmem:[#allocation3 + $0xb8] sm:$0xff]
    %v524 = vld [vmem:[#allocation3 + $0xc0] sm:$0xff]
    %v525 = vld [vmem:[#allocation3 + $0xc8] sm:$0xff]
    %v526 = vld [vmem:[#allocation3 + $0xd0] sm:$0xff]
    %v527 = vld [vmem:[#allocation3 + $0xd8] sm:$0xff]
    %v528 = vld [vmem:[#allocation3 + $0xe0] sm:$0xff]
    %v529 = vld [vmem:[#allocation3 + $0xe8] sm:$0xff]
    %v530 = vld [vmem:[#allocation3 + $0xf0] sm:$0xff]
    %v531 = vld [vmem:[#allocation3 + $0xf8] sm:$0xff]
    %v532 = vld [vmem:[#allocation3 + $0x100] sm:$0xff]
    %v533 = vld [vmem:[#allocation3 + $0x108] sm:$0xff]
    %v534 = vld [vmem:[#allocation3 + $0x110] sm:$0xff]
    %v535 = vld [vmem:[#allocation3 + $0x118] sm:$0xff]
    %v536 = vld [vmem:[#allocation3 + $0x120] sm:$0xff]
    %v537 = vld [vmem:[#allocation3 + $0x128] sm:$0xff]
    %v538 = vld [vmem:[#allocation3 + $0x130] sm:$0xff]
    %v539 = vld [vmem:[#allocation3 + $0x138] sm:$0xff]
    %v540 = vld [vmem:[#allocation3 + $0x140] sm:$0xff]
    %v541 = vld [vmem:[#allocation3 + $0x148] sm:$0xff]
    %v542 = vld [vmem:[#allocation3 + $0x150] sm:$0xff]
    %v543 = vld [vmem:[#allocation3 + $0x158] sm:$0xff]
    %v544 = vld [vmem:[#allocation3 + $0x160] sm:$0xff]
    %v545 = vld [vmem:[#allocation3 + $0x168] sm:$0xff]
    %v546 = vld [vmem:[#allocation3 + $0x170] sm:$0xff]
    %v547 = vld [vmem:[#allocation3 + $0x178] sm:$0xff]
    %v548 = vld [vmem:[#allocation3 + $0x180] sm:$0xff]
    %v549 = vld [vmem:[#allocation3 + $0x188] sm:$0xff]
    %v550 = vld [vmem:[#allocation3 + $0x190] sm:$0xff]
    %v551 = vld [vmem:[#allocation3 + $0x198] sm:$0xff]
    %v552 = vld [vmem:[#allocation3 + $0x1a0] sm:$0xff]
    %v553 = vld [vmem:[#allocation3 + $0x1a8] sm:$0xff]
    %v554 = vld [vmem:[#allocation3 + $0x1b0] sm:$0xff]
    %v555 = vld [vmem:[#allocation3 + $0x1b8] sm:$0xff]
    %v556 = vld [vmem:[#allocation3 + $0x1c0] sm:$0xff]
    %v557 = vld [vmem:[#allocation3 + $0x1c8] sm:$0xff]
    %v558 = vld [vmem:[#allocation3 + $0x1d0] sm:$0xff]
    %v559 = vld [vmem:[#allocation3 + $0x1d8] sm:$0xff]
    %v560 = vld [vmem:[#allocation3 + $0x1e0] sm:$0xff]
    %v561 = vld [vmem:[#allocation3 + $0x1e8] sm:$0xff]
    %v562 = vld [vmem:[#allocation3 + $0x1f0] sm:$0xff]
    %v563 = vld [vmem:[#allocation3 + $0x1f8] sm:$0xff]
    %v564 = vld [vmem:[%s6] sm:$0xff]
    %v566 = vlaneseq
    %v567 = vshrl.u32 %v566, 7
    %v568 = vsub.s32 0, %v567
    %v569 = vrot.slane %v564, %v568
    %v570 = vlaneseq
    %v571 = vshrl.u32 %v570, 7
    %v572 = vsub.s32 1, %v571
    %v573 = vrot.slane %v564, %v572
    %v574 = vlaneseq
    %v575 = vshrl.u32 %v574, 7
    %v576 = vsub.s32 2, %v575
    %v577 = vrot.slane %v564, %v576
    %v578 = vlaneseq
    %v579 = vshrl.u32 %v578, 7
    %v580 = vsub.s32 3, %v579
    %v581 = vrot.slane %v564, %v580
    %v582 = vlaneseq
    %v583 = vshrl.u32 %v582, 7
    %v584 = vsub.s32 4, %v583
    %v585 = vrot.slane %v564, %v584
    %v586 = vlaneseq
    %v587 = vshrl.u32 %v586, 7
    %v588 = vsub.s32 5, %v587
    %v589 = vrot.slane %v564, %v588
    %v590 = vlaneseq
    %v591 = vshrl.u32 %v590, 7
    %v592 = vsub.s32 6, %v591
    %v593 = vrot.slane %v564, %v592
    %v594 = vlaneseq
    %v595 = vshrl.u32 %v594, 7
    %v596 = vsub.s32 7, %v595
    %v597 = vrot.slane %v564, %v596
    %v670 = vunpack.c.l.b16 %v500
    %v671 = vunpack.c.h.b16 %v500
    %v672 = vunpack.c.l.b16 %v501
    %v673 = vunpack.c.h.b16 %v501
    %v674 = vunpack.c.l.b16 %v502
    %v675 = vunpack.c.h.b16 %v502
    %v676 = vunpack.c.l.b16 %v503
    %v677 = vunpack.c.h.b16 %v503
    %v678 = vunpack.c.l.b16 %v504
    %v679 = vunpack.c.h.b16 %v504
    %v680 = vunpack.c.l.b16 %v505
    %v681 = vunpack.c.h.b16 %v505
    %v682 = vunpack.c.l.b16 %v506
    %v683 = vunpack.c.h.b16 %v506
    %v684 = vunpack.c.l.b16 %v507
    %v685 = vunpack.c.h.b16 %v507
    %v686 = vunpack.c.l.b16 %v508
    %v687 = vunpack.c.h.b16 %v508
    %v688 = vunpack.c.l.b16 %v509
    %v689 = vunpack.c.h.b16 %v509
    %v690 = vunpack.c.l.b16 %v510
    %v691 = vunpack.c.h.b16 %v510
    %v692 = vunpack.c.l.b16 %v511
    %v693 = vunpack.c.h.b16 %v511
    %v694 = vunpack.c.l.b16 %v512
    %v695 = vunpack.c.h.b16 %v512
    %v696 = vunpack.c.l.b16 %v513
    %v697 = vunpack.c.h.b16 %v513
    %v698 = vunpack.c.l.b16 %v514
    %v699 = vunpack.c.h.b16 %v514
    %v700 = vunpack.c.l.b16 %v515
    %v701 = vunpack.c.h.b16 %v515
    %v702 = vunpack.c.l.b16 %v516
    %v703 = vunpack.c.h.b16 %v516
    %v704 = vunpack.c.l.b16 %v517
    %v705 = vunpack.c.h.b16 %v517
    %v706 = vunpack.c.l.b16 %v518
    %v707 = vunpack.c.h.b16 %v518
    %v708 = vunpack.c.l.b16 %v519
    %v709 = vunpack.c.h.b16 %v519
    %v710 = vunpack.c.l.b16 %v520
    %v711 = vunpack.c.h.b16 %v520
    %v712 = vunpack.c.l.b16 %v521
    %v713 = vunpack.c.h.b16 %v521
    %v714 = vunpack.c.l.b16 %v522
    %v715 = vunpack.c.h.b16 %v522
    %v716 = vunpack.c.l.b16 %v523
    %v717 = vunpack.c.h.b16 %v523
    %v718 = vunpack.c.l.b16 %v524
    %v719 = vunpack.c.h.b16 %v524
    %v720 = vunpack.c.l.b16 %v525
    %v721 = vunpack.c.h.b16 %v525
    %v722 = vunpack.c.l.b16 %v526
    %v723 = vunpack.c.h.b16 %v526
    %v724 = vunpack.c.l.b16 %v527
    %v725 = vunpack.c.h.b16 %v527
    %v726 = vunpack.c.l.b16 %v528
    %v727 = vunpack.c.h.b16 %v528
    %v728 = vunpack.c.l.b16 %v529
    %v729 = vunpack.c.h.b16 %v529
    %v730 = vunpack.c.l.b16 %v530
    %v731 = vunpack.c.h.b16 %v530
    %v732 = vunpack.c.l.b16 %v531
    %v733 = vunpack.c.h.b16 %v531
    %v734 = vunpack.c.l.b16 %v532
    %v735 = vunpack.c.h.b16 %v532
    %v736 = vunpack.c.l.b16 %v533
    %v737 = vunpack.c.h.b16 %v533
    %v738 = vunpack.c.l.b16 %v534
    %v739 = vunpack.c.h.b16 %v534
    %v740 = vunpack.c.l.b16 %v535
    %v741 = vunpack.c.h.b16 %v535
    %v742 = vunpack.c.l.b16 %v536
    %v743 = vunpack.c.h.b16 %v536
    %v744 = vunpack.c.l.b16 %v537
    %v745 = vunpack.c.h.b16 %v537
    %v746 = vunpack.c.l.b16 %v538
    %v747 = vunpack.c.h.b16 %v538
    %v748 = vunpack.c.l.b16 %v539
    %v749 = vunpack.c.h.b16 %v539
    %v750 = vunpack.c.l.b16 %v540
    %v751 = vunpack.c.h.b16 %v540
    %v752 = vunpack.c.l.b16 %v541
    %v753 = vunpack.c.h.b16 %v541
    %v754 = vunpack.c.l.b16 %v542
    %v755 = vunpack.c.h.b16 %v542
    %v756 = vunpack.c.l.b16 %v543
    %v757 = vunpack.c.h.b16 %v543
    %v758 = vunpack.c.l.b16 %v544
    %v759 = vunpack.c.h.b16 %v544
    %v760 = vunpack.c.l.b16 %v545
    %v761 = vunpack.c.h.b16 %v545
    %v762 = vunpack.c.l.b16 %v546
    %v763 = vunpack.c.h.b16 %v546
    %v764 = vunpack.c.l.b16 %v547
    %v765 = vunpack.c.h.b16 %v547
    %v766 = vunpack.c.l.b16 %v548
    %v767 = vunpack.c.h.b16 %v548
    %v768 = vunpack.c.l.b16 %v549
    %v769 = vunpack.c.h.b16 %v549
    %v770 = vunpack.c.l.b16 %v550
    %v771 = vunpack.c.h.b16 %v550
    %v772 = vunpack.c.l.b16 %v551
    %v773 = vunpack.c.h.b16 %v551
    %v774 = vunpack.c.l.b16 %v552
    %v775 = vunpack.c.h.b16 %v552
    %v776 = vunpack.c.l.b16 %v553
    %v777 = vunpack.c.h.b16 %v553
    %v778 = vunpack.c.l.b16 %v554
    %v779 = vunpack.c.h.b16 %v554
    %v780 = vunpack.c.l.b16 %v555
    %v781 = vunpack.c.h.b16 %v555
    %v782 = vunpack.c.l.b16 %v556
    %v783 = vunpack.c.h.b16 %v556
    %v784 = vunpack.c.l.b16 %v557
    %v785 = vunpack.c.h.b16 %v557
    %v786 = vunpack.c.l.b16 %v558
    %v787 = vunpack.c.h.b16 %v558
    %v788 = vunpack.c.l.b16 %v559
    %v789 = vunpack.c.h.b16 %v559
    %v790 = vunpack.c.l.b16 %v560
    %v791 = vunpack.c.h.b16 %v560
    %v792 = vunpack.c.l.b16 %v561
    %v793 = vunpack.c.h.b16 %v561
    %v794 = vunpack.c.l.b16 %v562
    %v795 = vunpack.c.h.b16 %v562
    %v796 = vunpack.c.l.b16 %v563
    %v797 = vunpack.c.h.b16 %v563
    %v798 = vpack.c.b16 %v678, %v670
    %v799 = vpack.c.b16 %v679, %v671
    %v800 = vpack.c.b16 %v680, %v672
    %v801 = vpack.c.b16 %v681, %v673
    %v802 = vpack.c.b16 %v682, %v674
    %v803 = vpack.c.b16 %v683, %v675
    %v804 = vpack.c.b16 %v684, %v676
    %v805 = vpack.c.b16 %v685, %v677
    %v806 = vpack.c.b16 %v694, %v686
    %v807 = vpack.c.b16 %v695, %v687
    %v808 = vpack.c.b16 %v696, %v688
    %v809 = vpack.c.b16 %v697, %v689
    %v810 = vpack.c.b16 %v698, %v690
    %v811 = vpack.c.b16 %v699, %v691
    %v812 = vpack.c.b16 %v700, %v692
    %v813 = vpack.c.b16 %v701, %v693
    %v814 = vpack.c.b16 %v710, %v702
    %v815 = vpack.c.b16 %v711, %v703
    %v816 = vpack.c.b16 %v712, %v704
    %v817 = vpack.c.b16 %v713, %v705
    %v818 = vpack.c.b16 %v714, %v706
    %v819 = vpack.c.b16 %v715, %v707
    %v820 = vpack.c.b16 %v716, %v708
    %v821 = vpack.c.b16 %v717, %v709
    %v822 = vpack.c.b16 %v726, %v718
    %v823 = vpack.c.b16 %v727, %v719
    %v824 = vpack.c.b16 %v728, %v720
    %v825 = vpack.c.b16 %v729, %v721
    %v826 = vpack.c.b16 %v730, %v722
    %v827 = vpack.c.b16 %v731, %v723
    %v828 = vpack.c.b16 %v732, %v724
    %v829 = vpack.c.b16 %v733, %v725
    %v830 = vpack.c.b16 %v742, %v734
    %v831 = vpack.c.b16 %v743, %v735
    %v832 = vpack.c.b16 %v744, %v736
    %v833 = vpack.c.b16 %v745, %v737
    %v834 = vpack.c.b16 %v746, %v738
    %v835 = vpack.c.b16 %v747, %v739
    %v836 = vpack.c.b16 %v748, %v740
    %v837 = vpack.c.b16 %v749, %v741
    %v838 = vpack.c.b16 %v758, %v750
    %v839 = vpack.c.b16 %v759, %v751
    %v840 = vpack.c.b16 %v760, %v752
    %v841 = vpack.c.b16 %v761, %v753
    %v842 = vpack.c.b16 %v762, %v754
    %v843 = vpack.c.b16 %v763, %v755
    %v844 = vpack.c.b16 %v764, %v756
    %v845 = vpack.c.b16 %v765, %v757
    %v846 = vpack.c.b16 %v774, %v766
    %v847 = vpack.c.b16 %v775, %v767
    %v848 = vpack.c.b16 %v776, %v768
    %v849 = vpack.c.b16 %v777, %v769
    %v850 = vpack.c.b16 %v778, %v770
    %v851 = vpack.c.b16 %v779, %v771
    %v852 = vpack.c.b16 %v780, %v772
    %v853 = vpack.c.b16 %v781, %v773
    %v854 = vpack.c.b16 %v790, %v782
    %v855 = vpack.c.b16 %v791, %v783
    %v856 = vpack.c.b16 %v792, %v784
    %v857 = vpack.c.b16 %v793, %v785
    %v858 = vpack.c.b16 %v794, %v786
    %v859 = vpack.c.b16 %v795, %v787
    %v860 = vpack.c.b16 %v796, %v788
    %v861 = vpack.c.b16 %v797, %v789
    %926 = vmatprep.subr.bf16.mxu0 %v799
    %927 = vmatpush1.bf16.msra.mxu0 %v798
    %928 = vmatprep.subr.bf16.mxu0 %v807
    %929 = vmatpush1.bf16.msra.mxu0 %v806
    %930 = vmatprep.subr.bf16.mxu0 %v815
    %931 = vmatpush1.bf16.msra.mxu0 %v814
    %932 = vmatprep.subr.bf16.mxu0 %v823
    %933 = vmatpush1.bf16.msra.mxu0 %v822
    %934 = vmatprep.subr.bf16.mxu0 %v831
    %935 = vmatpush1.bf16.msra.mxu0 %v830
    %936 = vmatprep.subr.bf16.mxu0 %v839
    %937 = vmatpush1.bf16.msra.mxu0 %v838
    %938 = vmatprep.subr.bf16.mxu0 %v847
    %939 = vmatpush1.bf16.msra.mxu0 %v846
    %940 = vmatprep.subr.bf16.mxu0 %v855
    %941 = vmatpush1.bf16.msra.mxu0 %v854
    %942 = vmatprep.subr.bf16.mxu0 0
    %943 = vmatpush1.bf16.msra.mxu0 0
    %944 = vmatprep.subr.bf16.mxu0 0
    %945 = vmatpush1.bf16.msra.mxu0 0
    %946 = vmatprep.subr.bf16.mxu0 0
    %947 = vmatpush1.bf16.msra.mxu0 0
    %948 = vmatprep.subr.bf16.mxu0 0
    %949 = vmatpush1.bf16.msra.mxu0 0
    %950 = vmatprep.subr.bf16.mxu0 0
    %951 = vmatpush1.bf16.msra.mxu0 0
    %952 = vmatprep.subr.bf16.mxu0 0
    %953 = vmatpush1.bf16.msra.mxu0 0
    %954 = vmatprep.subr.bf16.mxu0 0
    %955 = vmatpush1.bf16.msra.mxu0 0
    %956 = vmatprep.subr.bf16.mxu0 0
    %957 = vmatpush1.bf16.msra.mxu0 0
    %958 = vmatprep.mubr.bf16.mxu0 0
    %959 = vmatmul.mubr.bf16.gmra.mrb[0].mxu0 %v492
    %v960 = vpop.f32.mrb[0].mxu0
    %v961 = vadd.f32 %v569, %v960
    %v962 = vpop.f32.mrb[0].mxu0
    %v963 = vadd.f32 %v573, %v962
    %v964 = vpop.f32.mrb[0].mxu0
    %v965 = vadd.f32 %v569, %v964
    %v966 = vpop.f32.mrb[0].mxu0
    %v967 = vadd.f32 %v573, %v966
    %968 = vmatprep.mubr.bf16.mxu0 0
    %969 = vmatmul.mubr.bf16.gmra.mrb[0].mxu0 %v493
    %v970 = vpop.f32.mrb[0].mxu0
    %v971 = vadd.f32 %v569, %v970
    %v972 = vpop.f32.mrb[0].mxu0
    %v973 = vadd.f32 %v573, %v972
    %v974 = vpop.f32.mrb[0].mxu0
    %v975 = vadd.f32 %v569, %v974
    %v976 = vpop.f32.mrb[0].mxu0
    %v977 = vadd.f32 %v573, %v976
    %978 = vmatprep.mubr.bf16.mxu0 0
    %979 = vmatmul.mubr.bf16.gmra.mrb[0].mxu0 %v494
    %v980 = vpop.f32.mrb[0].mxu0
    %v981 = vadd.f32 %v569, %v980
    %v982 = vpop.f32.mrb[0].mxu0
    %v983 = vadd.f32 %v573, %v982
    %v984 = vpop.f32.mrb[0].mxu0
    %v985 = vadd.f32 %v569, %v984
    %v986 = vpop.f32.mrb[0].mxu0
    %v987 = vadd.f32 %v573, %v986
    %988 = vmatprep.mubr.bf16.mxu0 0
    %989 = vmatmul.mubr.bf16.gmra.mrb[0].mxu0 %v495
    %v990 = vpop.f32.mrb[0].mxu0
    %v991 = vadd.f32 %v569, %v990
    %v992 = vpop.f32.mrb[0].mxu0
    %v993 = vadd.f32 %v573, %v992
    %v994 = vpop.f32.mrb[0].mxu0
    %v995 = vadd.f32 %v569, %v994
    %v996 = vpop.f32.mrb[0].mxu0
    %v997 = vadd.f32 %v573, %v996
    %998 = vmatprep.mubr.bf16.mxu0 0
    %999 = vmatmul.mubr.bf16.gmra.mrb[0].mxu0 %v496
    %v1000 = vpop.f32.mrb[0].mxu0
    %v1001 = vadd.f32 %v569, %v1000
    %v1002 = vpop.f32.mrb[0].mxu0
    %v1003 = vadd.f32 %v573, %v1002
    %v1004 = vpop.f32.mrb[0].mxu0
    %v1005 = vadd.f32 %v569, %v1004
    %v1006 = vpop.f32.mrb[0].mxu0
    %v1007 = vadd.f32 %v573, %v1006
    %1008 = vmatprep.mubr.bf16.mxu0 0
    %1009 = vmatmul.mubr.bf16.gmra.mrb[0].mxu0 %v497
    %v1010 = vpop.f32.mrb[0].mxu0
    %v1011 = vadd.f32 %v569, %v1010
    %v1012 = vpop.f32.mrb[0].mxu0
    %v1013 = vadd.f32 %v573, %v1012
    %v1014 = vpop.f32.mrb[0].mxu0
    %v1015 = vadd.f32 %v569, %v1014
    %v1016 = vpop.f32.mrb[0].mxu0
    %v1017 = vadd.f32 %v573, %v1016
    %1018 = vmatprep.mubr.bf16.mxu0 0
    %1019 = vmatmul.mubr.bf16.gmra.mrb[0].mxu0 %v498
    %v1020 = vpop.f32.mrb[0].mxu0
    %v1021 = vadd.f32 %v569, %v1020
    %v1022 = vpop.f32.mrb[0].mxu0
    %v1023 = vadd.f32 %v573, %v1022
    %v1024 = vpop.f32.mrb[0].mxu0
    %v1025 = vadd.f32 %v569, %v1024
    %v1026 = vpop.f32.mrb[0].mxu0
    %v1027 = vadd.f32 %v573, %v1026
    %1028 = vmatprep.mubr.bf16.mxu0 0
    %1029 = vmatmul.mubr.bf16.gmra.mrb[0].mxu0 %v499
    %v1030 = vpop.f32.mrb[0].mxu0
    %v1031 = vadd.f32 %v569, %v1030
    %v1032 = vpop.f32.mrb[0].mxu0
    %v1033 = vadd.f32 %v573, %v1032
    %v1034 = vpop.f32.mrb[0].mxu0
    %v1035 = vadd.f32 %v569, %v1034
    %v1036 = vpop.f32.mrb[0].mxu0
    %v1037 = vadd.f32 %v573, %v1036
    %1038 = vdwg.mxu0
    %1039 = vmatprep.subr.bf16.mxu0 %v801
    %1040 = vmatpush1.bf16.msra.mxu0 %v800
    %1041 = vmatprep.subr.bf16.mxu0 %v809
    %1042 = vmatpush1.bf16.msra.mxu0 %v808
    %1043 = vmatprep.subr.bf16.mxu0 %v817
    %1044 = vmatpush1.bf16.msra.mxu0 %v816
    %1045 = vmatprep.subr.bf16.mxu0 %v825
    %1046 = vmatpush1.bf16.msra.mxu0 %v824
    %1047 = vmatprep.subr.bf16.mxu0 %v833
    %1048 = vmatpush1.bf16.msra.mxu0 %v832
    %1049 = vmatprep.subr.bf16.mxu0 %v841
    %1050 = vmatpush1.bf16.msra.mxu0 %v840
    %1051 = vmatprep.subr.bf16.mxu0 %v849
    %1052 = vmatpush1.bf16.msra.mxu0 %v848
    %1053 = vmatprep.subr.bf16.mxu0 %v857
    %1054 = vmatpush1.bf16.msra.mxu0 %v856
    %1055 = vmatprep.subr.bf16.mxu0 0
    %1056 = vmatpush1.bf16.msra.mxu0 0
    %1057 = vmatprep.subr.bf16.mxu0 0
    %1058 = vmatpush1.bf16.msra.mxu0 0
    %1059 = vmatprep.subr.bf16.mxu0 0
    %1060 = vmatpush1.bf16.msra.mxu0 0
    %1061 = vmatprep.subr.bf16.mxu0 0
    %1062 = vmatpush1.bf16.msra.mxu0 0
    %1063 = vmatprep.subr.bf16.mxu0 0
    %1064 = vmatpush1.bf16.msra.mxu0 0
    %1065 = vmatprep.subr.bf16.mxu0 0
    %1066 = vmatpush1.bf16.msra.mxu0 0
    %1067 = vmatprep.subr.bf16.mxu0 0
    %1068 = vmatpush1.bf16.msra.mxu0 0
    %1069 = vmatprep.subr.bf16.mxu0 0
    %1070 = vmatpush1.bf16.msra.mxu0 0
    %1071 = vmatprep.mubr.bf16.mxu0 0
    %1072 = vmatmul.mubr.bf16.gmra.mrb[0].mxu0 %v492
    %v1073 = vpop.f32.mrb[0].mxu0
    %v1074 = vadd.f32 %v577, %v1073
    %v1075 = vpop.f32.mrb[0].mxu0
    %v1076 = vadd.f32 %v581, %v1075
    %v1077 = vpop.f32.mrb[0].mxu0
    %v1078 = vadd.f32 %v577, %v1077
    %v1079 = vpop.f32.mrb[0].mxu0
    %v1080 = vadd.f32 %v581, %v1079
    %1081 = vmatprep.mubr.bf16.mxu0 0
    %1082 = vmatmul.mubr.bf16.gmra.mrb[0].mxu0 %v493
    %v1083 = vpop.f32.mrb[0].mxu0
    %v1084 = vadd.f32 %v577, %v1083
    %v1085 = vpop.f32.mrb[0].mxu0
    %v1086 = vadd.f32 %v581, %v1085
    %v1087 = vpop.f32.mrb[0].mxu0
    %v1088 = vadd.f32 %v577, %v1087
    %v1089 = vpop.f32.mrb[0].mxu0
    %v1090 = vadd.f32 %v581, %v1089
    %1091 = vmatprep.mubr.bf16.mxu0 0
    %1092 = vmatmul.mubr.bf16.gmra.mrb[0].mxu0 %v494
    %v1093 = vpop.f32.mrb[0].mxu0
    %v1094 = vadd.f32 %v577, %v1093
    %v1095 = vpop.f32.mrb[0].mxu0
    %v1096 = vadd.f32 %v581, %v1095
    %v1097 = vpop.f32.mrb[0].mxu0
    %v1098 = vadd.f32 %v577, %v1097
    %v1099 = vpop.f32.mrb[0].mxu0
    %v1100 = vadd.f32 %v581, %v1099
    %1101 = vmatprep.mubr.bf16.mxu0 0
    %1102 = vmatmul.mubr.bf16.gmra.mrb[0].mxu0 %v495
    %v1103 = vpop.f32.mrb[0].mxu0
    %v1104 = vadd.f32 %v577, %v1103
    %v1105 = vpop.f32.mrb[0].mxu0
    %v1106 = vadd.f32 %v581, %v1105
    %v1107 = vpop.f32.mrb[0].mxu0
    %v1108 = vadd.f32 %v577, %v1107
    %v1109 = vpop.f32.mrb[0].mxu0
    %v1110 = vadd.f32 %v581, %v1109
    %1111 = vmatprep.mubr.bf16.mxu0 0
    %1112 = vmatmul.mubr.bf16.gmra.mrb[0].mxu0 %v496
    %v1113 = vpop.f32.mrb[0].mxu0
    %v1114 = vadd.f32 %v577, %v1113
    %v1115 = vpop.f32.mrb[0].mxu0
    %v1116 = vadd.f32 %v581, %v1115
    %v1117 = vpop.f32.mrb[0].mxu0
    %v1118 = vadd.f32 %v577, %v1117
    %v1119 = vpop.f32.mrb[0].mxu0
    %v1120 = vadd.f32 %v581, %v1119
    %1121 = vmatprep.mubr.bf16.mxu0 0
    %1122 = vmatmul.mubr.bf16.gmra.mrb[0].mxu0 %v497
    %v1123 = vpop.f32.mrb[0].mxu0
    %v1124 = vadd.f32 %v577, %v1123
    %v1125 = vpop.f32.mrb[0].mxu0
    %v1126 = vadd.f32 %v581, %v1125
    %v1127 = vpop.f32.mrb[0].mxu0
    %v1128 = vadd.f32 %v577, %v1127
    %v1129 = vpop.f32.mrb[0].mxu0
    %v1130 = vadd.f32 %v581, %v1129
    %1131 = vmatprep.mubr.bf16.mxu0 0
    %1132 = vmatmul.mubr.bf16.gmra.mrb[0].mxu0 %v498
    %v1133 = vpop.f32.mrb[0].mxu0
    %v1134 = vadd.f32 %v577, %v1133
    %v1135 = vpop.f32.mrb[0].mxu0
    %v1136 = vadd.f32 %v581, %v1135
    %v1137 = vpop.f32.mrb[0].mxu0
    %v1138 = vadd.f32 %v577, %v1137
    %v1139 = vpop.f32.mrb[0].mxu0
    %v1140 = vadd.f32 %v581, %v1139
    %1141 = vmatprep.mubr.bf16.mxu0 0
    %1142 = vmatmul.mubr.bf16.gmra.mrb[0].mxu0 %v499
    %v1143 = vpop.f32.mrb[0].mxu0
    %v1144 = vadd.f32 %v577, %v1143
    %v1145 = vpop.f32.mrb[0].mxu0
    %v1146 = vadd.f32 %v581, %v1145
    %v1147 = vpop.f32.mrb[0].mxu0
    %v1148 = vadd.f32 %v577, %v1147
    %v1149 = vpop.f32.mrb[0].mxu0
    %v1150 = vadd.f32 %v581, %v1149
    %1151 = vdwg.mxu0
    %1152 = vmatprep.subr.bf16.mxu0 %v803
    %1153 = vmatpush1.bf16.msra.mxu0 %v802
    %1154 = vmatprep.subr.bf16.mxu0 %v811
    %1155 = vmatpush1.bf16.msra.mxu0 %v810
    %1156 = vmatprep.subr.bf16.mxu0 %v819
    %1157 = vmatpush1.bf16.msra.mxu0 %v818
    %1158 = vmatprep.subr.bf16.mxu0 %v827
    %1159 = vmatpush1.bf16.msra.mxu0 %v826
    %1160 = vmatprep.subr.bf16.mxu0 %v835
    %1161 = vmatpush1.bf16.msra.mxu0 %v834
    %1162 = vmatprep.subr.bf16.mxu0 %v843
    %1163 = vmatpush1.bf16.msra.mxu0 %v842
    %1164 = vmatprep.subr.bf16.mxu0 %v851
    %1165 = vmatpush1.bf16.msra.mxu0 %v850
    %1166 = vmatprep.subr.bf16.mxu0 %v859
    %1167 = vmatpush1.bf16.msra.mxu0 %v858
    %1168 = vmatprep.subr.bf16.mxu0 0
    %1169 = vmatpush1.bf16.msra.mxu0 0
    %1170 = vmatprep.subr.bf16.mxu0 0
    %1171 = vmatpush1.bf16.msra.mxu0 0
    %1172 = vmatprep.subr.bf16.mxu0 0
    %1173 = vmatpush1.bf16.msra.mxu0 0
    %1174 = vmatprep.subr.bf16.mxu0 0
    %1175 = vmatpush1.bf16.msra.mxu0 0
    %1176 = vmatprep.subr.bf16.mxu0 0
    %1177 = vmatpush1.bf16.msra.mxu0 0
    %1178 = vmatprep.subr.bf16.mxu0 0
    %1179 = vmatpush1.bf16.msra.mxu0 0
    %1180 = vmatprep.subr.bf16.mxu0 0
    %1181 = vmatpush1.bf16.msra.mxu0 0
    %1182 = vmatprep.subr.bf16.mxu0 0
    %1183 = vmatpush1.bf16.msra.mxu0 0
    %1184 = vmatprep.mubr.bf16.mxu0 0
    %1185 = vmatmul.mubr.bf16.gmra.mrb[0].mxu0 %v492
    %v1186 = vpop.f32.mrb[0].mxu0
    %v1187 = vadd.f32 %v585, %v1186
    %v1188 = vpop.f32.mrb[0].mxu0
    %v1189 = vadd.f32 %v589, %v1188
    %v1190 = vpop.f32.mrb[0].mxu0
    %v1191 = vadd.f32 %v585, %v1190
    %v1192 = vpop.f32.mrb[0].mxu0
    %v1193 = vadd.f32 %v589, %v1192
    %1194 = vmatprep.mubr.bf16.mxu0 0
    %1195 = vmatmul.mubr.bf16.gmra.mrb[0].mxu0 %v493
    %v1196 = vpop.f32.mrb[0].mxu0
    %v1197 = vadd.f32 %v585, %v1196
    %v1198 = vpop.f32.mrb[0].mxu0
    %v1199 = vadd.f32 %v589, %v1198
    %v1200 = vpop.f32.mrb[0].mxu0
    %v1201 = vadd.f32 %v585, %v1200
    %v1202 = vpop.f32.mrb[0].mxu0
    %v1203 = vadd.f32 %v589, %v1202
    %1204 = vmatprep.mubr.bf16.mxu0 0
    %1205 = vmatmul.mubr.bf16.gmra.mrb[0].mxu0 %v494
    %v1206 = vpop.f32.mrb[0].mxu0
    %v1207 = vadd.f32 %v585, %v1206
    %v1208 = vpop.f32.mrb[0].mxu0
    %v1209 = vadd.f32 %v589, %v1208
    %v1210 = vpop.f32.mrb[0].mxu0
    %v1211 = vadd.f32 %v585, %v1210
    %v1212 = vpop.f32.mrb[0].mxu0
    %v1213 = vadd.f32 %v589, %v1212
    %1214 = vmatprep.mubr.bf16.mxu0 0
    %1215 = vmatmul.mubr.bf16.gmra.mrb[0].mxu0 %v495
    %v1216 = vpop.f32.mrb[0].mxu0
    %v1217 = vadd.f32 %v585, %v1216
    %v1218 = vpop.f32.mrb[0].mxu0
    %v1219 = vadd.f32 %v589, %v1218
    %v1220 = vpop.f32.mrb[0].mxu0
    %v1221 = vadd.f32 %v585, %v1220
    %v1222 = vpop.f32.mrb[0].mxu0
    %v1223 = vadd.f32 %v589, %v1222
    %1224 = vmatprep.mubr.bf16.mxu0 0
    %1225 = vmatmul.mubr.bf16.gmra.mrb[0].mxu0 %v496
    %v1226 = vpop.f32.mrb[0].mxu0
    %v1227 = vadd.f32 %v585, %v1226
    %v1228 = vpop.f32.mrb[0].mxu0
    %v1229 = vadd.f32 %v589, %v1228
    %v1230 = vpop.f32.mrb[0].mxu0
    %v1231 = vadd.f32 %v585, %v1230
    %v1232 = vpop.f32.mrb[0].mxu0
    %v1233 = vadd.f32 %v589, %v1232
    %1234 = vmatprep.mubr.bf16.mxu0 0
    %1235 = vmatmul.mubr.bf16.gmra.mrb[0].mxu0 %v497
    %v1236 = vpop.f32.mrb[0].mxu0
    %v1237 = vadd.f32 %v585, %v1236
    %v1238 = vpop.f32.mrb[0].mxu0
    %v1239 = vadd.f32 %v589, %v1238
    %v1240 = vpop.f32.mrb[0].mxu0
    %v1241 = vadd.f32 %v585, %v1240
    %v1242 = vpop.f32.mrb[0].mxu0
    %v1243 = vadd.f32 %v589, %v1242
    %1244 = vmatprep.mubr.bf16.mxu0 0
    %1245 = vmatmul.mubr.bf16.gmra.mrb[0].mxu0 %v498
    %v1246 = vpop.f32.mrb[0].mxu0
    %v1247 = vadd.f32 %v585, %v1246
    %v1248 = vpop.f32.mrb[0].mxu0
    %v1249 = vadd.f32 %v589, %v1248
    %v1250 = vpop.f32.mrb[0].mxu0
    %v1251 = vadd.f32 %v585, %v1250
    %v1252 = vpop.f32.mrb[0].mxu0
    %v1253 = vadd.f32 %v589, %v1252
    %1254 = vmatprep.mubr.bf16.mxu0 0
    %1255 = vmatmul.mubr.bf16.gmra.mrb[0].mxu0 %v499
    %v1256 = vpop.f32.mrb[0].mxu0
    %v1257 = vadd.f32 %v585, %v1256
    %v1258 = vpop.f32.mrb[0].mxu0
    %v1259 = vadd.f32 %v589, %v1258
    %v1260 = vpop.f32.mrb[0].mxu0
    %v1261 = vadd.f32 %v585, %v1260
    %v1262 = vpop.f32.mrb[0].mxu0
    %v1263 = vadd.f32 %v589, %v1262
    %1264 = vdwg.mxu0
    %1265 = vmatprep.subr.bf16.mxu0 %v805
    %1266 = vmatpush1.bf16.msra.mxu0 %v804
    %1267 = vmatprep.subr.bf16.mxu0 %v813
    %1268 = vmatpush1.bf16.msra.mxu0 %v812
    %1269 = vmatprep.subr.bf16.mxu0 %v821
    %1270 = vmatpush1.bf16.msra.mxu0 %v820
    %1271 = vmatprep.subr.bf16.mxu0 %v829
    %1272 = vmatpush1.bf16.msra.mxu0 %v828
    %1273 = vmatprep.subr.bf16.mxu0 %v837
    %1274 = vmatpush1.bf16.msra.mxu0 %v836
    %1275 = vmatprep.subr.bf16.mxu0 %v845
    %1276 = vmatpush1.bf16.msra.mxu0 %v844
    %1277 = vmatprep.subr.bf16.mxu0 %v853
    %1278 = vmatpush1.bf16.msra.mxu0 %v852
    %1279 = vmatprep.subr.bf16.mxu0 %v861
    %1280 = vmatpush1.bf16.msra.mxu0 %v860
    %1281 = vmatprep.subr.bf16.mxu0 0
    %1282 = vmatpush1.bf16.msra.mxu0 0
    %1283 = vmatprep.subr.bf16.mxu0 0
    %1284 = vmatpush1.bf16.msra.mxu0 0
    %1285 = vmatprep.subr.bf16.mxu0 0
    %1286 = vmatpush1.bf16.msra.mxu0 0
    %1287 = vmatprep.subr.bf16.mxu0 0
    %1288 = vmatpush1.bf16.msra.mxu0 0
    %1289 = vmatprep.subr.bf16.mxu0 0
    %1290 = vmatpush1.bf16.msra.mxu0 0
    %1291 = vmatprep.subr.bf16.mxu0 0
    %1292 = vmatpush1.bf16.msra.mxu0 0
    %1293 = vmatprep.subr.bf16.mxu0 0
    %1294 = vmatpush1.bf16.msra.mxu0 0
    %1295 = vmatprep.subr.bf16.mxu0 0
    %1296 = vmatpush1.bf16.msra.mxu0 0
    %1297 = vmatprep.mubr.bf16.mxu0 0
    %1298 = vmatmul.mubr.bf16.gmra.mrb[0].mxu0 %v492
    %v1299 = vpop.f32.mrb[0].mxu0
    %v1300 = vadd.f32 %v593, %v1299
    %v1301 = vpop.f32.mrb[0].mxu0
    %v1302 = vadd.f32 %v597, %v1301
    %v1303 = vpop.f32.mrb[0].mxu0
    %v1304 = vadd.f32 %v593, %v1303
    %v1305 = vpop.f32.mrb[0].mxu0
    %v1306 = vadd.f32 %v597, %v1305
    %1307 = vmatprep.mubr.bf16.mxu0 0
    %1308 = vmatmul.mubr.bf16.gmra.mrb[0].mxu0 %v493
    %v1309 = vpop.f32.mrb[0].mxu0
    %v1310 = vadd.f32 %v593, %v1309
    %v1311 = vpop.f32.mrb[0].mxu0
    %v1312 = vadd.f32 %v597, %v1311
    %v1313 = vpop.f32.mrb[0].mxu0
    %v1314 = vadd.f32 %v593, %v1313
    %v1315 = vpop.f32.mrb[0].mxu0
    %v1316 = vadd.f32 %v597, %v1315
    %1317 = vmatprep.mubr.bf16.mxu0 0
    %1318 = vmatmul.mubr.bf16.gmra.mrb[0].mxu0 %v494
    %v1319 = vpop.f32.mrb[0].mxu0
    %v1320 = vadd.f32 %v593, %v1319
    %v1321 = vpop.f32.mrb[0].mxu0
    %v1322 = vadd.f32 %v597, %v1321
    %v1323 = vpop.f32.mrb[0].mxu0
    %v1324 = vadd.f32 %v593, %v1323
    %v1325 = vpop.f32.mrb[0].mxu0
    %v1326 = vadd.f32 %v597, %v1325
    %1327 = vmatprep.mubr.bf16.mxu0 0
    %1328 = vmatmul.mubr.bf16.gmra.mrb[0].mxu0 %v495
    %v1329 = vpop.f32.mrb[0].mxu0
    %v1330 = vadd.f32 %v593, %v1329
    %v1331 = vpop.f32.mrb[0].mxu0
    %v1332 = vadd.f32 %v597, %v1331
    %v1333 = vpop.f32.mrb[0].mxu0
    %v1334 = vadd.f32 %v593, %v1333
    %v1335 = vpop.f32.mrb[0].mxu0
    %v1336 = vadd.f32 %v597, %v1335
    %1337 = vmatprep.mubr.bf16.mxu0 0
    %1338 = vmatmul.mubr.bf16.gmra.mrb[0].mxu0 %v496
    %v1339 = vpop.f32.mrb[0].mxu0
    %v1340 = vadd.f32 %v593, %v1339
    %v1341 = vpop.f32.mrb[0].mxu0
    %v1342 = vadd.f32 %v597, %v1341
    %v1343 = vpop.f32.mrb[0].mxu0
    %v1344 = vadd.f32 %v593, %v1343
    %v1345 = vpop.f32.mrb[0].mxu0
    %v1346 = vadd.f32 %v597, %v1345
    %1347 = vmatprep.mubr.bf16.mxu0 0
    %1348 = vmatmul.mubr.bf16.gmra.mrb[0].mxu0 %v497
    %v1349 = vpop.f32.mrb[0].mxu0
    %v1350 = vadd.f32 %v593, %v1349
    %v1351 = vpop.f32.mrb[0].mxu0
    %v1352 = vadd.f32 %v597, %v1351
    %v1353 = vpop.f32.mrb[0].mxu0
    %v1354 = vadd.f32 %v593, %v1353
    %v1355 = vpop.f32.mrb[0].mxu0
    %v1356 = vadd.f32 %v597, %v1355
    %1357 = vmatprep.mubr.bf16.mxu0 0
    %1358 = vmatmul.mubr.bf16.gmra.mrb[0].mxu0 %v498
    %v1359 = vpop.f32.mrb[0].mxu0
    %v1360 = vadd.f32 %v593, %v1359
    %v1361 = vpop.f32.mrb[0].mxu0
    %v1362 = vadd.f32 %v597, %v1361
    %v1363 = vpop.f32.mrb[0].mxu0
    %v1364 = vadd.f32 %v593, %v1363
    %v1365 = vpop.f32.mrb[0].mxu0
    %v1366 = vadd.f32 %v597, %v1365
    %1367 = vmatprep.mubr.bf16.mxu0 0
    %1368 = vmatmul.mubr.bf16.gmra.mrb[0].mxu0 %v499
    %v1369 = vpop.f32.mrb[0].mxu0
    %v1370 = vadd.f32 %v593, %v1369
    %v1371 = vpop.f32.mrb[0].mxu0
    %v1372 = vadd.f32 %v597, %v1371
    %v1373 = vpop.f32.mrb[0].mxu0
    %v1374 = vadd.f32 %v593, %v1373
    %v1375 = vpop.f32.mrb[0].mxu0
    %v1376 = vadd.f32 %v597, %v1375
    %1377 = vdwg.mxu0
    %v1378 = vmax.f32 %v961, 0.0
    %v1379 = vmax.f32 %v963, 0.0
    %v1380 = vmax.f32 %v1074, 0.0
    %v1381 = vmax.f32 %v1076, 0.0
    %v1382 = vmax.f32 %v1187, 0.0
    %v1383 = vmax.f32 %v1189, 0.0
    %v1384 = vmax.f32 %v1300, 0.0
    %v1385 = vmax.f32 %v1302, 0.0
    %v1386 = vmax.f32 %v965, 0.0
    %v1387 = vmax.f32 %v967, 0.0
    %v1388 = vmax.f32 %v1078, 0.0
    %v1389 = vmax.f32 %v1080, 0.0
    %v1390 = vmax.f32 %v1191, 0.0
    %v1391 = vmax.f32 %v1193, 0.0
    %v1392 = vmax.f32 %v1304, 0.0
    %v1393 = vmax.f32 %v1306, 0.0
    %v1394 = vmax.f32 %v971, 0.0
    %v1395 = vmax.f32 %v973, 0.0
    %v1396 = vmax.f32 %v1084, 0.0
    %v1397 = vmax.f32 %v1086, 0.0
    %v1398 = vmax.f32 %v1197, 0.0
    %v1399 = vmax.f32 %v1199, 0.0
    %v1400 = vmax.f32 %v1310, 0.0
    %v1401 = vmax.f32 %v1312, 0.0
    %v1402 = vmax.f32 %v975, 0.0
    %v1403 = vmax.f32 %v977, 0.0
    %v1404 = vmax.f32 %v1088, 0.0
    %v1405 = vmax.f32 %v1090, 0.0
    %v1406 = vmax.f32 %v1201, 0.0
    %v1407 = vmax.f32 %v1203, 0.0
    %v1408 = vmax.f32 %v1314, 0.0
    %v1409 = vmax.f32 %v1316, 0.0
    %v1410 = vmax.f32 %v981, 0.0
    %v1411 = vmax.f32 %v983, 0.0
    %v1412 = vmax.f32 %v1094, 0.0
    %v1413 = vmax.f32 %v1096, 0.0
    %v1414 = vmax.f32 %v1207, 0.0
    %v1415 = vmax.f32 %v1209, 0.0
    %v1416 = vmax.f32 %v1320, 0.0
    %v1417 = vmax.f32 %v1322, 0.0
    %v1418 = vmax.f32 %v985, 0.0
    %v1419 = vmax.f32 %v987, 0.0
    %v1420 = vmax.f32 %v1098, 0.0
    %v1421 = vmax.f32 %v1100, 0.0
    %v1422 = vmax.f32 %v1211, 0.0
    %v1423 = vmax.f32 %v1213, 0.0
    %v1424 = vmax.f32 %v1324, 0.0
    %v1425 = vmax.f32 %v1326, 0.0
    %v1426 = vmax.f32 %v991, 0.0
    %v1427 = vmax.f32 %v993, 0.0
    %v1428 = vmax.f32 %v1104, 0.0
    %v1429 = vmax.f32 %v1106, 0.0
    %v1430 = vmax.f32 %v1217, 0.0
    %v1431 = vmax.f32 %v1219, 0.0
    %v1432 = vmax.f32 %v1330, 0.0
    %v1433 = vmax.f32 %v1332, 0.0
    %v1434 = vmax.f32 %v995, 0.0
    %v1435 = vmax.f32 %v997, 0.0
    %v1436 = vmax.f32 %v1108, 0.0
    %v1437 = vmax.f32 %v1110, 0.0
    %v1438 = vmax.f32 %v1221, 0.0
    %v1439 = vmax.f32 %v1223, 0.0
    %v1440 = vmax.f32 %v1334, 0.0
    %v1441 = vmax.f32 %v1336, 0.0
    %v1442 = vmax.f32 %v1001, 0.0
    %v1443 = vmax.f32 %v1003, 0.0
    %v1444 = vmax.f32 %v1114, 0.0
    %v1445 = vmax.f32 %v1116, 0.0
    %v1446 = vmax.f32 %v1227, 0.0
    %v1447 = vmax.f32 %v1229, 0.0
    %v1448 = vmax.f32 %v1340, 0.0
    %v1449 = vmax.f32 %v1342, 0.0
    %v1450 = vmax.f32 %v1005, 0.0
    %v1451 = vmax.f32 %v1007, 0.0
    %v1452 = vmax.f32 %v1118, 0.0
    %v1453 = vmax.f32 %v1120, 0.0
    %v1454 = vmax.f32 %v1231, 0.0
    %v1455 = vmax.f32 %v1233, 0.0
    %v1456 = vmax.f32 %v1344, 0.0
    %v1457 = vmax.f32 %v1346, 0.0
    %v1458 = vmax.f32 %v1011, 0.0
    %v1459 = vmax.f32 %v1013, 0.0
    %v1460 = vmax.f32 %v1124, 0.0
    %v1461 = vmax.f32 %v1126, 0.0
    %v1462 = vmax.f32 %v1237, 0.0
    %v1463 = vmax.f32 %v1239, 0.0
    %v1464 = vmax.f32 %v1350, 0.0
    %v1465 = vmax.f32 %v1352, 0.0
    %v1466 = vmax.f32 %v1015, 0.0
    %v1467 = vmax.f32 %v1017, 0.0
    %v1468 = vmax.f32 %v1128, 0.0
    %v1469 = vmax.f32 %v1130, 0.0
    %v1470 = vmax.f32 %v1241, 0.0
    %v1471 = vmax.f32 %v1243, 0.0
    %v1472 = vmax.f32 %v1354, 0.0
    %v1473 = vmax.f32 %v1356, 0.0
    %v1474 = vmax.f32 %v1021, 0.0
    %v1475 = vmax.f32 %v1023, 0.0
    %v1476 = vmax.f32 %v1134, 0.0
    %v1477 = vmax.f32 %v1136, 0.0
    %v1478 = vmax.f32 %v1247, 0.0
    %v1479 = vmax.f32 %v1249, 0.0
    %v1480 = vmax.f32 %v1360, 0.0
    %v1481 = vmax.f32 %v1362, 0.0
    %v1482 = vmax.f32 %v1025, 0.0
    %v1483 = vmax.f32 %v1027, 0.0
    %v1484 = vmax.f32 %v1138, 0.0
    %v1485 = vmax.f32 %v1140, 0.0
    %v1486 = vmax.f32 %v1251, 0.0
    %v1487 = vmax.f32 %v1253, 0.0
    %v1488 = vmax.f32 %v1364, 0.0
    %v1489 = vmax.f32 %v1366, 0.0
    %v1490 = vmax.f32 %v1031, 0.0
    %v1491 = vmax.f32 %v1033, 0.0
    %v1492 = vmax.f32 %v1144, 0.0
    %v1493 = vmax.f32 %v1146, 0.0
    %v1494 = vmax.f32 %v1257, 0.0
    %v1495 = vmax.f32 %v1259, 0.0
    %v1496 = vmax.f32 %v1370, 0.0
    %v1497 = vmax.f32 %v1372, 0.0
    %v1498 = vmax.f32 %v1035, 0.0
    %v1499 = vmax.f32 %v1037, 0.0
    %v1500 = vmax.f32 %v1148, 0.0
    %v1501 = vmax.f32 %v1150, 0.0
    %v1502 = vmax.f32 %v1261, 0.0
    %v1503 = vmax.f32 %v1263, 0.0
    %v1504 = vmax.f32 %v1374, 0.0
    %v1505 = vmax.f32 %v1376, 0.0
    %v1506 = vmax.f32 %v1378, %v1386
    %v1507 = vmax.f32 %v1506, %v1394
    %v1508 = vmax.f32 %v1507, %v1402
    %v1509 = vmax.f32 %v1508, %v1410
    %v1510 = vmax.f32 %v1509, %v1418
    %v1511 = vmax.f32 %v1510, %v1426
    %v1512 = vmax.f32 %v1511, %v1434
    %v1513 = vrot.slane %v1512, 4
    %v1514 = vmax.f32 %v1512, %v1513
    %v1515 = vrot.slane %v1514, 2
    %v1516 = vmax.f32 %v1514, %v1515
    %v1517 = vrot.slane %v1516, 1
    %v1518 = vmax.f32 %v1516, %v1517
    %v1519 = vmax.f32 %v1379, %v1387
    %v1520 = vmax.f32 %v1519, %v1395
    %v1521 = vmax.f32 %v1520, %v1403
    %v1522 = vmax.f32 %v1521, %v1411
    %v1523 = vmax.f32 %v1522, %v1419
    %v1524 = vmax.f32 %v1523, %v1427
    %v1525 = vmax.f32 %v1524, %v1435
    %v1526 = vrot.slane %v1525, 4
    %v1527 = vmax.f32 %v1525, %v1526
    %v1528 = vrot.slane %v1527, 2
    %v1529 = vmax.f32 %v1527, %v1528
    %v1530 = vrot.slane %v1529, 1
    %v1531 = vmax.f32 %v1529, %v1530
    %v1532 = vmax.f32 %v1380, %v1388
    %v1533 = vmax.f32 %v1532, %v1396
    %v1534 = vmax.f32 %v1533, %v1404
    %v1535 = vmax.f32 %v1534, %v1412
    %v1536 = vmax.f32 %v1535, %v1420
    %v1537 = vmax.f32 %v1536, %v1428
    %v1538 = vmax.f32 %v1537, %v1436
    %v1539 = vrot.slane %v1538, 4
    %v1540 = vmax.f32 %v1538, %v1539
    %v1541 = vrot.slane %v1540, 2
    %v1542 = vmax.f32 %v1540, %v1541
    %v1543 = vrot.slane %v1542, 1
    %v1544 = vmax.f32 %v1542, %v1543
    %v1545 = vmax.f32 %v1381, %v1389
    %v1546 = vmax.f32 %v1545, %v1397
    %v1547 = vmax.f32 %v1546, %v1405
    %v1548 = vmax.f32 %v1547, %v1413
    %v1549 = vmax.f32 %v1548, %v1421
    %v1550 = vmax.f32 %v1549, %v1429
    %v1551 = vmax.f32 %v1550, %v1437
    %v1552 = vrot.slane %v1551, 4
    %v1553 = vmax.f32 %v1551, %v1552
    %v1554 = vrot.slane %v1553, 2
    %v1555 = vmax.f32 %v1553, %v1554
    %v1556 = vrot.slane %v1555, 1
    %v1557 = vmax.f32 %v1555, %v1556
    %v1558 = vmax.f32 %v1382, %v1390
    %v1559 = vmax.f32 %v1558, %v1398
    %v1560 = vmax.f32 %v1559, %v1406
    %v1561 = vmax.f32 %v1560, %v1414
    %v1562 = vmax.f32 %v1561, %v1422
    %v1563 = vmax.f32 %v1562, %v1430
    %v1564 = vmax.f32 %v1563, %v1438
    %v1565 = vrot.slane %v1564, 4
    %v1566 = vmax.f32 %v1564, %v1565
    %v1567 = vrot.slane %v1566, 2
    %v1568 = vmax.f32 %v1566, %v1567
    %v1569 = vrot.slane %v1568, 1
    %v1570 = vmax.f32 %v1568, %v1569
    %v1571 = vmax.f32 %v1383, %v1391
    %v1572 = vmax.f32 %v1571, %v1399
    %v1573 = vmax.f32 %v1572, %v1407
    %v1574 = vmax.f32 %v1573, %v1415
    %v1575 = vmax.f32 %v1574, %v1423
    %v1576 = vmax.f32 %v1575, %v1431
    %v1577 = vmax.f32 %v1576, %v1439
    %v1578 = vrot.slane %v1577, 4
    %v1579 = vmax.f32 %v1577, %v1578
    %v1580 = vrot.slane %v1579, 2
    %v1581 = vmax.f32 %v1579, %v1580
    %v1582 = vrot.slane %v1581, 1
    %v1583 = vmax.f32 %v1581, %v1582
    %v1584 = vmax.f32 %v1384, %v1392
    %v1585 = vmax.f32 %v1584, %v1400
    %v1586 = vmax.f32 %v1585, %v1408
    %v1587 = vmax.f32 %v1586, %v1416
    %v1588 = vmax.f32 %v1587, %v1424
    %v1589 = vmax.f32 %v1588, %v1432
    %v1590 = vmax.f32 %v1589, %v1440
    %v1591 = vrot.slane %v1590, 4
    %v1592 = vmax.f32 %v1590, %v1591
    %v1593 = vrot.slane %v1592, 2
    %v1594 = vmax.f32 %v1592, %v1593
    %v1595 = vrot.slane %v1594, 1
    %v1596 = vmax.f32 %v1594, %v1595
    %v1597 = vmax.f32 %v1385, %v1393
    %v1598 = vmax.f32 %v1597, %v1401
    %v1599 = vmax.f32 %v1598, %v1409
    %v1600 = vmax.f32 %v1599, %v1417
    %v1601 = vmax.f32 %v1600, %v1425
    %v1602 = vmax.f32 %v1601, %v1433
    %v1603 = vmax.f32 %v1602, %v1441
    %v1604 = vrot.slane %v1603, 4
    %v1605 = vmax.f32 %v1603, %v1604
    %v1606 = vrot.slane %v1605, 2
    %v1607 = vmax.f32 %v1605, %v1606
    %v1608 = vrot.slane %v1607, 1
    %v1609 = vmax.f32 %v1607, %v1608
    %v1610 = vmax.f32 %v1442, %v1450
    %v1611 = vmax.f32 %v1610, %v1458
    %v1612 = vmax.f32 %v1611, %v1466
    %v1613 = vmax.f32 %v1612, %v1474
    %v1614 = vmax.f32 %v1613, %v1482
    %v1615 = vmax.f32 %v1614, %v1490
    %v1616 = vmax.f32 %v1615, %v1498
    %v1617 = vrot.slane %v1616, 4
    %v1618 = vmax.f32 %v1616, %v1617
    %v1619 = vrot.slane %v1618, 2
    %v1620 = vmax.f32 %v1618, %v1619
    %v1621 = vrot.slane %v1620, 1
    %v1622 = vmax.f32 %v1620, %v1621
    %v1623 = vmax.f32 %v1443, %v1451
    %v1624 = vmax.f32 %v1623, %v1459
    %v1625 = vmax.f32 %v1624, %v1467
    %v1626 = vmax.f32 %v1625, %v1475
    %v1627 = vmax.f32 %v1626, %v1483
    %v1628 = vmax.f32 %v1627, %v1491
    %v1629 = vmax.f32 %v1628, %v1499
    %v1630 = vrot.slane %v1629, 4
    %v1631 = vmax.f32 %v1629, %v1630
    %v1632 = vrot.slane %v1631, 2
    %v1633 = vmax.f32 %v1631, %v1632
    %v1634 = vrot.slane %v1633, 1
    %v1635 = vmax.f32 %v1633, %v1634
    %v1636 = vmax.f32 %v1444, %v1452
    %v1637 = vmax.f32 %v1636, %v1460
    %v1638 = vmax.f32 %v1637, %v1468
    %v1639 = vmax.f32 %v1638, %v1476
    %v1640 = vmax.f32 %v1639, %v1484
    %v1641 = vmax.f32 %v1640, %v1492
    %v1642 = vmax.f32 %v1641, %v1500
    %v1643 = vrot.slane %v1642, 4
    %v1644 = vmax.f32 %v1642, %v1643
    %v1645 = vrot.slane %v1644, 2
    %v1646 = vmax.f32 %v1644, %v1645
    %v1647 = vrot.slane %v1646, 1
    %v1648 = vmax.f32 %v1646, %v1647
    %v1649 = vmax.f32 %v1445, %v1453
    %v1650 = vmax.f32 %v1649, %v1461
    %v1651 = vmax.f32 %v1650, %v1469
    %v1652 = vmax.f32 %v1651, %v1477
    %v1653 = vmax.f32 %v1652, %v1485
    %v1654 = vmax.f32 %v1653, %v1493
    %v1655 = vmax.f32 %v1654, %v1501
    %v1656 = vrot.slane %v1655, 4
    %v1657 = vmax.f32 %v1655, %v1656
    %v1658 = vrot.slane %v1657, 2
    %v1659 = vmax.f32 %v1657, %v1658
    %v1660 = vrot.slane %v1659, 1
    %v1661 = vmax.f32 %v1659, %v1660
    %v1662 = vmax.f32 %v1446, %v1454
    %v1663 = vmax.f32 %v1662, %v1462
    %v1664 = vmax.f32 %v1663, %v1470
    %v1665 = vmax.f32 %v1664, %v1478
    %v1666 = vmax.f32 %v1665, %v1486
    %v1667 = vmax.f32 %v1666, %v1494
    %v1668 = vmax.f32 %v1667, %v1502
    %v1669 = vrot.slane %v1668, 4
    %v1670 = vmax.f32 %v1668, %v1669
    %v1671 = vrot.slane %v1670, 2
    %v1672 = vmax.f32 %v1670, %v1671
    %v1673 = vrot.slane %v1672, 1
    %v1674 = vmax.f32 %v1672, %v1673
    %v1675 = vmax.f32 %v1447, %v1455
    %v1676 = vmax.f32 %v1675, %v1463
    %v1677 = vmax.f32 %v1676, %v1471
    %v1678 = vmax.f32 %v1677, %v1479
    %v1679 = vmax.f32 %v1678, %v1487
    %v1680 = vmax.f32 %v1679, %v1495
    %v1681 = vmax.f32 %v1680, %v1503
    %v1682 = vrot.slane %v1681, 4
    %v1683 = vmax.f32 %v1681, %v1682
    %v1684 = vrot.slane %v1683, 2
    %v1685 = vmax.f32 %v1683, %v1684
    %v1686 = vrot.slane %v1685, 1
    %v1687 = vmax.f32 %v1685, %v1686
    %v1688 = vmax.f32 %v1448, %v1456
    %v1689 = vmax.f32 %v1688, %v1464
    %v1690 = vmax.f32 %v1689, %v1472
    %v1691 = vmax.f32 %v1690, %v1480
    %v1692 = vmax.f32 %v1691, %v1488
    %v1693 = vmax.f32 %v1692, %v1496
    %v1694 = vmax.f32 %v1693, %v1504
    %v1695 = vrot.slane %v1694, 4
    %v1696 = vmax.f32 %v1694, %v1695
    %v1697 = vrot.slane %v1696, 2
    %v1698 = vmax.f32 %v1696, %v1697
    %v1699 = vrot.slane %v1698, 1
    %v1700 = vmax.f32 %v1698, %v1699
    %v1701 = vmax.f32 %v1449, %v1457
    %v1702 = vmax.f32 %v1701, %v1465
    %v1703 = vmax.f32 %v1702, %v1473
    %v1704 = vmax.f32 %v1703, %v1481
    %v1705 = vmax.f32 %v1704, %v1489
    %v1706 = vmax.f32 %v1705, %v1497
    %v1707 = vmax.f32 %v1706, %v1505
    %v1708 = vrot.slane %v1707, 4
    %v1709 = vmax.f32 %v1707, %v1708
    %v1710 = vrot.slane %v1709, 2
    %v1711 = vmax.f32 %v1709, %v1710
    %v1712 = vrot.slane %v1711, 1
    %v1713 = vmax.f32 %v1711, %v1712
    %p1714 = scmp.eq.s32.totalorder 0, 0
    // Predicated region
    $region70: #{tpu_custom_call.1} parent=1 // pred_check
      %p1715 = pneg %p1714
    $region71: #{tpu_custom_call.1} parent=1 // pred_check_branch
      %1717 = sbr.rel (%p1715) target = $region73
    $region72: #{tpu_custom_call.1} parent=1 // pred_region
      %v1734 = vcombine.low %v1518, %v1531
      %v1735 = vcombine.low %v1544, %v1557
      %v1737 = vunpack.c.l.s4 1983009808
      %v1738 = vunpack.c.0.s8 %v1737
      %v1739 = vlaneseq
      %v1740 = vshrl.u32 %v1739, 7
      %v1741 = vsub.s32 %v1738, %v1740
      %v1742 = vrot.slane %v1734, %v1741
      %v1744 = vunpack.c.l.s4 1983009808
      %v1745 = vunpack.c.0.s8 %v1744
      %v1746 = vlaneseq
      %v1747 = vshrl.u32 %v1746, 7
      %v1748 = vsub.s32 %v1745, %v1747
      %v1749 = vrot.slane %v1735, %v1748
      %v1750 = vcombine.low %v1742, %v1749
      %v1751 = vcombine.low %v1570, %v1583
      %v1752 = vcombine.low %v1596, %v1609
      %v1754 = vunpack.c.l.s4 1983009808
      %v1755 = vunpack.c.0.s8 %v1754
      %v1756 = vlaneseq
      %v1757 = vshrl.u32 %v1756, 7
      %v1758 = vsub.s32 %v1755, %v1757
      %v1759 = vrot.slane %v1751, %v1758
      %v1761 = vunpack.c.l.s4 1983009808
      %v1762 = vunpack.c.0.s8 %v1761
      %v1763 = vlaneseq
      %v1764 = vshrl.u32 %v1763, 7
      %v1765 = vsub.s32 %v1762, %v1764
      %v1766 = vrot.slane %v1752, %v1765
      %v1767 = vcombine.low %v1759, %v1766
      %v1768 = vcombine.low %v1622, %v1635
      %v1769 = vcombine.low %v1648, %v1661
      %v1771 = vunpack.c.l.s4 1983009808
      %v1772 = vunpack.c.0.s8 %v1771
      %v1773 = vlaneseq
      %v1774 = vshrl.u32 %v1773, 7
      %v1775 = vsub.s32 %v1772, %v1774
      %v1776 = vrot.slane %v1768, %v1775
      %v1778 = vunpack.c.l.s4 1983009808
      %v1779 = vunpack.c.0.s8 %v1778
      %v1780 = vlaneseq
      %v1781 = vshrl.u32 %v1780, 7
      %v1782 = vsub.s32 %v1779, %v1781
      %v1783 = vrot.slane %v1769, %v1782
      %v1784 = vcombine.low %v1776, %v1783
      %v1785 = vcombine.low %v1674, %v1687
      %v1786 = vcombine.low %v1700, %v1713
      %v1788 = vunpack.c.l.s4 1983009808
      %v1789 = vunpack.c.0.s8 %v1788
      %v1790 = vlaneseq
      %v1791 = vshrl.u32 %v1790, 7
      %v1792 = vsub.s32 %v1789, %v1791
      %v1793 = vrot.slane %v1785, %v1792
      %v1795 = vunpack.c.l.s4 1983009808
      %v1796 = vunpack.c.0.s8 %v1795
      %v1797 = vlaneseq
      %v1798 = vshrl.u32 %v1797, 7
      %v1799 = vsub.s32 %v1796, %v1798
      %v1800 = vrot.slane %v1786, %v1799
      %v1801 = vcombine.low %v1793, %v1800
      %vm1802 = vcmask 1044484
      %v1803 = vsel %vm1802, %v1750, %v1750
      %vm1804 = vcmask 1046534
      %v1805 = vsel %vm1804, %v1750, %v1803
      %v1806 = vrot.slane %v1784, 7
      %vm1807 = vcmask 1041409
      %v1808 = vsel %vm1807, %v1806, %v1805
      %vm1809 = vcmask 1043459
      %v1810 = vsel %vm1809, %v1806, %v1808
      %vm1811 = vcmask 1045509
      %v1812 = vsel %vm1811, %v1806, %v1810
      %vm1813 = vcmask 1047559
      %v1814 = vsel %vm1813, %v1806, %v1812
      %v1815 = vsel %vm1802, %v1767, %v1767
      %v1816 = vsel %vm1804, %v1767, %v1815
      %v1817 = vrot.slane %v1801, 7
      %v1818 = vsel %vm1807, %v1817, %v1816
      %v1819 = vsel %vm1809, %v1817, %v1818
      %v1820 = vsel %vm1811, %v1817, %v1819
      %v1821 = vsel %vm1813, %v1817, %v1820
      %1824 = vst [vmem:[#allocation2] sm:$0xff] %v1814
      %1825 = vst [vmem:[#allocation2 + $0x8] sm:$0xff] %v1821
    $region73: #{tpu_custom_call.1} parent=1 // pred_fallthru
      _
    %p1826 = scmp.gt.s32.totalorder 0, 0
    // Predicated region
    $region74: #{tpu_custom_call.1} parent=1 // pred_check
      %p1827 = pneg %p1826
    $region75: #{tpu_custom_call.1} parent=1 // pred_check_branch
      %1829 = sbr.rel (%p1827) target = $region77
    $region76: #{tpu_custom_call.1} parent=1 // pred_region
      %v1830 = vld [vmem:[#allocation2] sm:$0xff]
      %v1831 = vld [vmem:[#allocation2 + $0x8] sm:$0xff]
      %v1848 = vcombine.low %v1518, %v1531
      %v1849 = vcombine.low %v1544, %v1557
      %v1851 = vunpack.c.l.s4 1983009808
      %v1852 = vunpack.c.0.s8 %v1851
      %v1853 = vlaneseq
      %v1854 = vshrl.u32 %v1853, 7
      %v1855 = vsub.s32 %v1852, %v1854
      %v1856 = vrot.slane %v1848, %v1855
      %v1858 = vunpack.c.l.s4 1983009808
      %v1859 = vunpack.c.0.s8 %v1858
      %v1860 = vlaneseq
      %v1861 = vshrl.u32 %v1860, 7
      %v1862 = vsub.s32 %v1859, %v1861
      %v1863 = vrot.slane %v1849, %v1862
      %v1864 = vcombine.low %v1856, %v1863
      %v1865 = vcombine.low %v1570, %v1583
      %v1866 = vcombine.low %v1596, %v1609
      %v1868 = vunpack.c.l.s4 1983009808
      %v1869 = vunpack.c.0.s8 %v1868
      %v1870 = vlaneseq
      %v1871 = vshrl.u32 %v1870, 7
      %v1872 = vsub.s32 %v1869, %v1871
      %v1873 = vrot.slane %v1865, %v1872
      %v1875 = vunpack.c.l.s4 1983009808
      %v1876 = vunpack.c.0.s8 %v1875
      %v1877 = vlaneseq
      %v1878 = vshrl.u32 %v1877, 7
      %v1879 = vsub.s32 %v1876, %v1878
      %v1880 = vrot.slane %v1866, %v1879
      %v1881 = vcombine.low %v1873, %v1880
      %v1882 = vcombine.low %v1622, %v1635
      %v1883 = vcombine.low %v1648, %v1661
      %v1885 = vunpack.c.l.s4 1983009808
      %v1886 = vunpack.c.0.s8 %v1885
      %v1887 = vlaneseq
      %v1888 = vshrl.u32 %v1887, 7
      %v1889 = vsub.s32 %v1886, %v1888
      %v1890 = vrot.slane %v1882, %v1889
      %v1892 = vunpack.c.l.s4 1983009808
      %v1893 = vunpack.c.0.s8 %v1892
      %v1894 = vlaneseq
      %v1895 = vshrl.u32 %v1894, 7
      %v1896 = vsub.s32 %v1893, %v1895
      %v1897 = vrot.slane %v1883, %v1896
      %v1898 = vcombine.low %v1890, %v1897
      %v1899 = vcombine.low %v1674, %v1687
      %v1900 = vcombine.low %v1700, %v1713
      %v1902 = vunpack.c.l.s4 1983009808
      %v1903 = vunpack.c.0.s8 %v1902
      %v1904 = vlaneseq
      %v1905 = vshrl.u32 %v1904, 7
      %v1906 = vsub.s32 %v1903, %v1905
      %v1907 = vrot.slane %v1899, %v1906
      %v1909 = vunpack.c.l.s4 1983009808
      %v1910 = vunpack.c.0.s8 %v1909
      %v1911 = vlaneseq
      %v1912 = vshrl.u32 %v1911, 7
      %v1913 = vsub.s32 %v1910, %v1912
      %v1914 = vrot.slane %v1900, %v1913
      %v1915 = vcombine.low %v1907, %v1914
      %vm1916 = vcmask 1044484
      %v1917 = vsel %vm1916, %v1864, %v1864
      %vm1918 = vcmask 1046534
      %v1919 = vsel %vm1918, %v1864, %v1917
      %v1920 = vrot.slane %v1898, 7
      %vm1921 = vcmask 1041409
      %v1922 = vsel %vm1921, %v1920, %v1919
      %vm1923 = vcmask 1043459
      %v1924 = vsel %vm1923, %v1920, %v1922
      %vm1925 = vcmask 1045509
      %v1926 = vsel %vm1925, %v1920, %v1924
      %vm1927 = vcmask 1047559
      %v1928 = vsel %vm1927, %v1920, %v1926
      %v1929 = vsel %vm1916, %v1881, %v1881
      %v1930 = vsel %vm1918, %v1881, %v1929
      %v1931 = vrot.slane %v1915, 7
      %v1932 = vsel %vm1921, %v1931, %v1930
      %v1933 = vsel %vm1923, %v1931, %v1932
      %v1934 = vsel %vm1925, %v1931, %v1933
      %v1935 = vsel %vm1927, %v1931, %v1934
      %v1938 = vmax.f32 %v1830, %v1928
      %v1939 = vmax.f32 %v1831, %v1935
      %1940 = vst [vmem:[#allocation2] sm:$0xff] %v1938
      %1941 = vst [vmem:[#allocation2 + $0x8] sm:$0xff] %v1939
    $region77: #{tpu_custom_call.1} parent=1 // pred_fallthru
      _
    // Predicated region
    $region78: #{tpu_custom_call.1} parent=1 // pred_check
      %p1942 = pneg %p1714
    $region79: #{tpu_custom_call.1} parent=1 // pred_check_branch
      %1944 = sbr.rel (%p1942) target = $region81
    $region80: #{tpu_custom_call.1} parent=1 // pred_region
      %v1945 = vld [vmem:[#allocation2] sm:$0xff]
      %v1946 = vld [vmem:[#allocation2 + $0x8] sm:$0xff]
      %v1949 = vcombine.high %v1945, %v1945
      %v1951 = vunpack.c.l.s4 1983009808
      %v1952 = vunpack.c.0.s8 %v1951
      %v1953 = vlaneseq
      %v1954 = vshrl.u32 %v1953, 7
      %v1955 = vsub.s32 %v1952, %v1954
      %v1956 = vrot.slane %v1945, %v1955
      %v1958 = vunpack.c.l.s4 1983009808
      %v1959 = vunpack.c.0.s8 %v1958
      %v1960 = vlaneseq
      %v1961 = vshrl.u32 %v1960, 7
      %v1962 = vsub.s32 %v1959, %v1961
      %v1963 = vrot.slane %v1949, %v1962
      %v1964 = vcombine.high %v1956, %v1956
      %v1965 = vcombine.high %v1963, %v1963
      %v1966 = vcombine.high %v1946, %v1946
      %v1968 = vunpack.c.l.s4 1983009808
      %v1969 = vunpack.c.0.s8 %v1968
      %v1970 = vlaneseq
      %v1971 = vshrl.u32 %v1970, 7
      %v1972 = vsub.s32 %v1969, %v1971
      %v1973 = vrot.slane %v1946, %v1972
      %v1975 = vunpack.c.l.s4 1983009808
      %v1976 = vunpack.c.0.s8 %v1975
      %v1977 = vlaneseq
      %v1978 = vshrl.u32 %v1977, 7
      %v1979 = vsub.s32 %v1976, %v1978
      %v1980 = vrot.slane %v1966, %v1979
      %v1981 = vcombine.high %v1973, %v1973
      %v1982 = vcombine.high %v1980, %v1980
      %v1991 = vpack.c.bf16 %v1956, %v1956
      %v1992 = vpack.c.bf16 %v1964, %v1964
      %v1993 = vpack.c.bf16 %v1963, %v1963
      %v1994 = vpack.c.bf16 %v1965, %v1965
      %v1995 = vpack.c.bf16 %v1973, %v1973
      %v1996 = vpack.c.bf16 %v1981, %v1981
      %v1997 = vpack.c.bf16 %v1980, %v1980
      %v1998 = vpack.c.bf16 %v1982, %v1982
      %v1999 = vld [vmem:[#allocation6] sm:$0xff]
      %v2000 = vld [vmem:[#allocation6 + $0x8] sm:$0xff]
      %v2001 = vld [vmem:[#allocation6 + $0x10] sm:$0xff]
      %v2002 = vld [vmem:[#allocation6 + $0x18] sm:$0xff]
      %v2003 = vld [vmem:[#allocation6 + $0x20] sm:$0xff]
      %v2004 = vld [vmem:[#allocation6 + $0x28] sm:$0xff]
      %v2005 = vld [vmem:[#allocation6 + $0x30] sm:$0xff]
      %v2006 = vld [vmem:[#allocation6 + $0x38] sm:$0xff]
      %v2007 = vld [vmem:[#allocation6 + $0x40] sm:$0xff]
      %v2008 = vld [vmem:[#allocation6 + $0x48] sm:$0xff]
      %v2009 = vld [vmem:[#allocation6 + $0x50] sm:$0xff]
      %v2010 = vld [vmem:[#allocation6 + $0x58] sm:$0xff]
      %v2011 = vld [vmem:[#allocation6 + $0x60] sm:$0xff]
      %v2012 = vld [vmem:[#allocation6 + $0x68] sm:$0xff]
      %v2013 = vld [vmem:[#allocation6 + $0x70] sm:$0xff]
      %v2014 = vld [vmem:[#allocation6 + $0x78] sm:$0xff]
      %v2015 = vld [vmem:[#allocation6 + $0x80] sm:$0xff]
      %v2016 = vld [vmem:[#allocation6 + $0x88] sm:$0xff]
      %v2017 = vld [vmem:[#allocation6 + $0x90] sm:$0xff]
      %v2018 = vld [vmem:[#allocation6 + $0x98] sm:$0xff]
      %v2019 = vld [vmem:[#allocation6 + $0xa0] sm:$0xff]
      %v2020 = vld [vmem:[#allocation6 + $0xa8] sm:$0xff]
      %v2021 = vld [vmem:[#allocation6 + $0xb0] sm:$0xff]
      %v2022 = vld [vmem:[#allocation6 + $0xb8] sm:$0xff]
      %v2023 = vld [vmem:[#allocation6 + $0xc0] sm:$0xff]
      %v2024 = vld [vmem:[#allocation6 + $0xc8] sm:$0xff]
      %v2025 = vld [vmem:[#allocation6 + $0xd0] sm:$0xff]
      %v2026 = vld [vmem:[#allocation6 + $0xd8] sm:$0xff]
      %v2027 = vld [vmem:[#allocation6 + $0xe0] sm:$0xff]
      %v2028 = vld [vmem:[#allocation6 + $0xe8] sm:$0xff]
      %v2029 = vld [vmem:[#allocation6 + $0xf0] sm:$0xff]
      %v2030 = vld [vmem:[#allocation6 + $0xf8] sm:$0xff]
      %v2031 = vld [vmem:[#allocation6 + $0x100] sm:$0xff]
      %v2032 = vld [vmem:[#allocation6 + $0x108] sm:$0xff]
      %v2033 = vld [vmem:[#allocation6 + $0x110] sm:$0xff]
      %v2034 = vld [vmem:[#allocation6 + $0x118] sm:$0xff]
      %v2035 = vld [vmem:[#allocation6 + $0x120] sm:$0xff]
      %v2036 = vld [vmem:[#allocation6 + $0x128] sm:$0xff]
      %v2037 = vld [vmem:[#allocation6 + $0x130] sm:$0xff]
      %v2038 = vld [vmem:[#allocation6 + $0x138] sm:$0xff]
      %v2039 = vld [vmem:[#allocation6 + $0x140] sm:$0xff]
      %v2040 = vld [vmem:[#allocation6 + $0x148] sm:$0xff]
      %v2041 = vld [vmem:[#allocation6 + $0x150] sm:$0xff]
      %v2042 = vld [vmem:[#allocation6 + $0x158] sm:$0xff]
      %v2043 = vld [vmem:[#allocation6 + $0x160] sm:$0xff]
      %v2044 = vld [vmem:[#allocation6 + $0x168] sm:$0xff]
      %v2045 = vld [vmem:[#allocation6 + $0x170] sm:$0xff]
      %v2046 = vld [vmem:[#allocation6 + $0x178] sm:$0xff]
      %v2047 = vld [vmem:[#allocation6 + $0x180] sm:$0xff]
      %v2048 = vld [vmem:[#allocation6 + $0x188] sm:$0xff]
      %v2049 = vld [vmem:[#allocation6 + $0x190] sm:$0xff]
      %v2050 = vld [vmem:[#allocation6 + $0x198] sm:$0xff]
      %v2051 = vld [vmem:[#allocation6 + $0x1a0] sm:$0xff]
      %v2052 = vld [vmem:[#allocation6 + $0x1a8] sm:$0xff]
      %v2053 = vld [vmem:[#allocation6 + $0x1b0] sm:$0xff]
      %v2054 = vld [vmem:[#allocation6 + $0x1b8] sm:$0xff]
      %v2055 = vld [vmem:[#allocation6 + $0x1c0] sm:$0xff]
      %v2056 = vld [vmem:[#allocation6 + $0x1c8] sm:$0xff]
      %v2057 = vld [vmem:[#allocation6 + $0x1d0] sm:$0xff]
      %v2058 = vld [vmem:[#allocation6 + $0x1d8] sm:$0xff]
      %v2059 = vld [vmem:[#allocation6 + $0x1e0] sm:$0xff]
      %v2060 = vld [vmem:[#allocation6 + $0x1e8] sm:$0xff]
      %v2061 = vld [vmem:[#allocation6 + $0x1f0] sm:$0xff]
      %v2062 = vld [vmem:[#allocation6 + $0x1f8] sm:$0xff]
      %v2063 = vld [vmem:[#allocation6 + $0x200] sm:$0xff]
      %v2064 = vld [vmem:[#allocation6 + $0x208] sm:$0xff]
      %v2065 = vld [vmem:[#allocation6 + $0x210] sm:$0xff]
      %v2066 = vld [vmem:[#allocation6 + $0x218] sm:$0xff]
      %v2067 = vld [vmem:[#allocation6 + $0x220] sm:$0xff]
      %v2068 = vld [vmem:[#allocation6 + $0x228] sm:$0xff]
      %v2069 = vld [vmem:[#allocation6 + $0x230] sm:$0xff]
      %v2070 = vld [vmem:[#allocation6 + $0x238] sm:$0xff]
      %v2071 = vld [vmem:[#allocation6 + $0x240] sm:$0xff]
      %v2072 = vld [vmem:[#allocation6 + $0x248] sm:$0xff]
      %v2073 = vld [vmem:[#allocation6 + $0x250] sm:$0xff]
      %v2074 = vld [vmem:[#allocation6 + $0x258] sm:$0xff]
      %v2075 = vld [vmem:[#allocation6 + $0x260] sm:$0xff]
      %v2076 = vld [vmem:[#allocation6 + $0x268] sm:$0xff]
      %v2077 = vld [vmem:[#allocation6 + $0x270] sm:$0xff]
      %v2078 = vld [vmem:[#allocation6 + $0x278] sm:$0xff]
      %v2079 = vld [vmem:[#allocation6 + $0x280] sm:$0xff]
      %v2080 = vld [vmem:[#allocation6 + $0x288] sm:$0xff]
      %v2081 = vld [vmem:[#allocation6 + $0x290] sm:$0xff]
      %v2082 = vld [vmem:[#allocation6 + $0x298] sm:$0xff]
      %v2083 = vld [vmem:[#allocation6 + $0x2a0] sm:$0xff]
      %v2084 = vld [vmem:[#allocation6 + $0x2a8] sm:$0xff]
      %v2085 = vld [vmem:[#allocation6 + $0x2b0] sm:$0xff]
      %v2086 = vld [vmem:[#allocation6 + $0x2b8] sm:$0xff]
      %v2087 = vld [vmem:[#allocation6 + $0x2c0] sm:$0xff]
      %v2088 = vld [vmem:[#allocation6 + $0x2c8] sm:$0xff]
      %v2089 = vld [vmem:[#allocation6 + $0x2d0] sm:$0xff]
      %v2090 = vld [vmem:[#allocation6 + $0x2d8] sm:$0xff]
      %v2091 = vld [vmem:[#allocation6 + $0x2e0] sm:$0xff]
      %v2092 = vld [vmem:[#allocation6 + $0x2e8] sm:$0xff]
      %v2093 = vld [vmem:[#allocation6 + $0x2f0] sm:$0xff]
      %v2094 = vld [vmem:[#allocation6 + $0x2f8] sm:$0xff]
      %v2095 = vld [vmem:[#allocation6 + $0x300] sm:$0xff]
      %v2096 = vld [vmem:[#allocation6 + $0x308] sm:$0xff]
      %v2097 = vld [vmem:[#allocation6 + $0x310] sm:$0xff]
      %v2098 = vld [vmem:[#allocation6 + $0x318] sm:$0xff]
      %v2099 = vld [vmem:[#allocation6 + $0x320] sm:$0xff]
      %v2100 = vld [vmem:[#allocation6 + $0x328] sm:$0xff]
      %v2101 = vld [vmem:[#allocation6 + $0x330] sm:$0xff]
      %v2102 = vld [vmem:[#allocation6 + $0x338] sm:$0xff]
      %v2103 = vld [vmem:[#allocation6 + $0x340] sm:$0xff]
      %v2104 = vld [vmem:[#allocation6 + $0x348] sm:$0xff]
      %v2105 = vld [vmem:[#allocation6 + $0x350] sm:$0xff]
      %v2106 = vld [vmem:[#allocation6 + $0x358] sm:$0xff]
      %v2107 = vld [vmem:[#allocation6 + $0x360] sm:$0xff]
      %v2108 = vld [vmem:[#allocation6 + $0x368] sm:$0xff]
      %v2109 = vld [vmem:[#allocation6 + $0x370] sm:$0xff]
      %v2110 = vld [vmem:[#allocation6 + $0x378] sm:$0xff]
      %v2111 = vld [vmem:[#allocation6 + $0x380] sm:$0xff]
      %v2112 = vld [vmem:[#allocation6 + $0x388] sm:$0xff]
      %v2113 = vld [vmem:[#allocation6 + $0x390] sm:$0xff]
      %v2114 = vld [vmem:[#allocation6 + $0x398] sm:$0xff]
      %v2115 = vld [vmem:[#allocation6 + $0x3a0] sm:$0xff]
      %v2116 = vld [vmem:[#allocation6 + $0x3a8] sm:$0xff]
      %v2117 = vld [vmem:[#allocation6 + $0x3b0] sm:$0xff]
      %v2118 = vld [vmem:[#allocation6 + $0x3b8] sm:$0xff]
      %v2119 = vld [vmem:[#allocation6 + $0x3c0] sm:$0xff]
      %v2120 = vld [vmem:[#allocation6 + $0x3c8] sm:$0xff]
      %v2121 = vld [vmem:[#allocation6 + $0x3d0] sm:$0xff]
      %v2122 = vld [vmem:[#allocation6 + $0x3d8] sm:$0xff]
      %v2123 = vld [vmem:[#allocation6 + $0x3e0] sm:$0xff]
      %v2124 = vld [vmem:[#allocation6 + $0x3e8] sm:$0xff]
      %v2125 = vld [vmem:[#allocation6 + $0x3f0] sm:$0xff]
      %v2126 = vld [vmem:[#allocation6 + $0x3f8] sm:$0xff]
      %v2127 = vld [vmem:[#allocation6 + $0x400] sm:$0xff]
      %v2128 = vld [vmem:[#allocation6 + $0x408] sm:$0xff]
      %v2129 = vld [vmem:[#allocation6 + $0x410] sm:$0xff]
      %v2130 = vld [vmem:[#allocation6 + $0x418] sm:$0xff]
      %v2131 = vld [vmem:[#allocation6 + $0x420] sm:$0xff]
      %v2132 = vld [vmem:[#allocation6 + $0x428] sm:$0xff]
      %v2133 = vld [vmem:[#allocation6 + $0x430] sm:$0xff]
      %v2134 = vld [vmem:[#allocation6 + $0x438] sm:$0xff]
      %v2135 = vld [vmem:[#allocation6 + $0x440] sm:$0xff]
      %v2136 = vld [vmem:[#allocation6 + $0x448] sm:$0xff]
      %v2137 = vld [vmem:[#allocation6 + $0x450] sm:$0xff]
      %v2138 = vld [vmem:[#allocation6 + $0x458] sm:$0xff]
      %v2139 = vld [vmem:[#allocation6 + $0x460] sm:$0xff]
      %v2140 = vld [vmem:[#allocation6 + $0x468] sm:$0xff]
      %v2141 = vld [vmem:[#allocation6 + $0x470] sm:$0xff]
      %v2142 = vld [vmem:[#allocation6 + $0x478] sm:$0xff]
      %v2143 = vld [vmem:[#allocation6 + $0x480] sm:$0xff]
      %v2144 = vld [vmem:[#allocation6 + $0x488] sm:$0xff]
      %v2145 = vld [vmem:[#allocation6 + $0x490] sm:$0xff]
      %v2146 = vld [vmem:[#allocation6 + $0x498] sm:$0xff]
      %v2147 = vld [vmem:[#allocation6 + $0x4a0] sm:$0xff]
      %v2148 = vld [vmem:[#allocation6 + $0x4a8] sm:$0xff]
      %v2149 = vld [vmem:[#allocation6 + $0x4b0] sm:$0xff]
      %v2150 = vld [vmem:[#allocation6 + $0x4b8] sm:$0xff]
      %v2151 = vld [vmem:[#allocation6 + $0x4c0] sm:$0xff]
      %v2152 = vld [vmem:[#allocation6 + $0x4c8] sm:$0xff]
      %v2153 = vld [vmem:[#allocation6 + $0x4d0] sm:$0xff]
      %v2154 = vld [vmem:[#allocation6 + $0x4d8] sm:$0xff]
      %v2155 = vld [vmem:[#allocation6 + $0x4e0] sm:$0xff]
      %v2156 = vld [vmem:[#allocation6 + $0x4e8] sm:$0xff]
      %v2157 = vld [vmem:[#allocation6 + $0x4f0] sm:$0xff]
      %v2158 = vld [vmem:[#allocation6 + $0x4f8] sm:$0xff]
      %v2159 = vld [vmem:[#allocation6 + $0x500] sm:$0xff]
      %v2160 = vld [vmem:[#allocation6 + $0x508] sm:$0xff]
      %v2161 = vld [vmem:[#allocation6 + $0x510] sm:$0xff]
      %v2162 = vld [vmem:[#allocation6 + $0x518] sm:$0xff]
      %v2163 = vld [vmem:[#allocation6 + $0x520] sm:$0xff]
      %v2164 = vld [vmem:[#allocation6 + $0x528] sm:$0xff]
      %v2165 = vld [vmem:[#allocation6 + $0x530] sm:$0xff]
      %v2166 = vld [vmem:[#allocation6 + $0x538] sm:$0xff]
      %v2167 = vld [vmem:[#allocation6 + $0x540] sm:$0xff]
      %v2168 = vld [vmem:[#allocation6 + $0x548] sm:$0xff]
      %v2169 = vld [vmem:[#allocation6 + $0x550] sm:$0xff]
      %v2170 = vld [vmem:[#allocation6 + $0x558] sm:$0xff]
      %v2171 = vld [vmem:[#allocation6 + $0x560] sm:$0xff]
      %v2172 = vld [vmem:[#allocation6 + $0x568] sm:$0xff]
      %v2173 = vld [vmem:[#allocation6 + $0x570] sm:$0xff]
      %v2174 = vld [vmem:[#allocation6 + $0x578] sm:$0xff]
      %v2175 = vld [vmem:[#allocation6 + $0x580] sm:$0xff]
      %v2176 = vld [vmem:[#allocation6 + $0x588] sm:$0xff]
      %v2177 = vld [vmem:[#allocation6 + $0x590] sm:$0xff]
      %v2178 = vld [vmem:[#allocation6 + $0x598] sm:$0xff]
      %v2179 = vld [vmem:[#allocation6 + $0x5a0] sm:$0xff]
      %v2180 = vld [vmem:[#allocation6 + $0x5a8] sm:$0xff]
      %v2181 = vld [vmem:[#allocation6 + $0x5b0] sm:$0xff]
      %v2182 = vld [vmem:[#allocation6 + $0x5b8] sm:$0xff]
      %v2183 = vld [vmem:[#allocation6 + $0x5c0] sm:$0xff]
      %v2184 = vld [vmem:[#allocation6 + $0x5c8] sm:$0xff]
      %v2185 = vld [vmem:[#allocation6 + $0x5d0] sm:$0xff]
      %v2186 = vld [vmem:[#allocation6 + $0x5d8] sm:$0xff]
      %v2187 = vld [vmem:[#allocation6 + $0x5e0] sm:$0xff]
      %v2188 = vld [vmem:[#allocation6 + $0x5e8] sm:$0xff]
      %v2189 = vld [vmem:[#allocation6 + $0x5f0] sm:$0xff]
      %v2190 = vld [vmem:[#allocation6 + $0x5f8] sm:$0xff]
      %v2191 = vld [vmem:[#allocation6 + $0x600] sm:$0xff]
      %v2192 = vld [vmem:[#allocation6 + $0x608] sm:$0xff]
      %v2193 = vld [vmem:[#allocation6 + $0x610] sm:$0xff]
      %v2194 = vld [vmem:[#allocation6 + $0x618] sm:$0xff]
      %v2195 = vld [vmem:[#allocation6 + $0x620] sm:$0xff]
      %v2196 = vld [vmem:[#allocation6 + $0x628] sm:$0xff]
      %v2197 = vld [vmem:[#allocation6 + $0x630] sm:$0xff]
      %v2198 = vld [vmem:[#allocation6 + $0x638] sm:$0xff]
      %v2199 = vld [vmem:[#allocation6 + $0x640] sm:$0xff]
      %v2200 = vld [vmem:[#allocation6 + $0x648] sm:$0xff]
      %v2201 = vld [vmem:[#allocation6 + $0x650] sm:$0xff]
      %v2202 = vld [vmem:[#allocation6 + $0x658] sm:$0xff]
      %v2203 = vld [vmem:[#allocation6 + $0x660] sm:$0xff]
      %v2204 = vld [vmem:[#allocation6 + $0x668] sm:$0xff]
      %v2205 = vld [vmem:[#allocation6 + $0x670] sm:$0xff]
      %v2206 = vld [vmem:[#allocation6 + $0x678] sm:$0xff]
      %v2207 = vld [vmem:[#allocation6 + $0x680] sm:$0xff]
      %v2208 = vld [vmem:[#allocation6 + $0x688] sm:$0xff]
      %v2209 = vld [vmem:[#allocation6 + $0x690] sm:$0xff]
      %v2210 = vld [vmem:[#allocation6 + $0x698] sm:$0xff]
      %v2211 = vld [vmem:[#allocation6 + $0x6a0] sm:$0xff]
      %v2212 = vld [vmem:[#allocation6 + $0x6a8] sm:$0xff]
      %v2213 = vld [vmem:[#allocation6 + $0x6b0] sm:$0xff]
      %v2214 = vld [vmem:[#allocation6 + $0x6b8] sm:$0xff]
      %v2215 = vld [vmem:[#allocation6 + $0x6c0] sm:$0xff]
      %v2216 = vld [vmem:[#allocation6 + $0x6c8] sm:$0xff]
      %v2217 = vld [vmem:[#allocation6 + $0x6d0] sm:$0xff]
      %v2218 = vld [vmem:[#allocation6 + $0x6d8] sm:$0xff]
      %v2219 = vld [vmem:[#allocation6 + $0x6e0] sm:$0xff]
      %v2220 = vld [vmem:[#allocation6 + $0x6e8] sm:$0xff]
      %v2221 = vld [vmem:[#allocation6 + $0x6f0] sm:$0xff]
      %v2222 = vld [vmem:[#allocation6 + $0x6f8] sm:$0xff]
      %v2223 = vld [vmem:[#allocation6 + $0x700] sm:$0xff]
      %v2224 = vld [vmem:[#allocation6 + $0x708] sm:$0xff]
      %v2225 = vld [vmem:[#allocation6 + $0x710] sm:$0xff]
      %v2226 = vld [vmem:[#allocation6 + $0x718] sm:$0xff]
      %v2227 = vld [vmem:[#allocation6 + $0x720] sm:$0xff]
      %v2228 = vld [vmem:[#allocation6 + $0x728] sm:$0xff]
      %v2229 = vld [vmem:[#allocation6 + $0x730] sm:$0xff]
      %v2230 = vld [vmem:[#allocation6 + $0x738] sm:$0xff]
      %v2231 = vld [vmem:[#allocation6 + $0x740] sm:$0xff]
      %v2232 = vld [vmem:[#allocation6 + $0x748] sm:$0xff]
      %v2233 = vld [vmem:[#allocation6 + $0x750] sm:$0xff]
      %v2234 = vld [vmem:[#allocation6 + $0x758] sm:$0xff]
      %v2235 = vld [vmem:[#allocation6 + $0x760] sm:$0xff]
      %v2236 = vld [vmem:[#allocation6 + $0x768] sm:$0xff]
      %v2237 = vld [vmem:[#allocation6 + $0x770] sm:$0xff]
      %v2238 = vld [vmem:[#allocation6 + $0x778] sm:$0xff]
      %v2239 = vld [vmem:[#allocation6 + $0x780] sm:$0xff]
      %v2240 = vld [vmem:[#allocation6 + $0x788] sm:$0xff]
      %v2241 = vld [vmem:[#allocation6 + $0x790] sm:$0xff]
      %v2242 = vld [vmem:[#allocation6 + $0x798] sm:$0xff]
      %v2243 = vld [vmem:[#allocation6 + $0x7a0] sm:$0xff]
      %v2244 = vld [vmem:[#allocation6 + $0x7a8] sm:$0xff]
      %v2245 = vld [vmem:[#allocation6 + $0x7b0] sm:$0xff]
      %v2246 = vld [vmem:[#allocation6 + $0x7b8] sm:$0xff]
      %v2247 = vld [vmem:[#allocation6 + $0x7c0] sm:$0xff]
      %v2248 = vld [vmem:[#allocation6 + $0x7c8] sm:$0xff]
      %v2249 = vld [vmem:[#allocation6 + $0x7d0] sm:$0xff]
      %v2250 = vld [vmem:[#allocation6 + $0x7d8] sm:$0xff]
      %v2251 = vld [vmem:[#allocation6 + $0x7e0] sm:$0xff]
      %v2252 = vld [vmem:[#allocation6 + $0x7e8] sm:$0xff]
      %v2253 = vld [vmem:[#allocation6 + $0x7f0] sm:$0xff]
      %v2254 = vld [vmem:[#allocation6 + $0x7f8] sm:$0xff]
      %v2255 = vld [vmem:[%s8] sm:$0xf]
      %v2257 = vlaneseq
      %v2258 = vshrl.u32 %v2257, 7
      %v2259 = vsub.s32 0, %v2258
      %v2260 = vrot.slane %v2255, %v2259
      %v2261 = vlaneseq
      %v2262 = vshrl.u32 %v2261, 7
      %v2263 = vsub.s32 1, %v2262
      %v2264 = vrot.slane %v2255, %v2263
      %v2265 = vlaneseq
      %v2266 = vshrl.u32 %v2265, 7
      %v2267 = vsub.s32 2, %v2266
      %v2268 = vrot.slane %v2255, %v2267
      %v2269 = vlaneseq
      %v2270 = vshrl.u32 %v2269, 7
      %v2271 = vsub.s32 3, %v2270
      %v2272 = vrot.slane %v2255, %v2271
      %v2533 = vunpack.c.l.b16 %v1999
      %v2534 = vunpack.c.h.b16 %v1999
      %v2535 = vunpack.c.l.b16 %v2000
      %v2536 = vunpack.c.h.b16 %v2000
      %v2537 = vunpack.c.l.b16 %v2001
      %v2538 = vunpack.c.h.b16 %v2001
      %v2539 = vunpack.c.l.b16 %v2002
      %v2540 = vunpack.c.h.b16 %v2002
      %v2541 = vunpack.c.l.b16 %v2003
      %v2542 = vunpack.c.h.b16 %v2003
      %v2543 = vunpack.c.l.b16 %v2004
      %v2544 = vunpack.c.h.b16 %v2004
      %v2545 = vunpack.c.l.b16 %v2005
      %v2546 = vunpack.c.h.b16 %v2005
      %v2547 = vunpack.c.l.b16 %v2006
      %v2548 = vunpack.c.h.b16 %v2006
      %v2549 = vunpack.c.l.b16 %v2007
      %v2550 = vunpack.c.h.b16 %v2007
      %v2551 = vunpack.c.l.b16 %v2008
      %v2552 = vunpack.c.h.b16 %v2008
      %v2553 = vunpack.c.l.b16 %v2009
      %v2554 = vunpack.c.h.b16 %v2009
      %v2555 = vunpack.c.l.b16 %v2010
      %v2556 = vunpack.c.h.b16 %v2010
      %v2557 = vunpack.c.l.b16 %v2011
      %v2558 = vunpack.c.h.b16 %v2011
      %v2559 = vunpack.c.l.b16 %v2012
      %v2560 = vunpack.c.h.b16 %v2012
      %v2561 = vunpack.c.l.b16 %v2013
      %v2562 = vunpack.c.h.b16 %v2013
      %v2563 = vunpack.c.l.b16 %v2014
      %v2564 = vunpack.c.h.b16 %v2014
      %v2565 = vunpack.c.l.b16 %v2015
      %v2566 = vunpack.c.h.b16 %v2015
      %v2567 = vunpack.c.l.b16 %v2016
      %v2568 = vunpack.c.h.b16 %v2016
      %v2569 = vunpack.c.l.b16 %v2017
      %v2570 = vunpack.c.h.b16 %v2017
      %v2571 = vunpack.c.l.b16 %v2018
      %v2572 = vunpack.c.h.b16 %v2018
      %v2573 = vunpack.c.l.b16 %v2019
      %v2574 = vunpack.c.h.b16 %v2019
      %v2575 = vunpack.c.l.b16 %v2020
      %v2576 = vunpack.c.h.b16 %v2020
      %v2577 = vunpack.c.l.b16 %v2021
      %v2578 = vunpack.c.h.b16 %v2021
      %v2579 = vunpack.c.l.b16 %v2022
      %v2580 = vunpack.c.h.b16 %v2022
      %v2581 = vunpack.c.l.b16 %v2023
      %v2582 = vunpack.c.h.b16 %v2023
      %v2583 = vunpack.c.l.b16 %v2024
      %v2584 = vunpack.c.h.b16 %v2024
      %v2585 = vunpack.c.l.b16 %v2025
      %v2586 = vunpack.c.h.b16 %v2025
      %v2587 = vunpack.c.l.b16 %v2026
      %v2588 = vunpack.c.h.b16 %v2026
      %v2589 = vunpack.c.l.b16 %v2027
      %v2590 = vunpack.c.h.b16 %v2027
      %v2591 = vunpack.c.l.b16 %v2028
      %v2592 = vunpack.c.h.b16 %v2028
      %v2593 = vunpack.c.l.b16 %v2029
      %v2594 = vunpack.c.h.b16 %v2029
      %v2595 = vunpack.c.l.b16 %v2030
      %v2596 = vunpack.c.h.b16 %v2030
      %v2597 = vunpack.c.l.b16 %v2031
      %v2598 = vunpack.c.h.b16 %v2031
      %v2599 = vunpack.c.l.b16 %v2032
      %v2600 = vunpack.c.h.b16 %v2032
      %v2601 = vunpack.c.l.b16 %v2033
      %v2602 = vunpack.c.h.b16 %v2033
      %v2603 = vunpack.c.l.b16 %v2034
      %v2604 = vunpack.c.h.b16 %v2034
      %v2605 = vunpack.c.l.b16 %v2035
      %v2606 = vunpack.c.h.b16 %v2035
      %v2607 = vunpack.c.l.b16 %v2036
      %v2608 = vunpack.c.h.b16 %v2036
      %v2609 = vunpack.c.l.b16 %v2037
      %v2610 = vunpack.c.h.b16 %v2037
      %v2611 = vunpack.c.l.b16 %v2038
      %v2612 = vunpack.c.h.b16 %v2038
      %v2613 = vunpack.c.l.b16 %v2039
      %v2614 = vunpack.c.h.b16 %v2039
      %v2615 = vunpack.c.l.b16 %v2040
      %v2616 = vunpack.c.h.b16 %v2040
      %v2617 = vunpack.c.l.b16 %v2041
      %v2618 = vunpack.c.h.b16 %v2041
      %v2619 = vunpack.c.l.b16 %v2042
      %v2620 = vunpack.c.h.b16 %v2042
      %v2621 = vunpack.c.l.b16 %v2043
      %v2622 = vunpack.c.h.b16 %v2043
      %v2623 = vunpack.c.l.b16 %v2044
      %v2624 = vunpack.c.h.b16 %v2044
      %v2625 = vunpack.c.l.b16 %v2045
      %v2626 = vunpack.c.h.b16 %v2045
      %v2627 = vunpack.c.l.b16 %v2046
      %v2628 = vunpack.c.h.b16 %v2046
      %v2629 = vunpack.c.l.b16 %v2047
      %v2630 = vunpack.c.h.b16 %v2047
      %v2631 = vunpack.c.l.b16 %v2048
      %v2632 = vunpack.c.h.b16 %v2048
      %v2633 = vunpack.c.l.b16 %v2049
      %v2634 = vunpack.c.h.b16 %v2049
      %v2635 = vunpack.c.l.b16 %v2050
      %v2636 = vunpack.c.h.b16 %v2050
      %v2637 = vunpack.c.l.b16 %v2051
      %v2638 = vunpack.c.h.b16 %v2051
      %v2639 = vunpack.c.l.b16 %v2052
      %v2640 = vunpack.c.h.b16 %v2052
      %v2641 = vunpack.c.l.b16 %v2053
      %v2642 = vunpack.c.h.b16 %v2053
      %v2643 = vunpack.c.l.b16 %v2054
      %v2644 = vunpack.c.h.b16 %v2054
      %v2645 = vunpack.c.l.b16 %v2055
      %v2646 = vunpack.c.h.b16 %v2055
      %v2647 = vunpack.c.l.b16 %v2056
      %v2648 = vunpack.c.h.b16 %v2056
      %v2649 = vunpack.c.l.b16 %v2057
      %v2650 = vunpack.c.h.b16 %v2057
      %v2651 = vunpack.c.l.b16 %v2058
      %v2652 = vunpack.c.h.b16 %v2058
      %v2653 = vunpack.c.l.b16 %v2059
      %v2654 = vunpack.c.h.b16 %v2059
      %v2655 = vunpack.c.l.b16 %v2060
      %v2656 = vunpack.c.h.b16 %v2060
      %v2657 = vunpack.c.l.b16 %v2061
      %v2658 = vunpack.c.h.b16 %v2061
      %v2659 = vunpack.c.l.b16 %v2062
      %v2660 = vunpack.c.h.b16 %v2062
      %v2661 = vunpack.c.l.b16 %v2063
      %v2662 = vunpack.c.h.b16 %v2063
      %v2663 = vunpack.c.l.b16 %v2064
      %v2664 = vunpack.c.h.b16 %v2064
      %v2665 = vunpack.c.l.b16 %v2065
      %v2666 = vunpack.c.h.b16 %v2065
      %v2667 = vunpack.c.l.b16 %v2066
      %v2668 = vunpack.c.h.b16 %v2066
      %v2669 = vunpack.c.l.b16 %v2067
      %v2670 = vunpack.c.h.b16 %v2067
      %v2671 = vunpack.c.l.b16 %v2068
      %v2672 = vunpack.c.h.b16 %v2068
      %v2673 = vunpack.c.l.b16 %v2069
      %v2674 = vunpack.c.h.b16 %v2069
      %v2675 = vunpack.c.l.b16 %v2070
      %v2676 = vunpack.c.h.b16 %v2070
      %v2677 = vunpack.c.l.b16 %v2071
      %v2678 = vunpack.c.h.b16 %v2071
      %v2679 = vunpack.c.l.b16 %v2072
      %v2680 = vunpack.c.h.b16 %v2072
      %v2681 = vunpack.c.l.b16 %v2073
      %v2682 = vunpack.c.h.b16 %v2073
      %v2683 = vunpack.c.l.b16 %v2074
      %v2684 = vunpack.c.h.b16 %v2074
      %v2685 = vunpack.c.l.b16 %v2075
      %v2686 = vunpack.c.h.b16 %v2075
      %v2687 = vunpack.c.l.b16 %v2076
      %v2688 = vunpack.c.h.b16 %v2076
      %v2689 = vunpack.c.l.b16 %v2077
      %v2690 = vunpack.c.h.b16 %v2077
      %v2691 = vunpack.c.l.b16 %v2078
      %v2692 = vunpack.c.h.b16 %v2078
      %v2693 = vunpack.c.l.b16 %v2079
      %v2694 = vunpack.c.h.b16 %v2079
      %v2695 = vunpack.c.l.b16 %v2080
      %v2696 = vunpack.c.h.b16 %v2080
      %v2697 = vunpack.c.l.b16 %v2081
      %v2698 = vunpack.c.h.b16 %v2081
      %v2699 = vunpack.c.l.b16 %v2082
      %v2700 = vunpack.c.h.b16 %v2082
      %v2701 = vunpack.c.l.b16 %v2083
      %v2702 = vunpack.c.h.b16 %v2083
      %v2703 = vunpack.c.l.b16 %v2084
      %v2704 = vunpack.c.h.b16 %v2084
      %v2705 = vunpack.c.l.b16 %v2085
      %v2706 = vunpack.c.h.b16 %v2085
      %v2707 = vunpack.c.l.b16 %v2086
      %v2708 = vunpack.c.h.b16 %v2086
      %v2709 = vunpack.c.l.b16 %v2087
      %v2710 = vunpack.c.h.b16 %v2087
      %v2711 = vunpack.c.l.b16 %v2088
      %v2712 = vunpack.c.h.b16 %v2088
      %v2713 = vunpack.c.l.b16 %v2089
      %v2714 = vunpack.c.h.b16 %v2089
      %v2715 = vunpack.c.l.b16 %v2090
      %v2716 = vunpack.c.h.b16 %v2090
      %v2717 = vunpack.c.l.b16 %v2091
      %v2718 = vunpack.c.h.b16 %v2091
      %v2719 = vunpack.c.l.b16 %v2092
      %v2720 = vunpack.c.h.b16 %v2092
      %v2721 = vunpack.c.l.b16 %v2093
      %v2722 = vunpack.c.h.b16 %v2093
      %v2723 = vunpack.c.l.b16 %v2094
      %v2724 = vunpack.c.h.b16 %v2094
      %v2725 = vunpack.c.l.b16 %v2095
      %v2726 = vunpack.c.h.b16 %v2095
      %v2727 = vunpack.c.l.b16 %v2096
      %v2728 = vunpack.c.h.b16 %v2096
      %v2729 = vunpack.c.l.b16 %v2097
      %v2730 = vunpack.c.h.b16 %v2097
      %v2731 = vunpack.c.l.b16 %v2098
      %v2732 = vunpack.c.h.b16 %v2098
      %v2733 = vunpack.c.l.b16 %v2099
      %v2734 = vunpack.c.h.b16 %v2099
      %v2735 = vunpack.c.l.b16 %v2100
      %v2736 = vunpack.c.h.b16 %v2100
      %v2737 = vunpack.c.l.b16 %v2101
      %v2738 = vunpack.c.h.b16 %v2101
      %v2739 = vunpack.c.l.b16 %v2102
      %v2740 = vunpack.c.h.b16 %v2102
      %v2741 = vunpack.c.l.b16 %v2103
      %v2742 = vunpack.c.h.b16 %v2103
      %v2743 = vunpack.c.l.b16 %v2104
      %v2744 = vunpack.c.h.b16 %v2104
      %v2745 = vunpack.c.l.b16 %v2105
      %v2746 = vunpack.c.h.b16 %v2105
      %v2747 = vunpack.c.l.b16 %v2106
      %v2748 = vunpack.c.h.b16 %v2106
      %v2749 = vunpack.c.l.b16 %v2107
      %v2750 = vunpack.c.h.b16 %v2107
      %v2751 = vunpack.c.l.b16 %v2108
      %v2752 = vunpack.c.h.b16 %v2108
      %v2753 = vunpack.c.l.b16 %v2109
      %v2754 = vunpack.c.h.b16 %v2109
      %v2755 = vunpack.c.l.b16 %v2110
      %v2756 = vunpack.c.h.b16 %v2110
      %v2757 = vunpack.c.l.b16 %v2111
      %v2758 = vunpack.c.h.b16 %v2111
      %v2759 = vunpack.c.l.b16 %v2112
      %v2760 = vunpack.c.h.b16 %v2112
      %v2761 = vunpack.c.l.b16 %v2113
      %v2762 = vunpack.c.h.b16 %v2113
      %v2763 = vunpack.c.l.b16 %v2114
      %v2764 = vunpack.c.h.b16 %v2114
      %v2765 = vunpack.c.l.b16 %v2115
      %v2766 = vunpack.c.h.b16 %v2115
      %v2767 = vunpack.c.l.b16 %v2116
      %v2768 = vunpack.c.h.b16 %v2116
      %v2769 = vunpack.c.l.b16 %v2117
      %v2770 = vunpack.c.h.b16 %v2117
      %v2771 = vunpack.c.l.b16 %v2118
      %v2772 = vunpack.c.h.b16 %v2118
      %v2773 = vunpack.c.l.b16 %v2119
      %v2774 = vunpack.c.h.b16 %v2119
      %v2775 = vunpack.c.l.b16 %v2120
      %v2776 = vunpack.c.h.b16 %v2120
      %v2777 = vunpack.c.l.b16 %v2121
      %v2778 = vunpack.c.h.b16 %v2121
      %v2779 = vunpack.c.l.b16 %v2122
      %v2780 = vunpack.c.h.b16 %v2122
      %v2781 = vunpack.c.l.b16 %v2123
      %v2782 = vunpack.c.h.b16 %v2123
      %v2783 = vunpack.c.l.b16 %v2124
      %v2784 = vunpack.c.h.b16 %v2124
      %v2785 = vunpack.c.l.b16 %v2125
      %v2786 = vunpack.c.h.b16 %v2125
      %v2787 = vunpack.c.l.b16 %v2126
      %v2788 = vunpack.c.h.b16 %v2126
      %v2789 = vunpack.c.l.b16 %v2127
      %v2790 = vunpack.c.h.b16 %v2127
      %v2791 = vunpack.c.l.b16 %v2128
      %v2792 = vunpack.c.h.b16 %v2128
      %v2793 = vunpack.c.l.b16 %v2129
      %v2794 = vunpack.c.h.b16 %v2129
      %v2795 = vunpack.c.l.b16 %v2130
      %v2796 = vunpack.c.h.b16 %v2130
      %v2797 = vunpack.c.l.b16 %v2131
      %v2798 = vunpack.c.h.b16 %v2131
      %v2799 = vunpack.c.l.b16 %v2132
      %v2800 = vunpack.c.h.b16 %v2132
      %v2801 = vunpack.c.l.b16 %v2133
      %v2802 = vunpack.c.h.b16 %v2133
      %v2803 = vunpack.c.l.b16 %v2134
      %v2804 = vunpack.c.h.b16 %v2134
      %v2805 = vunpack.c.l.b16 %v2135
      %v2806 = vunpack.c.h.b16 %v2135
      %v2807 = vunpack.c.l.b16 %v2136
      %v2808 = vunpack.c.h.b16 %v2136
      %v2809 = vunpack.c.l.b16 %v2137
      %v2810 = vunpack.c.h.b16 %v2137
      %v2811 = vunpack.c.l.b16 %v2138
      %v2812 = vunpack.c.h.b16 %v2138
      %v2813 = vunpack.c.l.b16 %v2139
      %v2814 = vunpack.c.h.b16 %v2139
      %v2815 = vunpack.c.l.b16 %v2140
      %v2816 = vunpack.c.h.b16 %v2140
      %v2817 = vunpack.c.l.b16 %v2141
      %v2818 = vunpack.c.h.b16 %v2141
      %v2819 = vunpack.c.l.b16 %v2142
      %v2820 = vunpack.c.h.b16 %v2142
      %v2821 = vunpack.c.l.b16 %v2143
      %v2822 = vunpack.c.h.b16 %v2143
      %v2823 = vunpack.c.l.b16 %v2144
      %v2824 = vunpack.c.h.b16 %v2144
      %v2825 = vunpack.c.l.b16 %v2145
      %v2826 = vunpack.c.h.b16 %v2145
      %v2827 = vunpack.c.l.b16 %v2146
      %v2828 = vunpack.c.h.b16 %v2146
      %v2829 = vunpack.c.l.b16 %v2147
      %v2830 = vunpack.c.h.b16 %v2147
      %v2831 = vunpack.c.l.b16 %v2148
      %v2832 = vunpack.c.h.b16 %v2148
      %v2833 = vunpack.c.l.b16 %v2149
      %v2834 = vunpack.c.h.b16 %v2149
      %v2835 = vunpack.c.l.b16 %v2150
      %v2836 = vunpack.c.h.b16 %v2150
      %v2837 = vunpack.c.l.b16 %v2151
      %v2838 = vunpack.c.h.b16 %v2151
      %v2839 = vunpack.c.l.b16 %v2152
      %v2840 = vunpack.c.h.b16 %v2152
      %v2841 = vunpack.c.l.b16 %v2153
      %v2842 = vunpack.c.h.b16 %v2153
      %v2843 = vunpack.c.l.b16 %v2154
      %v2844 = vunpack.c.h.b16 %v2154
      %v2845 = vunpack.c.l.b16 %v2155
      %v2846 = vunpack.c.h.b16 %v2155
      %v2847 = vunpack.c.l.b16 %v2156
      %v2848 = vunpack.c.h.b16 %v2156
      %v2849 = vunpack.c.l.b16 %v2157
      %v2850 = vunpack.c.h.b16 %v2157
      %v2851 = vunpack.c.l.b16 %v2158
      %v2852 = vunpack.c.h.b16 %v2158
      %v2853 = vunpack.c.l.b16 %v2159
      %v2854 = vunpack.c.h.b16 %v2159
      %v2855 = vunpack.c.l.b16 %v2160
      %v2856 = vunpack.c.h.b16 %v2160
      %v2857 = vunpack.c.l.b16 %v2161
      %v2858 = vunpack.c.h.b16 %v2161
      %v2859 = vunpack.c.l.b16 %v2162
      %v2860 = vunpack.c.h.b16 %v2162
      %v2861 = vunpack.c.l.b16 %v2163
      %v2862 = vunpack.c.h.b16 %v2163
      %v2863 = vunpack.c.l.b16 %v2164
      %v2864 = vunpack.c.h.b16 %v2164
      %v2865 = vunpack.c.l.b16 %v2165
      %v2866 = vunpack.c.h.b16 %v2165
      %v2867 = vunpack.c.l.b16 %v2166
      %v2868 = vunpack.c.h.b16 %v2166
      %v2869 = vunpack.c.l.b16 %v2167
      %v2870 = vunpack.c.h.b16 %v2167
      %v2871 = vunpack.c.l.b16 %v2168
      %v2872 = vunpack.c.h.b16 %v2168
      %v2873 = vunpack.c.l.b16 %v2169
      %v2874 = vunpack.c.h.b16 %v2169
      %v2875 = vunpack.c.l.b16 %v2170
      %v2876 = vunpack.c.h.b16 %v2170
      %v2877 = vunpack.c.l.b16 %v2171
      %v2878 = vunpack.c.h.b16 %v2171
      %v2879 = vunpack.c.l.b16 %v2172
      %v2880 = vunpack.c.h.b16 %v2172
      %v2881 = vunpack.c.l.b16 %v2173
      %v2882 = vunpack.c.h.b16 %v2173
      %v2883 = vunpack.c.l.b16 %v2174
      %v2884 = vunpack.c.h.b16 %v2174
      %v2885 = vunpack.c.l.b16 %v2175
      %v2886 = vunpack.c.h.b16 %v2175
      %v2887 = vunpack.c.l.b16 %v2176
      %v2888 = vunpack.c.h.b16 %v2176
      %v2889 = vunpack.c.l.b16 %v2177
      %v2890 = vunpack.c.h.b16 %v2177
      %v2891 = vunpack.c.l.b16 %v2178
      %v2892 = vunpack.c.h.b16 %v2178
      %v2893 = vunpack.c.l.b16 %v2179
      %v2894 = vunpack.c.h.b16 %v2179
      %v2895 = vunpack.c.l.b16 %v2180
      %v2896 = vunpack.c.h.b16 %v2180
      %v2897 = vunpack.c.l.b16 %v2181
      %v2898 = vunpack.c.h.b16 %v2181
      %v2899 = vunpack.c.l.b16 %v2182
      %v2900 = vunpack.c.h.b16 %v2182
      %v2901 = vunpack.c.l.b16 %v2183
      %v2902 = vunpack.c.h.b16 %v2183
      %v2903 = vunpack.c.l.b16 %v2184
      %v2904 = vunpack.c.h.b16 %v2184
      %v2905 = vunpack.c.l.b16 %v2185
      %v2906 = vunpack.c.h.b16 %v2185
      %v2907 = vunpack.c.l.b16 %v2186
      %v2908 = vunpack.c.h.b16 %v2186
      %v2909 = vunpack.c.l.b16 %v2187
      %v2910 = vunpack.c.h.b16 %v2187
      %v2911 = vunpack.c.l.b16 %v2188
      %v2912 = vunpack.c.h.b16 %v2188
      %v2913 = vunpack.c.l.b16 %v2189
      %v2914 = vunpack.c.h.b16 %v2189
      %v2915 = vunpack.c.l.b16 %v2190
      %v2916 = vunpack.c.h.b16 %v2190
      %v2917 = vunpack.c.l.b16 %v2191
      %v2918 = vunpack.c.h.b16 %v2191
      %v2919 = vunpack.c.l.b16 %v2192
      %v2920 = vunpack.c.h.b16 %v2192
      %v2921 = vunpack.c.l.b16 %v2193
      %v2922 = vunpack.c.h.b16 %v2193
      %v2923 = vunpack.c.l.b16 %v2194
      %v2924 = vunpack.c.h.b16 %v2194
      %v2925 = vunpack.c.l.b16 %v2195
      %v2926 = vunpack.c.h.b16 %v2195
      %v2927 = vunpack.c.l.b16 %v2196
      %v2928 = vunpack.c.h.b16 %v2196
      %v2929 = vunpack.c.l.b16 %v2197
      %v2930 = vunpack.c.h.b16 %v2197
      %v2931 = vunpack.c.l.b16 %v2198
      %v2932 = vunpack.c.h.b16 %v2198
      %v2933 = vunpack.c.l.b16 %v2199
      %v2934 = vunpack.c.h.b16 %v2199
      %v2935 = vunpack.c.l.b16 %v2200
      %v2936 = vunpack.c.h.b16 %v2200
      %v2937 = vunpack.c.l.b16 %v2201
      %v2938 = vunpack.c.h.b16 %v2201
      %v2939 = vunpack.c.l.b16 %v2202
      %v2940 = vunpack.c.h.b16 %v2202
      %v2941 = vunpack.c.l.b16 %v2203
      %v2942 = vunpack.c.h.b16 %v2203
      %v2943 = vunpack.c.l.b16 %v2204
      %v2944 = vunpack.c.h.b16 %v2204
      %v2945 = vunpack.c.l.b16 %v2205
      %v2946 = vunpack.c.h.b16 %v2205
      %v2947 = vunpack.c.l.b16 %v2206
      %v2948 = vunpack.c.h.b16 %v2206
      %v2949 = vunpack.c.l.b16 %v2207
      %v2950 = vunpack.c.h.b16 %v2207
      %v2951 = vunpack.c.l.b16 %v2208
      %v2952 = vunpack.c.h.b16 %v2208
      %v2953 = vunpack.c.l.b16 %v2209
      %v2954 = vunpack.c.h.b16 %v2209
      %v2955 = vunpack.c.l.b16 %v2210
      %v2956 = vunpack.c.h.b16 %v2210
      %v2957 = vunpack.c.l.b16 %v2211
      %v2958 = vunpack.c.h.b16 %v2211
      %v2959 = vunpack.c.l.b16 %v2212
      %v2960 = vunpack.c.h.b16 %v2212
      %v2961 = vunpack.c.l.b16 %v2213
      %v2962 = vunpack.c.h.b16 %v2213
      %v2963 = vunpack.c.l.b16 %v2214
      %v2964 = vunpack.c.h.b16 %v2214
      %v2965 = vunpack.c.l.b16 %v2215
      %v2966 = vunpack.c.h.b16 %v2215
      %v2967 = vunpack.c.l.b16 %v2216
      %v2968 = vunpack.c.h.b16 %v2216
      %v2969 = vunpack.c.l.b16 %v2217
      %v2970 = vunpack.c.h.b16 %v2217
      %v2971 = vunpack.c.l.b16 %v2218
      %v2972 = vunpack.c.h.b16 %v2218
      %v2973 = vunpack.c.l.b16 %v2219
      %v2974 = vunpack.c.h.b16 %v2219
      %v2975 = vunpack.c.l.b16 %v2220
      %v2976 = vunpack.c.h.b16 %v2220
      %v2977 = vunpack.c.l.b16 %v2221
      %v2978 = vunpack.c.h.b16 %v2221
      %v2979 = vunpack.c.l.b16 %v2222
      %v2980 = vunpack.c.h.b16 %v2222
      %v2981 = vunpack.c.l.b16 %v2223
      %v2982 = vunpack.c.h.b16 %v2223
      %v2983 = vunpack.c.l.b16 %v2224
      %v2984 = vunpack.c.h.b16 %v2224
      %v2985 = vunpack.c.l.b16 %v2225
      %v2986 = vunpack.c.h.b16 %v2225
      %v2987 = vunpack.c.l.b16 %v2226
      %v2988 = vunpack.c.h.b16 %v2226
      %v2989 = vunpack.c.l.b16 %v2227
      %v2990 = vunpack.c.h.b16 %v2227
      %v2991 = vunpack.c.l.b16 %v2228
      %v2992 = vunpack.c.h.b16 %v2228
      %v2993 = vunpack.c.l.b16 %v2229
      %v2994 = vunpack.c.h.b16 %v2229
      %v2995 = vunpack.c.l.b16 %v2230
      %v2996 = vunpack.c.h.b16 %v2230
      %v2997 = vunpack.c.l.b16 %v2231
      %v2998 = vunpack.c.h.b16 %v2231
      %v2999 = vunpack.c.l.b16 %v2232
      %v3000 = vunpack.c.h.b16 %v2232
      %v3001 = vunpack.c.l.b16 %v2233
      %v3002 = vunpack.c.h.b16 %v2233
      %v3003 = vunpack.c.l.b16 %v2234
      %v3004 = vunpack.c.h.b16 %v2234
      %v3005 = vunpack.c.l.b16 %v2235
      %v3006 = vunpack.c.h.b16 %v2235
      %v3007 = vunpack.c.l.b16 %v2236
      %v3008 = vunpack.c.h.b16 %v2236
      %v3009 = vunpack.c.l.b16 %v2237
      %v3010 = vunpack.c.h.b16 %v2237
      %v3011 = vunpack.c.l.b16 %v2238
      %v3012 = vunpack.c.h.b16 %v2238
      %v3013 = vunpack.c.l.b16 %v2239
      %v3014 = vunpack.c.h.b16 %v2239
      %v3015 = vunpack.c.l.b16 %v2240
      %v3016 = vunpack.c.h.b16 %v2240
      %v3017 = vunpack.c.l.b16 %v2241
      %v3018 = vunpack.c.h.b16 %v2241
      %v3019 = vunpack.c.l.b16 %v2242
      %v3020 = vunpack.c.h.b16 %v2242
      %v3021 = vunpack.c.l.b16 %v2243
      %v3022 = vunpack.c.h.b16 %v2243
      %v3023 = vunpack.c.l.b16 %v2244
      %v3024 = vunpack.c.h.b16 %v2244
      %v3025 = vunpack.c.l.b16 %v2245
      %v3026 = vunpack.c.h.b16 %v2245
      %v3027 = vunpack.c.l.b16 %v2246
      %v3028 = vunpack.c.h.b16 %v2246
      %v3029 = vunpack.c.l.b16 %v2247
      %v3030 = vunpack.c.h.b16 %v2247
      %v3031 = vunpack.c.l.b16 %v2248
      %v3032 = vunpack.c.h.b16 %v2248
      %v3033 = vunpack.c.l.b16 %v2249
      %v3034 = vunpack.c.h.b16 %v2249
      %v3035 = vunpack.c.l.b16 %v2250
      %v3036 = vunpack.c.h.b16 %v2250
      %v3037 = vunpack.c.l.b16 %v2251
      %v3038 = vunpack.c.h.b16 %v2251
      %v3039 = vunpack.c.l.b16 %v2252
      %v3040 = vunpack.c.h.b16 %v2252
      %v3041 = vunpack.c.l.b16 %v2253
      %v3042 = vunpack.c.h.b16 %v2253
      %v3043 = vunpack.c.l.b16 %v2254
      %v3044 = vunpack.c.h.b16 %v2254
      %v3045 = vpack.c.b16 %v2537, %v2533
      %v3046 = vpack.c.b16 %v2538, %v2534
      %v3047 = vpack.c.b16 %v2539, %v2535
      %v3048 = vpack.c.b16 %v2540, %v2536
      %v3049 = vpack.c.b16 %v2545, %v2541
      %v3050 = vpack.c.b16 %v2546, %v2542
      %v3051 = vpack.c.b16 %v2547, %v2543
      %v3052 = vpack.c.b16 %v2548, %v2544
      %v3053 = vpack.c.b16 %v2553, %v2549
      %v3054 = vpack.c.b16 %v2554, %v2550
      %v3055 = vpack.c.b16 %v2555, %v2551
      %v3056 = vpack.c.b16 %v2556, %v2552
      %v3057 = vpack.c.b16 %v2561, %v2557
      %v3058 = vpack.c.b16 %v2562, %v2558
      %v3059 = vpack.c.b16 %v2563, %v2559
      %v3060 = vpack.c.b16 %v2564, %v2560
      %v3061 = vpack.c.b16 %v2569, %v2565
      %v3062 = vpack.c.b16 %v2570, %v2566
      %v3063 = vpack.c.b16 %v2571, %v2567
      %v3064 = vpack.c.b16 %v2572, %v2568
      %v3065 = vpack.c.b16 %v2577, %v2573
      %v3066 = vpack.c.b16 %v2578, %v2574
      %v3067 = vpack.c.b16 %v2579, %v2575
      %v3068 = vpack.c.b16 %v2580, %v2576
      %v3069 = vpack.c.b16 %v2585, %v2581
      %v3070 = vpack.c.b16 %v2586, %v2582
      %v3071 = vpack.c.b16 %v2587, %v2583
      %v3072 = vpack.c.b16 %v2588, %v2584
      %v3073 = vpack.c.b16 %v2593, %v2589
      %v3074 = vpack.c.b16 %v2594, %v2590
      %v3075 = vpack.c.b16 %v2595, %v2591
      %v3076 = vpack.c.b16 %v2596, %v2592
      %v3077 = vpack.c.b16 %v2601, %v2597
      %v3078 = vpack.c.b16 %v2602, %v2598
      %v3079 = vpack.c.b16 %v2603, %v2599
      %v3080 = vpack.c.b16 %v2604, %v2600
      %v3081 = vpack.c.b16 %v2609, %v2605
      %v3082 = vpack.c.b16 %v2610, %v2606
      %v3083 = vpack.c.b16 %v2611, %v2607
      %v3084 = vpack.c.b16 %v2612, %v2608
      %v3085 = vpack.c.b16 %v2617, %v2613
      %v3086 = vpack.c.b16 %v2618, %v2614
      %v3087 = vpack.c.b16 %v2619, %v2615
      %v3088 = vpack.c.b16 %v2620, %v2616
      %v3089 = vpack.c.b16 %v2625, %v2621
      %v3090 = vpack.c.b16 %v2626, %v2622
      %v3091 = vpack.c.b16 %v2627, %v2623
      %v3092 = vpack.c.b16 %v2628, %v2624
      %v3093 = vpack.c.b16 %v2633, %v2629
      %v3094 = vpack.c.b16 %v2634, %v2630
      %v3095 = vpack.c.b16 %v2635, %v2631
      %v3096 = vpack.c.b16 %v2636, %v2632
      %v3097 = vpack.c.b16 %v2641, %v2637
      %v3098 = vpack.c.b16 %v2642, %v2638
      %v3099 = vpack.c.b16 %v2643, %v2639
      %v3100 = vpack.c.b16 %v2644, %v2640
      %v3101 = vpack.c.b16 %v2649, %v2645
      %v3102 = vpack.c.b16 %v2650, %v2646
      %v3103 = vpack.c.b16 %v2651, %v2647
      %v3104 = vpack.c.b16 %v2652, %v2648
      %v3105 = vpack.c.b16 %v2657, %v2653
      %v3106 = vpack.c.b16 %v2658, %v2654
      %v3107 = vpack.c.b16 %v2659, %v2655
      %v3108 = vpack.c.b16 %v2660, %v2656
      %v3109 = vpack.c.b16 %v2665, %v2661
      %v3110 = vpack.c.b16 %v2666, %v2662
      %v3111 = vpack.c.b16 %v2667, %v2663
      %v3112 = vpack.c.b16 %v2668, %v2664
      %v3113 = vpack.c.b16 %v2673, %v2669
      %v3114 = vpack.c.b16 %v2674, %v2670
      %v3115 = vpack.c.b16 %v2675, %v2671
      %v3116 = vpack.c.b16 %v2676, %v2672
      %v3117 = vpack.c.b16 %v2681, %v2677
      %v3118 = vpack.c.b16 %v2682, %v2678
      %v3119 = vpack.c.b16 %v2683, %v2679
      %v3120 = vpack.c.b16 %v2684, %v2680
      %v3121 = vpack.c.b16 %v2689, %v2685
      %v3122 = vpack.c.b16 %v2690, %v2686
      %v3123 = vpack.c.b16 %v2691, %v2687
      %v3124 = vpack.c.b16 %v2692, %v2688
      %v3125 = vpack.c.b16 %v2697, %v2693
      %v3126 = vpack.c.b16 %v2698, %v2694
      %v3127 = vpack.c.b16 %v2699, %v2695
      %v3128 = vpack.c.b16 %v2700, %v2696
      %v3129 = vpack.c.b16 %v2705, %v2701
      %v3130 = vpack.c.b16 %v2706, %v2702
      %v3131 = vpack.c.b16 %v2707, %v2703
      %v3132 = vpack.c.b16 %v2708, %v2704
      %v3133 = vpack.c.b16 %v2713, %v2709
      %v3134 = vpack.c.b16 %v2714, %v2710
      %v3135 = vpack.c.b16 %v2715, %v2711
      %v3136 = vpack.c.b16 %v2716, %v2712
      %v3137 = vpack.c.b16 %v2721, %v2717
      %v3138 = vpack.c.b16 %v2722, %v2718
      %v3139 = vpack.c.b16 %v2723, %v2719
      %v3140 = vpack.c.b16 %v2724, %v2720
      %v3141 = vpack.c.b16 %v2729, %v2725
      %v3142 = vpack.c.b16 %v2730, %v2726
      %v3143 = vpack.c.b16 %v2731, %v2727
      %v3144 = vpack.c.b16 %v2732, %v2728
      %v3145 = vpack.c.b16 %v2737, %v2733
      %v3146 = vpack.c.b16 %v2738, %v2734
      %v3147 = vpack.c.b16 %v2739, %v2735
      %v3148 = vpack.c.b16 %v2740, %v2736
      %v3149 = vpack.c.b16 %v2745, %v2741
      %v3150 = vpack.c.b16 %v2746, %v2742
      %v3151 = vpack.c.b16 %v2747, %v2743
      %v3152 = vpack.c.b16 %v2748, %v2744
      %v3153 = vpack.c.b16 %v2753, %v2749
      %v3154 = vpack.c.b16 %v2754, %v2750
      %v3155 = vpack.c.b16 %v2755, %v2751
      %v3156 = vpack.c.b16 %v2756, %v2752
      %v3157 = vpack.c.b16 %v2761, %v2757
      %v3158 = vpack.c.b16 %v2762, %v2758
      %v3159 = vpack.c.b16 %v2763, %v2759
      %v3160 = vpack.c.b16 %v2764, %v2760
      %v3161 = vpack.c.b16 %v2769, %v2765
      %v3162 = vpack.c.b16 %v2770, %v2766
      %v3163 = vpack.c.b16 %v2771, %v2767
      %v3164 = vpack.c.b16 %v2772, %v2768
      %v3165 = vpack.c.b16 %v2777, %v2773
      %v3166 = vpack.c.b16 %v2778, %v2774
      %v3167 = vpack.c.b16 %v2779, %v2775
      %v3168 = vpack.c.b16 %v2780, %v2776
      %v3169 = vpack.c.b16 %v2785, %v2781
      %v3170 = vpack.c.b16 %v2786, %v2782
      %v3171 = vpack.c.b16 %v2787, %v2783
      %v3172 = vpack.c.b16 %v2788, %v2784
      %v3173 = vpack.c.b16 %v2793, %v2789
      %v3174 = vpack.c.b16 %v2794, %v2790
      %v3175 = vpack.c.b16 %v2795, %v2791
      %v3176 = vpack.c.b16 %v2796, %v2792
      %v3177 = vpack.c.b16 %v2801, %v2797
      %v3178 = vpack.c.b16 %v2802, %v2798
      %v3179 = vpack.c.b16 %v2803, %v2799
      %v3180 = vpack.c.b16 %v2804, %v2800
      %v3181 = vpack.c.b16 %v2809, %v2805
      %v3182 = vpack.c.b16 %v2810, %v2806
      %v3183 = vpack.c.b16 %v2811, %v2807
      %v3184 = vpack.c.b16 %v2812, %v2808
      %v3185 = vpack.c.b16 %v2817, %v2813
      %v3186 = vpack.c.b16 %v2818, %v2814
      %v3187 = vpack.c.b16 %v2819, %v2815
      %v3188 = vpack.c.b16 %v2820, %v2816
      %v3189 = vpack.c.b16 %v2825, %v2821
      %v3190 = vpack.c.b16 %v2826, %v2822
      %v3191 = vpack.c.b16 %v2827, %v2823
      %v3192 = vpack.c.b16 %v2828, %v2824
      %v3193 = vpack.c.b16 %v2833, %v2829
      %v3194 = vpack.c.b16 %v2834, %v2830
      %v3195 = vpack.c.b16 %v2835, %v2831
      %v3196 = vpack.c.b16 %v2836, %v2832
      %v3197 = vpack.c.b16 %v2841, %v2837
      %v3198 = vpack.c.b16 %v2842, %v2838
      %v3199 = vpack.c.b16 %v2843, %v2839
      %v3200 = vpack.c.b16 %v2844, %v2840
      %v3201 = vpack.c.b16 %v2849, %v2845
      %v3202 = vpack.c.b16 %v2850, %v2846
      %v3203 = vpack.c.b16 %v2851, %v2847
      %v3204 = vpack.c.b16 %v2852, %v2848
      %v3205 = vpack.c.b16 %v2857, %v2853
      %v3206 = vpack.c.b16 %v2858, %v2854
      %v3207 = vpack.c.b16 %v2859, %v2855
      %v3208 = vpack.c.b16 %v2860, %v2856
      %v3209 = vpack.c.b16 %v2865, %v2861
      %v3210 = vpack.c.b16 %v2866, %v2862
      %v3211 = vpack.c.b16 %v2867, %v2863
      %v3212 = vpack.c.b16 %v2868, %v2864
      %v3213 = vpack.c.b16 %v2873, %v2869
      %v3214 = vpack.c.b16 %v2874, %v2870
      %v3215 = vpack.c.b16 %v2875, %v2871
      %v3216 = vpack.c.b16 %v2876, %v2872
      %v3217 = vpack.c.b16 %v2881, %v2877
      %v3218 = vpack.c.b16 %v2882, %v2878
      %v3219 = vpack.c.b16 %v2883, %v2879
      %v3220 = vpack.c.b16 %v2884, %v2880
      %v3221 = vpack.c.b16 %v2889, %v2885
      %v3222 = vpack.c.b16 %v2890, %v2886
      %v3223 = vpack.c.b16 %v2891, %v2887
      %v3224 = vpack.c.b16 %v2892, %v2888
      %v3225 = vpack.c.b16 %v2897, %v2893
      %v3226 = vpack.c.b16 %v2898, %v2894
      %v3227 = vpack.c.b16 %v2899, %v2895
      %v3228 = vpack.c.b16 %v2900, %v2896
      %v3229 = vpack.c.b16 %v2905, %v2901
      %v3230 = vpack.c.b16 %v2906, %v2902
      %v3231 = vpack.c.b16 %v2907, %v2903
      %v3232 = vpack.c.b16 %v2908, %v2904
      %v3233 = vpack.c.b16 %v2913, %v2909
      %v3234 = vpack.c.b16 %v2914, %v2910
      %v3235 = vpack.c.b16 %v2915, %v2911
      %v3236 = vpack.c.b16 %v2916, %v2912
      %v3237 = vpack.c.b16 %v2921, %v2917
      %v3238 = vpack.c.b16 %v2922, %v2918
      %v3239 = vpack.c.b16 %v2923, %v2919
      %v3240 = vpack.c.b16 %v2924, %v2920
      %v3241 = vpack.c.b16 %v2929, %v2925
      %v3242 = vpack.c.b16 %v2930, %v2926
      %v3243 = vpack.c.b16 %v2931, %v2927
      %v3244 = vpack.c.b16 %v2932, %v2928
      %v3245 = vpack.c.b16 %v2937, %v2933
      %v3246 = vpack.c.b16 %v2938, %v2934
      %v3247 = vpack.c.b16 %v2939, %v2935
      %v3248 = vpack.c.b16 %v2940, %v2936
      %v3249 = vpack.c.b16 %v2945, %v2941
      %v3250 = vpack.c.b16 %v2946, %v2942
      %v3251 = vpack.c.b16 %v2947, %v2943
      %v3252 = vpack.c.b16 %v2948, %v2944
      %v3253 = vpack.c.b16 %v2953, %v2949
      %v3254 = vpack.c.b16 %v2954, %v2950
      %v3255 = vpack.c.b16 %v2955, %v2951
      %v3256 = vpack.c.b16 %v2956, %v2952
      %v3257 = vpack.c.b16 %v2961, %v2957
      %v3258 = vpack.c.b16 %v2962, %v2958
      %v3259 = vpack.c.b16 %v2963, %v2959
      %v3260 = vpack.c.b16 %v2964, %v2960
      %v3261 = vpack.c.b16 %v2969, %v2965
      %v3262 = vpack.c.b16 %v2970, %v2966
      %v3263 = vpack.c.b16 %v2971, %v2967
      %v3264 = vpack.c.b16 %v2972, %v2968
      %v3265 = vpack.c.b16 %v2977, %v2973
      %v3266 = vpack.c.b16 %v2978, %v2974
      %v3267 = vpack.c.b16 %v2979, %v2975
      %v3268 = vpack.c.b16 %v2980, %v2976
      %v3269 = vpack.c.b16 %v2985, %v2981
      %v3270 = vpack.c.b16 %v2986, %v2982
      %v3271 = vpack.c.b16 %v2987, %v2983
      %v3272 = vpack.c.b16 %v2988, %v2984
      %v3273 = vpack.c.b16 %v2993, %v2989
      %v3274 = vpack.c.b16 %v2994, %v2990
      %v3275 = vpack.c.b16 %v2995, %v2991
      %v3276 = vpack.c.b16 %v2996, %v2992
      %v3277 = vpack.c.b16 %v3001, %v2997
      %v3278 = vpack.c.b16 %v3002, %v2998
      %v3279 = vpack.c.b16 %v3003, %v2999
      %v3280 = vpack.c.b16 %v3004, %v3000
      %v3281 = vpack.c.b16 %v3009, %v3005
      %v3282 = vpack.c.b16 %v3010, %v3006
      %v3283 = vpack.c.b16 %v3011, %v3007
      %v3284 = vpack.c.b16 %v3012, %v3008
      %v3285 = vpack.c.b16 %v3017, %v3013
      %v3286 = vpack.c.b16 %v3018, %v3014
      %v3287 = vpack.c.b16 %v3019, %v3015
      %v3288 = vpack.c.b16 %v3020, %v3016
      %v3289 = vpack.c.b16 %v3025, %v3021
      %v3290 = vpack.c.b16 %v3026, %v3022
      %v3291 = vpack.c.b16 %v3027, %v3023
      %v3292 = vpack.c.b16 %v3028, %v3024
      %v3293 = vpack.c.b16 %v3033, %v3029
      %v3294 = vpack.c.b16 %v3034, %v3030
      %v3295 = vpack.c.b16 %v3035, %v3031
      %v3296 = vpack.c.b16 %v3036, %v3032
      %v3297 = vpack.c.b16 %v3041, %v3037
      %v3298 = vpack.c.b16 %v3042, %v3038
      %v3299 = vpack.c.b16 %v3043, %v3039
      %v3300 = vpack.c.b16 %v3044, %v3040
      %3557 = vmatprep.subr.bf16.mxu0 %v3046
      %3558 = vmatpush1.bf16.msra.mxu0 %v3045
      %3559 = vmatprep.subr.bf16.mxu0 %v3050
      %3560 = vmatpush1.bf16.msra.mxu0 %v3049
      %3561 = vmatprep.subr.bf16.mxu0 %v3054
      %3562 = vmatpush1.bf16.msra.mxu0 %v3053
      %3563 = vmatprep.subr.bf16.mxu0 %v3058
      %3564 = vmatpush1.bf16.msra.mxu0 %v3057
      %3565 = vmatprep.subr.bf16.mxu0 %v3062
      %3566 = vmatpush1.bf16.msra.mxu0 %v3061
      %3567 = vmatprep.subr.bf16.mxu0 %v3066
      %3568 = vmatpush1.bf16.msra.mxu0 %v3065
      %3569 = vmatprep.subr.bf16.mxu0 %v3070
      %3570 = vmatpush1.bf16.msra.mxu0 %v3069
      %3571 = vmatprep.subr.bf16.mxu0 %v3074
      %3572 = vmatpush1.bf16.msra.mxu0 %v3073
      %3573 = vmatprep.subr.bf16.mxu0 %v3078
      %3574 = vmatpush1.bf16.msra.mxu0 %v3077
      %3575 = vmatprep.subr.bf16.mxu0 %v3082
      %3576 = vmatpush1.bf16.msra.mxu0 %v3081
      %3577 = vmatprep.subr.bf16.mxu0 %v3086
      %3578 = vmatpush1.bf16.msra.mxu0 %v3085
      %3579 = vmatprep.subr.bf16.mxu0 %v3090
      %3580 = vmatpush1.bf16.msra.mxu0 %v3089
      %3581 = vmatprep.subr.bf16.mxu0 %v3094
      %3582 = vmatpush1.bf16.msra.mxu0 %v3093
      %3583 = vmatprep.subr.bf16.mxu0 %v3098
      %3584 = vmatpush1.bf16.msra.mxu0 %v3097
      %3585 = vmatprep.subr.bf16.mxu0 %v3102
      %3586 = vmatpush1.bf16.msra.mxu0 %v3101
      %3587 = vmatprep.subr.bf16.mxu0 %v3106
      %3588 = vmatpush1.bf16.msra.mxu0 %v3105
      %3589 = vmatprep.mubr.bf16.mxu0 %v1992
      %3590 = vmatmul.mubr.bf16.gmra.mrb[0].mxu0 %v1991
      %v3591 = vpop.f32.mrb[0].mxu0
      %v3592 = vadd.f32 %v2260, %v3591
      %v3593 = vpop.f32.mrb[0].mxu0
      %v3594 = vadd.f32 %v2264, %v3593
      %v3595 = vpop.f32.mrb[0].mxu0
      %v3596 = vpop.f32.mrb[0].mxu0
      %3597 = vdwg.mxu0
      %3598 = vmatprep.subr.bf16.mxu0 %v3110
      %3599 = vmatpush1.bf16.msra.mxu0 %v3109
      %3600 = vmatprep.subr.bf16.mxu0 %v3114
      %3601 = vmatpush1.bf16.msra.mxu0 %v3113
      %3602 = vmatprep.subr.bf16.mxu0 %v3118
      %3603 = vmatpush1.bf16.msra.mxu0 %v3117
      %3604 = vmatprep.subr.bf16.mxu0 %v3122
      %3605 = vmatpush1.bf16.msra.mxu0 %v3121
      %3606 = vmatprep.subr.bf16.mxu0 %v3126
      %3607 = vmatpush1.bf16.msra.mxu0 %v3125
      %3608 = vmatprep.subr.bf16.mxu0 %v3130
      %3609 = vmatpush1.bf16.msra.mxu0 %v3129
      %3610 = vmatprep.subr.bf16.mxu0 %v3134
      %3611 = vmatpush1.bf16.msra.mxu0 %v3133
      %3612 = vmatprep.subr.bf16.mxu0 %v3138
      %3613 = vmatpush1.bf16.msra.mxu0 %v3137
      %3614 = vmatprep.subr.bf16.mxu0 %v3142
      %3615 = vmatpush1.bf16.msra.mxu0 %v3141
      %3616 = vmatprep.subr.bf16.mxu0 %v3146
      %3617 = vmatpush1.bf16.msra.mxu0 %v3145
      %3618 = vmatprep.subr.bf16.mxu0 %v3150
      %3619 = vmatpush1.bf16.msra.mxu0 %v3149
      %3620 = vmatprep.subr.bf16.mxu0 %v3154
      %3621 = vmatpush1.bf16.msra.mxu0 %v3153
      %3622 = vmatprep.subr.bf16.mxu0 %v3158
      %3623 = vmatpush1.bf16.msra.mxu0 %v3157
      %3624 = vmatprep.subr.bf16.mxu0 %v3162
      %3625 = vmatpush1.bf16.msra.mxu0 %v3161
      %3626 = vmatprep.subr.bf16.mxu0 %v3166
      %3627 = vmatpush1.bf16.msra.mxu0 %v3165
      %3628 = vmatprep.subr.bf16.mxu0 %v3170
      %3629 = vmatpush1.bf16.msra.mxu0 %v3169
      %3630 = vmatprep.mubr.bf16.mxu0 %v1994
      %3631 = vmatmul.mubr.bf16.gmra.mrb[0].mxu0 %v1993
      %v3632 = vpop.f32.mrb[0].mxu0
      %v3633 = vadd.f32 %v3592, %v3632
      %v3634 = vpop.f32.mrb[0].mxu0
      %v3635 = vadd.f32 %v3594, %v3634
      %v3636 = vpop.f32.mrb[0].mxu0
      %v3637 = vpop.f32.mrb[0].mxu0
      %3638 = vdwg.mxu0
      %3639 = vmatprep.subr.bf16.mxu0 %v3174
      %3640 = vmatpush1.bf16.msra.mxu0 %v3173
      %3641 = vmatprep.subr.bf16.mxu0 %v3178
      %3642 = vmatpush1.bf16.msra.mxu0 %v3177
      %3643 = vmatprep.subr.bf16.mxu0 %v3182
      %3644 = vmatpush1.bf16.msra.mxu0 %v3181
      %3645 = vmatprep.subr.bf16.mxu0 %v3186
      %3646 = vmatpush1.bf16.msra.mxu0 %v3185
      %3647 = vmatprep.subr.bf16.mxu0 %v3190
      %3648 = vmatpush1.bf16.msra.mxu0 %v3189
      %3649 = vmatprep.subr.bf16.mxu0 %v3194
      %3650 = vmatpush1.bf16.msra.mxu0 %v3193
      %3651 = vmatprep.subr.bf16.mxu0 %v3198
      %3652 = vmatpush1.bf16.msra.mxu0 %v3197
      %3653 = vmatprep.subr.bf16.mxu0 %v3202
      %3654 = vmatpush1.bf16.msra.mxu0 %v3201
      %3655 = vmatprep.subr.bf16.mxu0 %v3206
      %3656 = vmatpush1.bf16.msra.mxu0 %v3205
      %3657 = vmatprep.subr.bf16.mxu0 %v3210
      %3658 = vmatpush1.bf16.msra.mxu0 %v3209
      %3659 = vmatprep.subr.bf16.mxu0 %v3214
      %3660 = vmatpush1.bf16.msra.mxu0 %v3213
      %3661 = vmatprep.subr.bf16.mxu0 %v3218
      %3662 = vmatpush1.bf16.msra.mxu0 %v3217
      %3663 = vmatprep.subr.bf16.mxu0 %v3222
      %3664 = vmatpush1.bf16.msra.mxu0 %v3221
      %3665 = vmatprep.subr.bf16.mxu0 %v3226
      %3666 = vmatpush1.bf16.msra.mxu0 %v3225
      %3667 = vmatprep.subr.bf16.mxu0 %v3230
      %3668 = vmatpush1.bf16.msra.mxu0 %v3229
      %3669 = vmatprep.subr.bf16.mxu0 %v3234
      %3670 = vmatpush1.bf16.msra.mxu0 %v3233
      %3671 = vmatprep.mubr.bf16.mxu0 %v1996
      %3672 = vmatmul.mubr.bf16.gmra.mrb[0].mxu0 %v1995
      %v3673 = vpop.f32.mrb[0].mxu0
      %v3674 = vadd.f32 %v3633, %v3673
      %v3675 = vpop.f32.mrb[0].mxu0
      %v3676 = vadd.f32 %v3635, %v3675
      %v3677 = vpop.f32.mrb[0].mxu0
      %v3678 = vpop.f32.mrb[0].mxu0
      %3679 = vdwg.mxu0
      %3680 = vmatprep.subr.bf16.mxu0 %v3238
      %3681 = vmatpush1.bf16.msra.mxu0 %v3237
      %3682 = vmatprep.subr.bf16.mxu0 %v3242
      %3683 = vmatpush1.bf16.msra.mxu0 %v3241
      %3684 = vmatprep.subr.bf16.mxu0 %v3246
      %3685 = vmatpush1.bf16.msra.mxu0 %v3245
      %3686 = vmatprep.subr.bf16.mxu0 %v3250
      %3687 = vmatpush1.bf16.msra.mxu0 %v3249
      %3688 = vmatprep.subr.bf16.mxu0 %v3254
      %3689 = vmatpush1.bf16.msra.mxu0 %v3253
      %3690 = vmatprep.subr.bf16.mxu0 %v3258
      %3691 = vmatpush1.bf16.msra.mxu0 %v3257
      %3692 = vmatprep.subr.bf16.mxu0 %v3262
      %3693 = vmatpush1.bf16.msra.mxu0 %v3261
      %3694 = vmatprep.subr.bf16.mxu0 %v3266
      %3695 = vmatpush1.bf16.msra.mxu0 %v3265
      %3696 = vmatprep.subr.bf16.mxu0 %v3270
      %3697 = vmatpush1.bf16.msra.mxu0 %v3269
      %3698 = vmatprep.subr.bf16.mxu0 %v3274
      %3699 = vmatpush1.bf16.msra.mxu0 %v3273
      %3700 = vmatprep.subr.bf16.mxu0 %v3278
      %3701 = vmatpush1.bf16.msra.mxu0 %v3277
      %3702 = vmatprep.subr.bf16.mxu0 %v3282
      %3703 = vmatpush1.bf16.msra.mxu0 %v3281
      %3704 = vmatprep.subr.bf16.mxu0 %v3286
      %3705 = vmatpush1.bf16.msra.mxu0 %v3285
      %3706 = vmatprep.subr.bf16.mxu0 %v3290
      %3707 = vmatpush1.bf16.msra.mxu0 %v3289
      %3708 = vmatprep.subr.bf16.mxu0 %v3294
      %3709 = vmatpush1.bf16.msra.mxu0 %v3293
      %3710 = vmatprep.subr.bf16.mxu0 %v3298
      %3711 = vmatpush1.bf16.msra.mxu0 %v3297
      %3712 = vmatprep.mubr.bf16.mxu0 %v1998
      %3713 = vmatmul.mubr.bf16.gmra.mrb[0].mxu0 %v1997
      %v3714 = vpop.f32.mrb[0].mxu0
      %v3715 = vadd.f32 %v3674, %v3714
      %v3716 = vpop.f32.mrb[0].mxu0
      %v3717 = vadd.f32 %v3676, %v3716
      %v3718 = vpop.f32.mrb[0].mxu0
      %v3719 = vpop.f32.mrb[0].mxu0
      %3720 = vdwg.mxu0
      %3721 = vmatprep.subr.bf16.mxu0 %v3048
      %3722 = vmatpush1.bf16.msra.mxu0 %v3047
      %3723 = vmatprep.subr.bf16.mxu0 %v3052
      %3724 = vmatpush1.bf16.msra.mxu0 %v3051
      %3725 = vmatprep.subr.bf16.mxu0 %v3056
      %3726 = vmatpush1.bf16.msra.mxu0 %v3055
      %3727 = vmatprep.subr.bf16.mxu0 %v3060
      %3728 = vmatpush1.bf16.msra.mxu0 %v3059
      %3729 = vmatprep.subr.bf16.mxu0 %v3064
      %3730 = vmatpush1.bf16.msra.mxu0 %v3063
      %3731 = vmatprep.subr.bf16.mxu0 %v3068
      %3732 = vmatpush1.bf16.msra.mxu0 %v3067
      %3733 = vmatprep.subr.bf16.mxu0 %v3072
      %3734 = vmatpush1.bf16.msra.mxu0 %v3071
      %3735 = vmatprep.subr.bf16.mxu0 %v3076
      %3736 = vmatpush1.bf16.msra.mxu0 %v3075
      %3737 = vmatprep.subr.bf16.mxu0 %v3080
      %3738 = vmatpush1.bf16.msra.mxu0 %v3079
      %3739 = vmatprep.subr.bf16.mxu0 %v3084
      %3740 = vmatpush1.bf16.msra.mxu0 %v3083
      %3741 = vmatprep.subr.bf16.mxu0 %v3088
      %3742 = vmatpush1.bf16.msra.mxu0 %v3087
      %3743 = vmatprep.subr.bf16.mxu0 %v3092
      %3744 = vmatpush1.bf16.msra.mxu0 %v3091
      %3745 = vmatprep.subr.bf16.mxu0 %v3096
      %3746 = vmatpush1.bf16.msra.mxu0 %v3095
      %3747 = vmatprep.subr.bf16.mxu0 %v3100
      %3748 = vmatpush1.bf16.msra.mxu0 %v3099
      %3749 = vmatprep.subr.bf16.mxu0 %v3104
      %3750 = vmatpush1.bf16.msra.mxu0 %v3103
      %3751 = vmatprep.subr.bf16.mxu0 %v3108
      %3752 = vmatpush1.bf16.msra.mxu0 %v3107
      %3753 = vmatprep.mubr.bf16.mxu0 %v1992
      %3754 = vmatmul.mubr.bf16.gmra.mrb[0].mxu0 %v1991
      %v3755 = vpop.f32.mrb[0].mxu0
      %v3756 = vadd.f32 %v2268, %v3755
      %v3757 = vpop.f32.mrb[0].mxu0
      %v3758 = vadd.f32 %v2272, %v3757
      %v3759 = vpop.f32.mrb[0].mxu0
      %v3760 = vpop.f32.mrb[0].mxu0
      %3761 = vdwg.mxu0
      %3762 = vmatprep.subr.bf16.mxu0 %v3112
      %3763 = vmatpush1.bf16.msra.mxu0 %v3111
      %3764 = vmatprep.subr.bf16.mxu0 %v3116
      %3765 = vmatpush1.bf16.msra.mxu0 %v3115
      %3766 = vmatprep.subr.bf16.mxu0 %v3120
      %3767 = vmatpush1.bf16.msra.mxu0 %v3119
      %3768 = vmatprep.subr.bf16.mxu0 %v3124
      %3769 = vmatpush1.bf16.msra.mxu0 %v3123
      %3770 = vmatprep.subr.bf16.mxu0 %v3128
      %3771 = vmatpush1.bf16.msra.mxu0 %v3127
      %3772 = vmatprep.subr.bf16.mxu0 %v3132
      %3773 = vmatpush1.bf16.msra.mxu0 %v3131
      %3774 = vmatprep.subr.bf16.mxu0 %v3136
      %3775 = vmatpush1.bf16.msra.mxu0 %v3135
      %3776 = vmatprep.subr.bf16.mxu0 %v3140
      %3777 = vmatpush1.bf16.msra.mxu0 %v3139
      %3778 = vmatprep.subr.bf16.mxu0 %v3144
      %3779 = vmatpush1.bf16.msra.mxu0 %v3143
      %3780 = vmatprep.subr.bf16.mxu0 %v3148
      %3781 = vmatpush1.bf16.msra.mxu0 %v3147
      %3782 = vmatprep.subr.bf16.mxu0 %v3152
      %3783 = vmatpush1.bf16.msra.mxu0 %v3151
      %3784 = vmatprep.subr.bf16.mxu0 %v3156
      %3785 = vmatpush1.bf16.msra.mxu0 %v3155
      %3786 = vmatprep.subr.bf16.mxu0 %v3160
      %3787 = vmatpush1.bf16.msra.mxu0 %v3159
      %3788 = vmatprep.subr.bf16.mxu0 %v3164
      %3789 = vmatpush1.bf16.msra.mxu0 %v3163
      %3790 = vmatprep.subr.bf16.mxu0 %v3168
      %3791 = vmatpush1.bf16.msra.mxu0 %v3167
      %3792 = vmatprep.subr.bf16.mxu0 %v3172
      %3793 = vmatpush1.bf16.msra.mxu0 %v3171
      %3794 = vmatprep.mubr.bf16.mxu0 %v1994
      %3795 = vmatmul.mubr.bf16.gmra.mrb[0].mxu0 %v1993
      %v3796 = vpop.f32.mrb[0].mxu0
      %v3797 = vadd.f32 %v3756, %v3796
      %v3798 = vpop.f32.mrb[0].mxu0
      %v3799 = vadd.f32 %v3758, %v3798
      %v3800 = vpop.f32.mrb[0].mxu0
      %v3801 = vpop.f32.mrb[0].mxu0
      %3802 = vdwg.mxu0
      %3803 = vmatprep.subr.bf16.mxu0 %v3176
      %3804 = vmatpush1.bf16.msra.mxu0 %v3175
      %3805 = vmatprep.subr.bf16.mxu0 %v3180
      %3806 = vmatpush1.bf16.msra.mxu0 %v3179
      %3807 = vmatprep.subr.bf16.mxu0 %v3184
      %3808 = vmatpush1.bf16.msra.mxu0 %v3183
      %3809 = vmatprep.subr.bf16.mxu0 %v3188
      %3810 = vmatpush1.bf16.msra.mxu0 %v3187
      %3811 = vmatprep.subr.bf16.mxu0 %v3192
      %3812 = vmatpush1.bf16.msra.mxu0 %v3191
      %3813 = vmatprep.subr.bf16.mxu0 %v3196
      %3814 = vmatpush1.bf16.msra.mxu0 %v3195
      %3815 = vmatprep.subr.bf16.mxu0 %v3200
      %3816 = vmatpush1.bf16.msra.mxu0 %v3199
      %3817 = vmatprep.subr.bf16.mxu0 %v3204
      %3818 = vmatpush1.bf16.msra.mxu0 %v3203
      %3819 = vmatprep.subr.bf16.mxu0 %v3208
      %3820 = vmatpush1.bf16.msra.mxu0 %v3207
      %3821 = vmatprep.subr.bf16.mxu0 %v3212
      %3822 = vmatpush1.bf16.msra.mxu0 %v3211
      %3823 = vmatprep.subr.bf16.mxu0 %v3216
      %3824 = vmatpush1.bf16.msra.mxu0 %v3215
      %3825 = vmatprep.subr.bf16.mxu0 %v3220
      %3826 = vmatpush1.bf16.msra.mxu0 %v3219
      %3827 = vmatprep.subr.bf16.mxu0 %v3224
      %3828 = vmatpush1.bf16.msra.mxu0 %v3223
      %3829 = vmatprep.subr.bf16.mxu0 %v3228
      %3830 = vmatpush1.bf16.msra.mxu0 %v3227
      %3831 = vmatprep.subr.bf16.mxu0 %v3232
      %3832 = vmatpush1.bf16.msra.mxu0 %v3231
      %3833 = vmatprep.subr.bf16.mxu0 %v3236
      %3834 = vmatpush1.bf16.msra.mxu0 %v3235
      %3835 = vmatprep.mubr.bf16.mxu0 %v1996
      %3836 = vmatmul.mubr.bf16.gmra.mrb[0].mxu0 %v1995
      %v3837 = vpop.f32.mrb[0].mxu0
      %v3838 = vadd.f32 %v3797, %v3837
      %v3839 = vpop.f32.mrb[0].mxu0
      %v3840 = vadd.f32 %v3799, %v3839
      %v3841 = vpop.f32.mrb[0].mxu0
      %v3842 = vpop.f32.mrb[0].mxu0
      %3843 = vdwg.mxu0
      %3844 = vmatprep.subr.bf16.mxu0 %v3240
      %3845 = vmatpush1.bf16.msra.mxu0 %v3239
      %3846 = vmatprep.subr.bf16.mxu0 %v3244
      %3847 = vmatpush1.bf16.msra.mxu0 %v3243
      %3848 = vmatprep.subr.bf16.mxu0 %v3248
      %3849 = vmatpush1.bf16.msra.mxu0 %v3247
      %3850 = vmatprep.subr.bf16.mxu0 %v3252
      %3851 = vmatpush1.bf16.msra.mxu0 %v3251
      %3852 = vmatprep.subr.bf16.mxu0 %v3256
      %3853 = vmatpush1.bf16.msra.mxu0 %v3255
      %3854 = vmatprep.subr.bf16.mxu0 %v3260
      %3855 = vmatpush1.bf16.msra.mxu0 %v3259
      %3856 = vmatprep.subr.bf16.mxu0 %v3264
      %3857 = vmatpush1.bf16.msra.mxu0 %v3263
      %3858 = vmatprep.subr.bf16.mxu0 %v3268
      %3859 = vmatpush1.bf16.msra.mxu0 %v3267
      %3860 = vmatprep.subr.bf16.mxu0 %v3272
      %3861 = vmatpush1.bf16.msra.mxu0 %v3271
      %3862 = vmatprep.subr.bf16.mxu0 %v3276
      %3863 = vmatpush1.bf16.msra.mxu0 %v3275
      %3864 = vmatprep.subr.bf16.mxu0 %v3280
      %3865 = vmatpush1.bf16.msra.mxu0 %v3279
      %3866 = vmatprep.subr.bf16.mxu0 %v3284
      %3867 = vmatpush1.bf16.msra.mxu0 %v3283
      %3868 = vmatprep.subr.bf16.mxu0 %v3288
      %3869 = vmatpush1.bf16.msra.mxu0 %v3287
      %3870 = vmatprep.subr.bf16.mxu0 %v3292
      %3871 = vmatpush1.bf16.msra.mxu0 %v3291
      %3872 = vmatprep.subr.bf16.mxu0 %v3296
      %3873 = vmatpush1.bf16.msra.mxu0 %v3295
      %3874 = vmatprep.subr.bf16.mxu0 %v3300
      %3875 = vmatpush1.bf16.msra.mxu0 %v3299
      %3876 = vmatprep.mubr.bf16.mxu0 %v1998
      %3877 = vmatmul.mubr.bf16.gmra.mrb[0].mxu0 %v1997
      %v3878 = vpop.f32.mrb[0].mxu0
      %v3879 = vadd.f32 %v3838, %v3878
      %v3880 = vpop.f32.mrb[0].mxu0
      %v3881 = vadd.f32 %v3840, %v3880
      %v3882 = vpop.f32.mrb[0].mxu0
      %v3883 = vpop.f32.mrb[0].mxu0
      %3884 = vdwg.mxu0
      %v3885 = vmax.f32 %v3715, 0.0
      %v3886 = vmax.f32 %v3717, 0.0
      %v3887 = vmax.f32 %v3879, 0.0
      %v3888 = vmax.f32 %v3881, 0.0
      %v3889 = vpack.c.bf16 %v3885, %v3885
      %v3890 = vpack.c.bf16 %v3886, %v3886
      %v3891 = vpack.c.bf16 %v3887, %v3887
      %v3892 = vpack.c.bf16 %v3888, %v3888
      %v3893 = vld [vmem:[#allocation8] sm:$0xff]
      %v3894 = vld [vmem:[#allocation8 + $0x8] sm:$0xff]
      %v3895 = vld [vmem:[#allocation8 + $0x10] sm:$0xff]
      %v3896 = vld [vmem:[#allocation8 + $0x18] sm:$0xff]
      %v3897 = vld [vmem:[#allocation8 + $0x20] sm:$0xff]
      %v3898 = vld [vmem:[#allocation8 + $0x28] sm:$0xff]
      %v3899 = vld [vmem:[#allocation8 + $0x30] sm:$0xff]
      %v3900 = vld [vmem:[#allocation8 + $0x38] sm:$0xff]
      %v3901 = vld [vmem:[#allocation8 + $0x40] sm:$0xff]
      %v3902 = vld [vmem:[#allocation8 + $0x48] sm:$0xff]
      %v3903 = vld [vmem:[#allocation8 + $0x50] sm:$0xff]
      %v3904 = vld [vmem:[#allocation8 + $0x58] sm:$0xff]
      %v3905 = vld [vmem:[#allocation8 + $0x60] sm:$0xff]
      %v3906 = vld [vmem:[#allocation8 + $0x68] sm:$0xff]
      %v3907 = vld [vmem:[#allocation8 + $0x70] sm:$0xff]
      %v3908 = vld [vmem:[#allocation8 + $0x78] sm:$0xff]
      %v3909 = vld [vmem:[#allocation8 + $0x80] sm:$0xff]
      %v3910 = vld [vmem:[#allocation8 + $0x88] sm:$0xff]
      %v3911 = vld [vmem:[#allocation8 + $0x90] sm:$0xff]
      %v3912 = vld [vmem:[#allocation8 + $0x98] sm:$0xff]
      %v3913 = vld [vmem:[#allocation8 + $0xa0] sm:$0xff]
      %v3914 = vld [vmem:[#allocation8 + $0xa8] sm:$0xff]
      %v3915 = vld [vmem:[#allocation8 + $0xb0] sm:$0xff]
      %v3916 = vld [vmem:[#allocation8 + $0xb8] sm:$0xff]
      %v3917 = vld [vmem:[#allocation8 + $0xc0] sm:$0xff]
      %v3918 = vld [vmem:[#allocation8 + $0xc8] sm:$0xff]
      %v3919 = vld [vmem:[#allocation8 + $0xd0] sm:$0xff]
      %v3920 = vld [vmem:[#allocation8 + $0xd8] sm:$0xff]
      %v3921 = vld [vmem:[#allocation8 + $0xe0] sm:$0xff]
      %v3922 = vld [vmem:[#allocation8 + $0xe8] sm:$0xff]
      %v3923 = vld [vmem:[#allocation8 + $0xf0] sm:$0xff]
      %v3924 = vld [vmem:[#allocation8 + $0xf8] sm:$0xff]
      %v3925 = vld [vmem:[#allocation8 + $0x100] sm:$0xff]
      %v3926 = vld [vmem:[#allocation8 + $0x108] sm:$0xff]
      %v3927 = vld [vmem:[#allocation8 + $0x110] sm:$0xff]
      %v3928 = vld [vmem:[#allocation8 + $0x118] sm:$0xff]
      %v3929 = vld [vmem:[#allocation8 + $0x120] sm:$0xff]
      %v3930 = vld [vmem:[#allocation8 + $0x128] sm:$0xff]
      %v3931 = vld [vmem:[#allocation8 + $0x130] sm:$0xff]
      %v3932 = vld [vmem:[#allocation8 + $0x138] sm:$0xff]
      %v3933 = vld [vmem:[#allocation8 + $0x140] sm:$0xff]
      %v3934 = vld [vmem:[#allocation8 + $0x148] sm:$0xff]
      %v3935 = vld [vmem:[#allocation8 + $0x150] sm:$0xff]
      %v3936 = vld [vmem:[#allocation8 + $0x158] sm:$0xff]
      %v3937 = vld [vmem:[#allocation8 + $0x160] sm:$0xff]
      %v3938 = vld [vmem:[#allocation8 + $0x168] sm:$0xff]
      %v3939 = vld [vmem:[#allocation8 + $0x170] sm:$0xff]
      %v3940 = vld [vmem:[#allocation8 + $0x178] sm:$0xff]
      %v3941 = vld [vmem:[#allocation8 + $0x180] sm:$0xff]
      %v3942 = vld [vmem:[#allocation8 + $0x188] sm:$0xff]
      %v3943 = vld [vmem:[#allocation8 + $0x190] sm:$0xff]
      %v3944 = vld [vmem:[#allocation8 + $0x198] sm:$0xff]
      %v3945 = vld [vmem:[#allocation8 + $0x1a0] sm:$0xff]
      %v3946 = vld [vmem:[#allocation8 + $0x1a8] sm:$0xff]
      %v3947 = vld [vmem:[#allocation8 + $0x1b0] sm:$0xff]
      %v3948 = vld [vmem:[#allocation8 + $0x1b8] sm:$0xff]
      %v3949 = vld [vmem:[#allocation8 + $0x1c0] sm:$0xff]
      %v3950 = vld [vmem:[#allocation8 + $0x1c8] sm:$0xff]
      %v3951 = vld [vmem:[#allocation8 + $0x1d0] sm:$0xff]
      %v3952 = vld [vmem:[#allocation8 + $0x1d8] sm:$0xff]
      %v3953 = vld [vmem:[#allocation8 + $0x1e0] sm:$0xff]
      %v3954 = vld [vmem:[#allocation8 + $0x1e8] sm:$0xff]
      %v3955 = vld [vmem:[#allocation8 + $0x1f0] sm:$0xff]
      %v3956 = vld [vmem:[#allocation8 + $0x1f8] sm:$0xff]
      %v3957 = vld [vmem:[%s10] sm:$0x3]
      %v3959 = vlaneseq
      %v3960 = vshrl.u32 %v3959, 7
      %v3961 = vsub.s32 0, %v3960
      %v3962 = vrot.slane %v3957, %v3961
      %v3963 = vlaneseq
      %v3964 = vshrl.u32 %v3963, 7
      %v3965 = vsub.s32 1, %v3964
      %v3966 = vrot.slane %v3957, %v3965
      %v4033 = vunpack.c.l.b16 %v3893
      %v4034 = vunpack.c.h.b16 %v3893
      %v4035 = vunpack.c.l.b16 %v3894
      %v4036 = vunpack.c.h.b16 %v3894
      %v4037 = vunpack.c.l.b16 %v3895
      %v4038 = vunpack.c.h.b16 %v3895
      %v4039 = vunpack.c.l.b16 %v3896
      %v4040 = vunpack.c.h.b16 %v3896
      %v4041 = vunpack.c.l.b16 %v3897
      %v4042 = vunpack.c.h.b16 %v3897
      %v4043 = vunpack.c.l.b16 %v3898
      %v4044 = vunpack.c.h.b16 %v3898
      %v4045 = vunpack.c.l.b16 %v3899
      %v4046 = vunpack.c.h.b16 %v3899
      %v4047 = vunpack.c.l.b16 %v3900
      %v4048 = vunpack.c.h.b16 %v3900
      %v4049 = vunpack.c.l.b16 %v3901
      %v4050 = vunpack.c.h.b16 %v3901
      %v4051 = vunpack.c.l.b16 %v3902
      %v4052 = vunpack.c.h.b16 %v3902
      %v4053 = vunpack.c.l.b16 %v3903
      %v4054 = vunpack.c.h.b16 %v3903
      %v4055 = vunpack.c.l.b16 %v3904
      %v4056 = vunpack.c.h.b16 %v3904
      %v4057 = vunpack.c.l.b16 %v3905
      %v4058 = vunpack.c.h.b16 %v3905
      %v4059 = vunpack.c.l.b16 %v3906
      %v4060 = vunpack.c.h.b16 %v3906
      %v4061 = vunpack.c.l.b16 %v3907
      %v4062 = vunpack.c.h.b16 %v3907
      %v4063 = vunpack.c.l.b16 %v3908
      %v4064 = vunpack.c.h.b16 %v3908
      %v4065 = vunpack.c.l.b16 %v3909
      %v4066 = vunpack.c.h.b16 %v3909
      %v4067 = vunpack.c.l.b16 %v3910
      %v4068 = vunpack.c.h.b16 %v3910
      %v4069 = vunpack.c.l.b16 %v3911
      %v4070 = vunpack.c.h.b16 %v3911
      %v4071 = vunpack.c.l.b16 %v3912
      %v4072 = vunpack.c.h.b16 %v3912
      %v4073 = vunpack.c.l.b16 %v3913
      %v4074 = vunpack.c.h.b16 %v3913
      %v4075 = vunpack.c.l.b16 %v3914
      %v4076 = vunpack.c.h.b16 %v3914
      %v4077 = vunpack.c.l.b16 %v3915
      %v4078 = vunpack.c.h.b16 %v3915
      %v4079 = vunpack.c.l.b16 %v3916
      %v4080 = vunpack.c.h.b16 %v3916
      %v4081 = vunpack.c.l.b16 %v3917
      %v4082 = vunpack.c.h.b16 %v3917
      %v4083 = vunpack.c.l.b16 %v3918
      %v4084 = vunpack.c.h.b16 %v3918
      %v4085 = vunpack.c.l.b16 %v3919
      %v4086 = vunpack.c.h.b16 %v3919
      %v4087 = vunpack.c.l.b16 %v3920
      %v4088 = vunpack.c.h.b16 %v3920
      %v4089 = vunpack.c.l.b16 %v3921
      %v4090 = vunpack.c.h.b16 %v3921
      %v4091 = vunpack.c.l.b16 %v3922
      %v4092 = vunpack.c.h.b16 %v3922
      %v4093 = vunpack.c.l.b16 %v3923
      %v4094 = vunpack.c.h.b16 %v3923
      %v4095 = vunpack.c.l.b16 %v3924
      %v4096 = vunpack.c.h.b16 %v3924
      %v4097 = vunpack.c.l.b16 %v3925
      %v4098 = vunpack.c.h.b16 %v3925
      %v4099 = vunpack.c.l.b16 %v3926
      %v4100 = vunpack.c.h.b16 %v3926
      %v4101 = vunpack.c.l.b16 %v3927
      %v4102 = vunpack.c.h.b16 %v3927
      %v4103 = vunpack.c.l.b16 %v3928
      %v4104 = vunpack.c.h.b16 %v3928
      %v4105 = vunpack.c.l.b16 %v3929
      %v4106 = vunpack.c.h.b16 %v3929
      %v4107 = vunpack.c.l.b16 %v3930
      %v4108 = vunpack.c.h.b16 %v3930
      %v4109 = vunpack.c.l.b16 %v3931
      %v4110 = vunpack.c.h.b16 %v3931
      %v4111 = vunpack.c.l.b16 %v3932
      %v4112 = vunpack.c.h.b16 %v3932
      %v4113 = vunpack.c.l.b16 %v3933
      %v4114 = vunpack.c.h.b16 %v3933
      %v4115 = vunpack.c.l.b16 %v3934
      %v4116 = vunpack.c.h.b16 %v3934
      %v4117 = vunpack.c.l.b16 %v3935
      %v4118 = vunpack.c.h.b16 %v3935
      %v4119 = vunpack.c.l.b16 %v3936
      %v4120 = vunpack.c.h.b16 %v3936
      %v4121 = vunpack.c.l.b16 %v3937
      %v4122 = vunpack.c.h.b16 %v3937
      %v4123 = vunpack.c.l.b16 %v3938
      %v4124 = vunpack.c.h.b16 %v3938
      %v4125 = vunpack.c.l.b16 %v3939
      %v4126 = vunpack.c.h.b16 %v3939
      %v4127 = vunpack.c.l.b16 %v3940
      %v4128 = vunpack.c.h.b16 %v3940
      %v4129 = vunpack.c.l.b16 %v3941
      %v4130 = vunpack.c.h.b16 %v3941
      %v4131 = vunpack.c.l.b16 %v3942
      %v4132 = vunpack.c.h.b16 %v3942
      %v4133 = vunpack.c.l.b16 %v3943
      %v4134 = vunpack.c.h.b16 %v3943
      %v4135 = vunpack.c.l.b16 %v3944
      %v4136 = vunpack.c.h.b16 %v3944
      %v4137 = vunpack.c.l.b16 %v3945
      %v4138 = vunpack.c.h.b16 %v3945
      %v4139 = vunpack.c.l.b16 %v3946
      %v4140 = vunpack.c.h.b16 %v3946
      %v4141 = vunpack.c.l.b16 %v3947
      %v4142 = vunpack.c.h.b16 %v3947
      %v4143 = vunpack.c.l.b16 %v3948
      %v4144 = vunpack.c.h.b16 %v3948
      %v4145 = vunpack.c.l.b16 %v3949
      %v4146 = vunpack.c.h.b16 %v3949
      %v4147 = vunpack.c.l.b16 %v3950
      %v4148 = vunpack.c.h.b16 %v3950
      %v4149 = vunpack.c.l.b16 %v3951
      %v4150 = vunpack.c.h.b16 %v3951
      %v4151 = vunpack.c.l.b16 %v3952
      %v4152 = vunpack.c.h.b16 %v3952
      %v4153 = vunpack.c.l.b16 %v3953
      %v4154 = vunpack.c.h.b16 %v3953
      %v4155 = vunpack.c.l.b16 %v3954
      %v4156 = vunpack.c.h.b16 %v3954
      %v4157 = vunpack.c.l.b16 %v3955
      %v4158 = vunpack.c.h.b16 %v3955
      %v4159 = vunpack.c.l.b16 %v3956
      %v4160 = vunpack.c.h.b16 %v3956
      %v4161 = vpack.c.b16 %v4035, %v4033
      %v4162 = vpack.c.b16 %v4036, %v4034
      %v4163 = vpack.c.b16 %v4039, %v4037
      %v4164 = vpack.c.b16 %v4040, %v4038
      %v4165 = vpack.c.b16 %v4043, %v4041
      %v4166 = vpack.c.b16 %v4044, %v4042
      %v4167 = vpack.c.b16 %v4047, %v4045
      %v4168 = vpack.c.b16 %v4048, %v4046
      %v4169 = vpack.c.b16 %v4051, %v4049
      %v4170 = vpack.c.b16 %v4052, %v4050
      %v4171 = vpack.c.b16 %v4055, %v4053
      %v4172 = vpack.c.b16 %v4056, %v4054
      %v4173 = vpack.c.b16 %v4059, %v4057
      %v4174 = vpack.c.b16 %v4060, %v4058
      %v4175 = vpack.c.b16 %v4063, %v4061
      %v4176 = vpack.c.b16 %v4064, %v4062
      %v4177 = vpack.c.b16 %v4067, %v4065
      %v4178 = vpack.c.b16 %v4068, %v4066
      %v4179 = vpack.c.b16 %v4071, %v4069
      %v4180 = vpack.c.b16 %v4072, %v4070
      %v4181 = vpack.c.b16 %v4075, %v4073
      %v4182 = vpack.c.b16 %v4076, %v4074
      %v4183 = vpack.c.b16 %v4079, %v4077
      %v4184 = vpack.c.b16 %v4080, %v4078
      %v4185 = vpack.c.b16 %v4083, %v4081
      %v4186 = vpack.c.b16 %v4084, %v4082
      %v4187 = vpack.c.b16 %v4087, %v4085
      %v4188 = vpack.c.b16 %v4088, %v4086
      %v4189 = vpack.c.b16 %v4091, %v4089
      %v4190 = vpack.c.b16 %v4092, %v4090
      %v4191 = vpack.c.b16 %v4095, %v4093
      %v4192 = vpack.c.b16 %v4096, %v4094
      %v4193 = vpack.c.b16 %v4099, %v4097
      %v4194 = vpack.c.b16 %v4100, %v4098
      %v4195 = vpack.c.b16 %v4103, %v4101
      %v4196 = vpack.c.b16 %v4104, %v4102
      %v4197 = vpack.c.b16 %v4107, %v4105
      %v4198 = vpack.c.b16 %v4108, %v4106
      %v4199 = vpack.c.b16 %v4111, %v4109
      %v4200 = vpack.c.b16 %v4112, %v4110
      %v4201 = vpack.c.b16 %v4115, %v4113
      %v4202 = vpack.c.b16 %v4116, %v4114
      %v4203 = vpack.c.b16 %v4119, %v4117
      %v4204 = vpack.c.b16 %v4120, %v4118
      %v4205 = vpack.c.b16 %v4123, %v4121
      %v4206 = vpack.c.b16 %v4124, %v4122
      %v4207 = vpack.c.b16 %v4127, %v4125
      %v4208 = vpack.c.b16 %v4128, %v4126
      %v4209 = vpack.c.b16 %v4131, %v4129
      %v4210 = vpack.c.b16 %v4132, %v4130
      %v4211 = vpack.c.b16 %v4135, %v4133
      %v4212 = vpack.c.b16 %v4136, %v4134
      %v4213 = vpack.c.b16 %v4139, %v4137
      %v4214 = vpack.c.b16 %v4140, %v4138
      %v4215 = vpack.c.b16 %v4143, %v4141
      %v4216 = vpack.c.b16 %v4144, %v4142
      %v4217 = vpack.c.b16 %v4147, %v4145
      %v4218 = vpack.c.b16 %v4148, %v4146
      %v4219 = vpack.c.b16 %v4151, %v4149
      %v4220 = vpack.c.b16 %v4152, %v4150
      %v4221 = vpack.c.b16 %v4155, %v4153
      %v4222 = vpack.c.b16 %v4156, %v4154
      %v4223 = vpack.c.b16 %v4159, %v4157
      %v4224 = vpack.c.b16 %v4160, %v4158
      %4289 = vmatprep.subr.bf16.mxu0 %v4162
      %4290 = vmatpush1.bf16.msra.mxu0 %v4161
      %4291 = vmatprep.subr.bf16.mxu0 %v4164
      %4292 = vmatpush1.bf16.msra.mxu0 %v4163
      %4293 = vmatprep.subr.bf16.mxu0 %v4166
      %4294 = vmatpush1.bf16.msra.mxu0 %v4165
      %4295 = vmatprep.subr.bf16.mxu0 %v4168
      %4296 = vmatpush1.bf16.msra.mxu0 %v4167
      %4297 = vmatprep.subr.bf16.mxu0 %v4170
      %4298 = vmatpush1.bf16.msra.mxu0 %v4169
      %4299 = vmatprep.subr.bf16.mxu0 %v4172
      %4300 = vmatpush1.bf16.msra.mxu0 %v4171
      %4301 = vmatprep.subr.bf16.mxu0 %v4174
      %4302 = vmatpush1.bf16.msra.mxu0 %v4173
      %4303 = vmatprep.subr.bf16.mxu0 %v4176
      %4304 = vmatpush1.bf16.msra.mxu0 %v4175
      %4305 = vmatprep.subr.bf16.mxu0 %v4178
      %4306 = vmatpush1.bf16.msra.mxu0 %v4177
      %4307 = vmatprep.subr.bf16.mxu0 %v4180
      %4308 = vmatpush1.bf16.msra.mxu0 %v4179
      %4309 = vmatprep.subr.bf16.mxu0 %v4182
      %4310 = vmatpush1.bf16.msra.mxu0 %v4181
      %4311 = vmatprep.subr.bf16.mxu0 %v4184
      %4312 = vmatpush1.bf16.msra.mxu0 %v4183
      %4313 = vmatprep.subr.bf16.mxu0 %v4186
      %4314 = vmatpush1.bf16.msra.mxu0 %v4185
      %4315 = vmatprep.subr.bf16.mxu0 %v4188
      %4316 = vmatpush1.bf16.msra.mxu0 %v4187
      %4317 = vmatprep.subr.bf16.mxu0 %v4190
      %4318 = vmatpush1.bf16.msra.mxu0 %v4189
      %4319 = vmatprep.subr.bf16.mxu0 %v4192
      %4320 = vmatpush1.bf16.msra.mxu0 %v4191
      %4321 = vmatprep.mubr.bf16.mxu0 %v3890
      %4322 = vmatmul.mubr.bf16.gmra.mrb[0].mxu0 %v3889
      %v4323 = vpop.f32.mrb[0].mxu0
      %v4324 = vadd.f32 %v3962, %v4323
      %v4325 = vpop.f32.mrb[0].mxu0
      %v4326 = vadd.f32 %v3966, %v4325
      %v4327 = vpop.f32.mrb[0].mxu0
      %v4328 = vpop.f32.mrb[0].mxu0
      %4329 = vdwg.mxu0
      %4330 = vmatprep.subr.bf16.mxu0 %v4194
      %4331 = vmatpush1.bf16.msra.mxu0 %v4193
      %4332 = vmatprep.subr.bf16.mxu0 %v4196
      %4333 = vmatpush1.bf16.msra.mxu0 %v4195
      %4334 = vmatprep.subr.bf16.mxu0 %v4198
      %4335 = vmatpush1.bf16.msra.mxu0 %v4197
      %4336 = vmatprep.subr.bf16.mxu0 %v4200
      %4337 = vmatpush1.bf16.msra.mxu0 %v4199
      %4338 = vmatprep.subr.bf16.mxu0 %v4202
      %4339 = vmatpush1.bf16.msra.mxu0 %v4201
      %4340 = vmatprep.subr.bf16.mxu0 %v4204
      %4341 = vmatpush1.bf16.msra.mxu0 %v4203
      %4342 = vmatprep.subr.bf16.mxu0 %v4206
      %4343 = vmatpush1.bf16.msra.mxu0 %v4205
      %4344 = vmatprep.subr.bf16.mxu0 %v4208
      %4345 = vmatpush1.bf16.msra.mxu0 %v4207
      %4346 = vmatprep.subr.bf16.mxu0 %v4210
      %4347 = vmatpush1.bf16.msra.mxu0 %v4209
      %4348 = vmatprep.subr.bf16.mxu0 %v4212
      %4349 = vmatpush1.bf16.msra.mxu0 %v4211
      %4350 = vmatprep.subr.bf16.mxu0 %v4214
      %4351 = vmatpush1.bf16.msra.mxu0 %v4213
      %4352 = vmatprep.subr.bf16.mxu0 %v4216
      %4353 = vmatpush1.bf16.msra.mxu0 %v4215
      %4354 = vmatprep.subr.bf16.mxu0 %v4218
      %4355 = vmatpush1.bf16.msra.mxu0 %v4217
      %4356 = vmatprep.subr.bf16.mxu0 %v4220
      %4357 = vmatpush1.bf16.msra.mxu0 %v4219
      %4358 = vmatprep.subr.bf16.mxu0 %v4222
      %4359 = vmatpush1.bf16.msra.mxu0 %v4221
      %4360 = vmatprep.subr.bf16.mxu0 %v4224
      %4361 = vmatpush1.bf16.msra.mxu0 %v4223
      %4362 = vmatprep.mubr.bf16.mxu0 %v3892
      %4363 = vmatmul.mubr.bf16.gmra.mrb[0].mxu0 %v3891
      %v4364 = vpop.f32.mrb[0].mxu0
      %v4365 = vadd.f32 %v4324, %v4364
      %v4366 = vpop.f32.mrb[0].mxu0
      %v4367 = vadd.f32 %v4326, %v4366
      %v4368 = vpop.f32.mrb[0].mxu0
      %v4369 = vpop.f32.mrb[0].mxu0
      %4370 = vdwg.mxu0
      %v4371 = vmax.f32 %v4365, 0.0
      %v4372 = vmax.f32 %v4367, 0.0
      %v4373 = vld [vmem:[#allocation9] sm:$0xff]
      %v4374 = vld [vmem:[#allocation9 + $0x8] sm:$0xff]
      %v4375 = vld [vmem:[#allocation9 + $0x10] sm:$0xff]
      %v4376 = vld [vmem:[#allocation9 + $0x18] sm:$0xff]
      %v4377 = vld [vmem:[#allocation9 + $0x20] sm:$0xff]
      %v4378 = vld [vmem:[#allocation9 + $0x28] sm:$0xff]
      %v4379 = vld [vmem:[#allocation9 + $0x30] sm:$0xff]
      %v4380 = vld [vmem:[#allocation9 + $0x38] sm:$0xff]
      %v4381 = vld [vmem:[#allocation9 + $0x40] sm:$0xff]
      %v4382 = vld [vmem:[#allocation9 + $0x48] sm:$0xff]
      %v4383 = vld [vmem:[#allocation9 + $0x50] sm:$0xff]
      %v4384 = vld [vmem:[#allocation9 + $0x58] sm:$0xff]
      %v4385 = vld [vmem:[#allocation9 + $0x60] sm:$0xff]
      %v4386 = vld [vmem:[#allocation9 + $0x68] sm:$0xff]
      %v4387 = vld [vmem:[#allocation9 + $0x70] sm:$0xff]
      %v4388 = vld [vmem:[#allocation9 + $0x78] sm:$0xff]
      %v4389 = vld [vmem:[#allocation9 + $0x80] sm:$0xff]
      %v4390 = vld [vmem:[#allocation9 + $0x88] sm:$0xff]
      %v4391 = vld [vmem:[#allocation9 + $0x90] sm:$0xff]
      %v4392 = vld [vmem:[#allocation9 + $0x98] sm:$0xff]
      %v4393 = vld [vmem:[#allocation9 + $0xa0] sm:$0xff]
      %v4394 = vld [vmem:[#allocation9 + $0xa8] sm:$0xff]
      %v4395 = vld [vmem:[#allocation9 + $0xb0] sm:$0xff]
      %v4396 = vld [vmem:[#allocation9 + $0xb8] sm:$0xff]
      %v4397 = vld [vmem:[#allocation9 + $0xc0] sm:$0xff]
      %v4398 = vld [vmem:[#allocation9 + $0xc8] sm:$0xff]
      %v4399 = vld [vmem:[#allocation9 + $0xd0] sm:$0xff]
      %v4400 = vld [vmem:[#allocation9 + $0xd8] sm:$0xff]
      %v4401 = vld [vmem:[#allocation9 + $0xe0] sm:$0xff]
      %v4402 = vld [vmem:[#allocation9 + $0xe8] sm:$0xff]
      %v4403 = vld [vmem:[#allocation9 + $0xf0] sm:$0xff]
      %v4404 = vld [vmem:[#allocation9 + $0xf8] sm:$0xff]
      %v4405 = vld [vmem:[%s12] sm:$0x1]
      %v4407 = vlaneseq
      %v4408 = vshrl.u32 %v4407, 7
      %v4409 = vsub.s32 0, %v4408
      %v4410 = vrot.slane %v4405, %v4409
      %4412 = vmatprep.subr.mxu0 0.0
      %4413 = vmatpush1.msra.mxu0 %v4373
      %4414 = vmatprep.subr.mxu0 0.0
      %4415 = vmatpush1.msra.mxu0 %v4374
      %4416 = vmatprep.subr.mxu0 0.0
      %4417 = vmatpush1.msra.mxu0 %v4375
      %4418 = vmatprep.subr.mxu0 0.0
      %4419 = vmatpush1.msra.mxu0 %v4376
      %4420 = vmatprep.subr.mxu0 0.0
      %4421 = vmatpush1.msra.mxu0 %v4377
      %4422 = vmatprep.subr.mxu0 0.0
      %4423 = vmatpush1.msra.mxu0 %v4378
      %4424 = vmatprep.subr.mxu0 0.0
      %4425 = vmatpush1.msra.mxu0 %v4379
      %4426 = vmatprep.subr.mxu0 0.0
      %4427 = vmatpush1.msra.mxu0 %v4380
      %4428 = vmatprep.subr.mxu0 0.0
      %4429 = vmatpush1.msra.mxu0 %v4381
      %4430 = vmatprep.subr.mxu0 0.0
      %4431 = vmatpush1.msra.mxu0 %v4382
      %4432 = vmatprep.subr.mxu0 0.0
      %4433 = vmatpush1.msra.mxu0 %v4383
      %4434 = vmatprep.subr.mxu0 0.0
      %4435 = vmatpush1.msra.mxu0 %v4384
      %4436 = vmatprep.subr.mxu0 0.0
      %4437 = vmatpush1.msra.mxu0 %v4385
      %4438 = vmatprep.subr.mxu0 0.0
      %4439 = vmatpush1.msra.mxu0 %v4386
      %4440 = vmatprep.subr.mxu0 0.0
      %4441 = vmatpush1.msra.mxu0 %v4387
      %4442 = vmatprep.subr.mxu0 0.0
      %4443 = vmatpush1.msra.mxu0 %v4388
      %4444 = vmatprep.subr.mxu0 0.0
      %4445 = vmatpush1.msra.mxu0 %v4389
      %4446 = vmatprep.subr.mxu0 0.0
      %4447 = vmatpush1.msra.mxu0 %v4390
      %4448 = vmatprep.subr.mxu0 0.0
      %4449 = vmatpush1.msra.mxu0 %v4391
      %4450 = vmatprep.subr.mxu0 0.0
      %4451 = vmatpush1.msra.mxu0 %v4392
      %4452 = vmatprep.subr.mxu0 0.0
      %4453 = vmatpush1.msra.mxu0 %v4393
      %4454 = vmatprep.subr.mxu0 0.0
      %4455 = vmatpush1.msra.mxu0 %v4394
      %4456 = vmatprep.subr.mxu0 0.0
      %4457 = vmatpush1.msra.mxu0 %v4395
      %4458 = vmatprep.subr.mxu0 0.0
      %4459 = vmatpush1.msra.mxu0 %v4396
      %4460 = vmatprep.subr.mxu0 0.0
      %4461 = vmatpush1.msra.mxu0 %v4397
      %4462 = vmatprep.subr.mxu0 0.0
      %4463 = vmatpush1.msra.mxu0 %v4398
      %4464 = vmatprep.subr.mxu0 0.0
      %4465 = vmatpush1.msra.mxu0 %v4399
      %4466 = vmatprep.subr.mxu0 0.0
      %4467 = vmatpush1.msra.mxu0 %v4400
      %4468 = vmatprep.subr.mxu0 0.0
      %4469 = vmatpush1.msra.mxu0 %v4401
      %4470 = vmatprep.subr.mxu0 0.0
      %4471 = vmatpush1.msra.mxu0 %v4402
      %4472 = vmatprep.subr.mxu0 0.0
      %4473 = vmatpush1.msra.mxu0 %v4403
      %4474 = vmatprep.subr.mxu0 0.0
      %4475 = vmatpush1.msra.mxu0 %v4404
      %4476 = vmatprep.mubr.f32.mxu0 %v4372
      %4477 = vmatmul.mubr.f32.gmra.mrb[0].mxu0 %v4371
      %v4478 = vpop.f32.mrb[0].mxu0
      %v4479 = vadd.f32 %v4410, %v4478
      %v4480 = vpop.f32.mrb[0].mxu0
      %4481 = vdwg.mxu0
      %4482 = vst [vmem:[#allocation11] sm:$0x3] %v4479
    $region81: #{tpu_custom_call.1} parent=1 // pred_fallthru
      _
    // Predicated region
    $region82: #{tpu_custom_call.1} parent=1 // pred_check
      _
    $region83: #{tpu_custom_call.1} parent=1 // pred_check_branch
      %4484 = sbr.rel (0) target = $region85
    $region84: #{tpu_custom_call.1} parent=1 // pred_region
      %s4486 = ssub.s32 32, 32
      %4487 = vsyncadd [#allocation5], %s4486
      %s4489 = sshll.u32 [#allocation11], 4
      %s4490 = int_to_ptr.vmem [resolvable:$true] %s4489
      %4492 = dma.vmem_to_hbm [thread:$0]  %s4490, 32, %s13, [#allocation5]
    $region85: #{tpu_custom_call.1} parent=1 // pred_fallthru
      _
    // Predicated region
    $region86: #{tpu_custom_call.1} parent=1 // pred_check
      _
    $region87: #{tpu_custom_call.1} parent=1 // pred_check_branch
      %4494 = sbr.rel (0) target = $region89
    $region88: #{tpu_custom_call.1} parent=1 // pred_region
      %4495 = dma.done [#allocation5], 32
    $region89: #{tpu_custom_call.1} parent=1 // pred_fallthru
      _
    %4496 = vsyncpa [#allocation4], 1
    %4497 = vsyncpa [#allocation7], 1
    %4498 = vsyncpa [#allocation10], 1
    %4499 = vsyncpa [#allocation5], 1

</llo_original>
